<compile_context>
chip_gen: v5e
topology: v5e:2x2
jax: 0.10.0
libtpu: 0.0.40
codegen_flags: <defaults>
</compile_context>

<pallas_src>
import jax
import jax.numpy as jnp
from jax.experimental import pallas as pl
from jax.experimental.pallas import tpu as pltpu

F32 = jnp.float32
BF16 = jnp.bfloat16


# ----------------------------- Pallas kernels ------------------------------

def trunk_kernel(x_ref, w1_ref, w2_ref, w3_ref, w4_ref, o_ref):
    # x_ref: (1, TN, 3) chunk of one batch's points (bf16).
    x = x_ref[0]                                                                    # (TN, 3)
    w1 = w1_ref[...]                                                                # (3, 64) f32

    # mlp1 (Conv2d 1x3 over xyz, T_in folded into w1) as 3 VPU broadcast-FMAs + ReLU.
    # A K=3 matmul would run the MXU at ~3/256 contraction utilization; on the VPU this
    # is free filler under the mlp4 MXU work.
    h1 = (x[:, 0:1] * w1[0:1, :] +
          x[:, 1:2] * w1[1:2, :] +
          x[:, 2:3] * w1[2:3, :])                                                   # (TN, 64) f32
    h1 = jnp.maximum(h1, 0.0)

    # mlp2 (1x1 conv) + ReLU                       (bf16 operands, f32 MXU accumulation)
    h2 = jnp.maximum(jnp.dot(h1.astype(BF16), w2_ref[...],
                             preferred_element_type=F32), 0.0)                      # (TN, 64)
    # mlp3 + ReLU (feature transform already folded into w3) and mlp4 + ReLU
    g3 = jnp.maximum(jnp.dot(h2.astype(BF16), w3_ref[...],
                             preferred_element_type=F32), 0.0)                      # (TN, 128)
    g4 = jnp.maximum(jnp.dot(g3.astype(BF16), w4_ref[...],
                             preferred_element_type=F32), 0.0)                      # (TN, 1024)

    # MaxPool2d((N,1)) == global max over points, accumulated across point chunks.
    cmax = jnp.max(g4, axis=0, keepdims=True)                                       # (1, 1024)

    @pl.when(pl.program_id(1) == 0)
    def _init():
        o_ref[0] = cmax

    @pl.when(pl.program_id(1) > 0)
    def _acc():
        o_ref[0] = jnp.maximum(o_ref[0], cmax)


def head_kernel(x_ref, w1_ref, b1_ref, w2_ref, b2_ref, w3_ref, b3_ref, o_ref):
    # Fully-connected head, eval-mode semantics:
    #   Dropout(p=0.3) -> identity; BatchNorm1d scale folded into w/b at init.
    x = x_ref[...]                                                                  # (B, 1024)
    y = jnp.dot(x.astype(BF16), w1_ref[...], preferred_element_type=F32) + b1_ref[...]
    y = jnp.maximum(y, 0.0)                                                         # (B, 512)
    y = jnp.dot(y.astype(BF16), w2_ref[...], preferred_element_type=F32) + b2_ref[...]
    y = jnp.maximum(y, 0.0)                                                         # (B, 256)
    y = jnp.dot(y.astype(BF16), w3_ref[...], preferred_element_type=F32) + b3_ref[...]
    # The reference module ends with F.relu(self.last(x)) (no log_softmax).
    o_ref[...] = jnp.maximum(y, 0.0)                                                # (B, classes)


# ------------------------------- forward -----------------------------------

def _point_tile(n):
    # Largest point-chunk that divides N.  Only multiples of 16 (bf16 sublane packing)
    # or the full dim are emitted, so block shapes stay (8,128)/(16,128)-legal.
    # Cap at 2048: the per-chunk (TN,1024) f32 mlp4 temp (~8 MiB) plus smaller temps and
    # double-buffered blocks stay well inside the raised 48 MiB scoped VMEM budget.
    for t in (2048, 1024, 512, 256, 128, 64, 32, 16):
        if n % t == 0:
            return t
    return n  # block == full dim is always legal


def pointnet_cls_forward(x, params):
    B, N, _ = x.shape
    num_classes = params["b_last"].shape[-1]
    tn = _point_tile(N)
    nchunks = N // tn

    # one-time input cast (halves trunk input DMA bytes, removes per-chunk cast)
    xb = x.astype(BF16)

    # --- fused trunk: mlp1+mlp2+mlp3(+T_feat)+mlp4+maxpool -> (B,1,1024) pooled ---
    # NOTE: weight BlockSpecs have constant index maps; single-buffering them
    # (pipeline_mode=pl.Buffered(1)) would save ~0.3 MiB of VMEM but is skipped for
    # compile-compatibility across jax versions.
    pooled = pl.pallas_call(
        trunk_kernel,
        out_shape=jax.ShapeDtypeStruct((B, 1, 1024), F32),
        grid=(B, nchunks),
        in_specs=[
            pl.BlockSpec((1, tn, 3), lambda b, n: (b, n, 0)),
            pl.BlockSpec((3, 64), lambda b, n: (0, 0)),
            pl.BlockSpec((64, 64), lambda b, n: (0, 0)),
            pl.BlockSpec((64, 128), lambda b, n: (0, 0)),
            pl.BlockSpec((128, 1024), lambda b, n: (0, 0)),
        ],
        out_specs=pl.BlockSpec((1, 1, 1024), lambda b, n: (b, 0, 0)),
        compiler_params=pltpu.CompilerParams(
            dimension_semantics=("parallel", "arbitrary"),
            vmem_limit_bytes=48 << 20),
    )(xb, params["W1f"], params["W2"], params["W3f"], params["W4"])

    # free XLA bitcast-reshape outside the kernels -> head loads a lane-dense (B,1024)
    pooled2d = pooled.reshape(B, 1024)

    # --- FC head (single invocation, whole batch + all weights pinned to VMEM) ---
    vmem_spec = pl.BlockSpec(memory_space=pltpu.MemorySpace.VMEM)
    out = pl.pallas_call(
        head_kernel,
        out_shape=jax.ShapeDtypeStruct((B, num_classes), F32),
        in_specs=[vmem_spec] * 7,
        out_specs=vmem_spec,
    )(pooled2d, params["W_fc1"], params["b_fc1"],
      params["W_fc2"], params["b_fc2"],
      params["W_last"], params["b_last"])
    return out


# --------------------------- deterministic params ---------------------------

def init_params(key, num_classes):
    ks = jax.random.split(key, 7)
    s = 0.05
    # Conv weights stored pre-transposed for point-major matmul: (C_in * kw, C_out).
    T_in = jnp.eye(3, dtype=F32)                                  # undefined STN -> identity
    T_feat = jnp.eye(64, dtype=F32)                               # undefined STN -> identity
    W1 = s * jax.random.normal(ks[0], (3, 64), F32)               # Conv2d(1, 64, (1,3), bias=False)
    W2 = s * jax.random.normal(ks[1], (64, 64), F32)              # Conv2d(64, 64, (1,1), bias=False)
    W3 = s * jax.random.normal(ks[2], (64, 128), F32)             # Conv2d(64, 128, (1,1), bias=False)
    W4 = s * jax.random.normal(ks[3], (128, 1024), F32)           # Conv2d(128, 1024, (1,1), bias=False)
    W_fc1 = s * jax.random.normal(ks[4], (1024, 512), F32)
    b_fc1 = jnp.zeros((1, 512), F32)
    W_fc2 = s * jax.random.normal(ks[5], (512, 256), F32)
    b_fc2 = jnp.zeros((1, 256), F32)
    W_last = s * jax.random.normal(ks[6], (256, num_classes), F32)
    b_last = jnp.zeros((1, num_classes), F32)

    # eval-mode BatchNorm1d (running mean 0, var 1, gamma 1, beta 0): pure scale.
    bn_scale = 1.0 / jnp.sqrt(jnp.float32(1.0 + 1e-5))

    return {
        # one-time folds / casts (bf16 MXU operands, f32 VPU/bias operands)
        "W1f": (T_in @ W1),                                       # (3,64) f32 rows for VPU FMAs
        "W2": W2.astype(BF16),
        "W3f": (T_feat @ W3).astype(BF16),                        # feature transform folded (exact)
        "W4": W4.astype(BF16),
        "W_fc1": (W_fc1 * bn_scale).astype(BF16),                 # bn1 folded
        "b_fc1": b_fc1 * bn_scale,
        "W_fc2": (W_fc2 * bn_scale).astype(BF16),                 # bn2 folded
        "b_fc2": b_fc2 * bn_scale,
        "W_last": W_last.astype(BF16),
        "b_last": b_last,
    }


if __name__ == "__main__":
    key = jax.random.PRNGKey(0)
    kx, kp = jax.random.split(key)
    B, N, NUM_CLASSES = 2, 16, 8
    x = jax.random.normal(kx, (B, N, 3), F32)       # point cloud: (batch, points, xyz)
    params = init_params(kp, NUM_CLASSES)
    out = jax.jit(pointnet_cls_forward)(x, params)
    jax.block_until_ready(out)
    assert out.shape == (B, NUM_CLASSES) and out.dtype == jnp.float32
    print("KERNEL_OK")
</pallas_src>

<mosaic_0001>
module attributes {stable_mosaic.version = 11 : i64} {
  func.func @trunk_kernel(%arg0: i32, %arg1: i32, %arg2: memref<1x16x3xbf16, #tpu.memory_space<vmem>>, %arg3: memref<3x64xf32, #tpu.memory_space<vmem>>, %arg4: memref<64x64xbf16, #tpu.memory_space<vmem>>, %arg5: memref<64x128xbf16, #tpu.memory_space<vmem>>, %arg6: memref<128x1024xbf16, #tpu.memory_space<vmem>>, %arg7: memref<1x1x1024xf32, #tpu.memory_space<vmem>>) attributes {dimension_semantics = [#tpu.dimension_semantics<parallel>, #tpu.dimension_semantics<arbitrary>], iteration_bounds = array<i64: 2, 1>, scalar_prefetch = 0 : i64, scratch_operands = 0 : i64, tpu.core_type = #tpu.core_type<tc>, window_params = [{transform_indices = @transform_0, window_bounds = array<i64: 1, 16, 3>}, {pipeline_mode = #tpu.pipeline_mode<synchronous>, transform_indices = @transform_1, window_bounds = array<i64: 3, 64>}, {pipeline_mode = #tpu.pipeline_mode<synchronous>, transform_indices = @transform_2, window_bounds = array<i64: 64, 64>}, {pipeline_mode = #tpu.pipeline_mode<synchronous>, transform_indices = @transform_3, window_bounds = array<i64: 64, 128>}, {pipeline_mode = #tpu.pipeline_mode<synchronous>, transform_indices = @transform_4, window_bounds = array<i64: 128, 1024>}, {transform_indices = @transform_5, window_bounds = array<i64: 1, 1, 1024>}]} {
    %c0 = arith.constant 0 : index
    %c0_0 = arith.constant 0 : index
    %c0_1 = arith.constant 0 : index
    %0 = vector.load %arg2[%c0, %c0_0, %c0_1] : memref<1x16x3xbf16, #tpu.memory_space<vmem>>, vector<1x16x3xbf16>
    %1 = vector.shape_cast %0 : vector<1x16x3xbf16> to vector<16x3xbf16>
    %c0_2 = arith.constant 0 : index
    %c0_3 = arith.constant 0 : index
    %2 = vector.load %arg3[%c0_2, %c0_3] : memref<3x64xf32, #tpu.memory_space<vmem>>, vector<3x64xf32>
    %3 = vector.extract_strided_slice %1 {offsets = [0, 0], sizes = [16, 1], strides = [1, 1]} : vector<16x3xbf16> to vector<16x1xbf16>
    %4 = vector.extract_strided_slice %2 {offsets = [0, 0], sizes = [1, 64], strides = [1, 1]} : vector<3x64xf32> to vector<1x64xf32>
    %5 = arith.extf %3 : vector<16x1xbf16> to vector<16x1xf32>
    %6 = vector.broadcast %5 : vector<16x1xf32> to vector<16x64xf32>
    %7 = vector.broadcast %4 : vector<1x64xf32> to vector<16x64xf32>
    %8 = arith.mulf %6, %7 : vector<16x64xf32>
    %9 = vector.extract_strided_slice %1 {offsets = [0, 1], sizes = [16, 1], strides = [1, 1]} : vector<16x3xbf16> to vector<16x1xbf16>
    %10 = vector.extract_strided_slice %2 {offsets = [1, 0], sizes = [1, 64], strides = [1, 1]} : vector<3x64xf32> to vector<1x64xf32>
    %11 = arith.extf %9 : vector<16x1xbf16> to vector<16x1xf32>
    %12 = vector.broadcast %11 : vector<16x1xf32> to vector<16x64xf32>
    %13 = vector.broadcast %10 : vector<1x64xf32> to vector<16x64xf32>
    %14 = arith.mulf %12, %13 : vector<16x64xf32>
    %15 = arith.addf %8, %14 : vector<16x64xf32>
    %16 = vector.extract_strided_slice %1 {offsets = [0, 2], sizes = [16, 1], strides = [1, 1]} : vector<16x3xbf16> to vector<16x1xbf16>
    %17 = vector.extract_strided_slice %2 {offsets = [2, 0], sizes = [1, 64], strides = [1, 1]} : vector<3x64xf32> to vector<1x64xf32>
    %18 = arith.extf %16 : vector<16x1xbf16> to vector<16x1xf32>
    %19 = vector.broadcast %18 : vector<16x1xf32> to vector<16x64xf32>
    %20 = vector.broadcast %17 : vector<1x64xf32> to vector<16x64xf32>
    %21 = arith.mulf %19, %20 : vector<16x64xf32>
    %22 = arith.addf %15, %21 : vector<16x64xf32>
    %cst = arith.constant 0.000000e+00 : f32
    %23 = vector.broadcast %cst : f32 to vector<16x64xf32>
    %24 = arith.maximumf %22, %23 : vector<16x64xf32>
    %25 = arith.truncf %24 : vector<16x64xf32> to vector<16x64xbf16>
    %c0_4 = arith.constant 0 : index
    %c0_5 = arith.constant 0 : index
    %26 = vector.load %arg4[%c0_4, %c0_5] : memref<64x64xbf16, #tpu.memory_space<vmem>>, vector<64x64xbf16>
    %cst_6 = arith.constant dense<0.000000e+00> : vector<16x64xf32>
    %27 = tpu.matmul %25, %26, %cst_6 {dimension_numbers = #tpu.dot_dimension_numbers<[1], [0], [0], [1], [0, 0, 1, 1], [], []>} : vector<16x64xbf16>, vector<64x64xbf16>, vector<16x64xf32> -> vector<16x64xf32>
    %cst_7 = arith.constant 0.000000e+00 : f32
    %28 = vector.broadcast %cst_7 : f32 to vector<16x64xf32>
    %29 = arith.maximumf %27, %28 : vector<16x64xf32>
    %30 = arith.truncf %29 : vector<16x64xf32> to vector<16x64xbf16>
    %c0_8 = arith.constant 0 : index
    %c0_9 = arith.constant 0 : index
    %31 = vector.load %arg5[%c0_8, %c0_9] : memref<64x128xbf16, #tpu.memory_space<vmem>>, vector<64x128xbf16>
    %cst_10 = arith.constant dense<0.000000e+00> : vector<16x128xf32>
    %32 = tpu.matmul %30, %31, %cst_10 {dimension_numbers = #tpu.dot_dimension_numbers<[1], [0], [0], [1], [0, 0, 1, 1], [], []>} : vector<16x64xbf16>, vector<64x128xbf16>, vector<16x128xf32> -> vector<16x128xf32>
    %cst_11 = arith.constant 0.000000e+00 : f32
    %33 = vector.broadcast %cst_11 : f32 to vector<16x128xf32>
    %34 = arith.maximumf %32, %33 : vector<16x128xf32>
    %35 = arith.truncf %34 : vector<16x128xf32> to vector<16x128xbf16>
    %c0_12 = arith.constant 0 : index
    %c0_13 = arith.constant 0 : index
    %36 = vector.load %arg6[%c0_12, %c0_13] : memref<128x1024xbf16, #tpu.memory_space<vmem>>, vector<128x1024xbf16>
    %cst_14 = arith.constant dense<0.000000e+00> : vector<16x1024xf32>
    %37 = tpu.matmul %35, %36, %cst_14 {dimension_numbers = #tpu.dot_dimension_numbers<[1], [0], [0], [1], [0, 0, 1, 1], [], []>} : vector<16x128xbf16>, vector<128x1024xbf16>, vector<16x1024xf32> -> vector<16x1024xf32>
    %cst_15 = arith.constant 0.000000e+00 : f32
    %38 = vector.broadcast %cst_15 : f32 to vector<16x1024xf32>
    %39 = arith.maximumf %37, %38 : vector<16x1024xf32>
    %cst_16 = arith.constant dense<0xFF800000> : vector<1024xf32>
    %40 = vector.multi_reduction <maximumf>, %39, %cst_16 [0] : vector<16x1024xf32> to vector<1024xf32>
    %41 = vector.shape_cast %40 : vector<1024xf32> to vector<1x1024xf32>
    %c0_i32 = arith.constant 0 : i32
    %42 = arith.cmpi eq, %arg1, %c0_i32 : i32
    %43 = arith.extui %42 : i1 to i32
    %c0_i32_17 = arith.constant 0 : i32
    %44 = arith.cmpi ne, %43, %c0_i32_17 : i32
    scf.if %44 {
      %c0_20 = arith.constant 0 : index
      %c0_21 = arith.constant 0 : index
      %c0_22 = arith.constant 0 : index
      %48 = vector.load %arg7[%c0_20, %c0_21, %c0_22] : memref<1x1x1024xf32, #tpu.memory_space<vmem>>, vector<1x1x1024xf32>
      %49 = vector.shape_cast %48 : vector<1x1x1024xf32> to vector<1x1024xf32>
      %50 = vector.shape_cast %41 : vector<1x1024xf32> to vector<1x1x1024xf32>
      tpu.vector_store %arg7[%c0_20, %c0_21, %c0_22], %50 {strides = array<i32>} : memref<1x1x1024xf32, #tpu.memory_space<vmem>>, vector<1x1x1024xf32>,
    } else {
    }
    %c0_i32_18 = arith.constant 0 : i32
    %45 = arith.cmpi sgt, %arg1, %c0_i32_18 : i32
    %46 = arith.extui %45 : i1 to i32
    %c0_i32_19 = arith.constant 0 : i32
    %47 = arith.cmpi ne, %46, %c0_i32_19 : i32
    scf.if %47 {
      %c0_20 = arith.constant 0 : index
      %c0_21 = arith.constant 0 : index
      %c0_22 = arith.constant 0 : index
      %48 = vector.load %arg7[%c0_20, %c0_21, %c0_22] : memref<1x1x1024xf32, #tpu.memory_space<vmem>>, vector<1x1x1024xf32>
      %49 = vector.shape_cast %48 : vector<1x1x1024xf32> to vector<1x1024xf32>
      %50 = arith.maximumf %49, %41 : vector<1x1024xf32>
      %c0_23 = arith.constant 0 : index
      %c0_24 = arith.constant 0 : index
      %c0_25 = arith.constant 0 : index
      %51 = vector.load %arg7[%c0_23, %c0_24, %c0_25] : memref<1x1x1024xf32, #tpu.memory_space<vmem>>, vector<1x1x1024xf32>
      %52 = vector.shape_cast %51 : vector<1x1x1024xf32> to vector<1x1024xf32>
      %53 = vector.shape_cast %50 : vector<1x1024xf32> to vector<1x1x1024xf32>
      tpu.vector_store %arg7[%c0_23, %c0_24, %c0_25], %53 {strides = array<i32>} : memref<1x1x1024xf32, #tpu.memory_space<vmem>>, vector<1x1x1024xf32>,
    } else {
    }
    return
  }
  func.func @transform_0(%arg0: i32, %arg1: i32) -> (i32, i32, i32) {
    %c0_i32 = arith.constant 0 : i32
    %c0_i32_0 = arith.constant 0 : i32
    return %arg0, %arg1, %c0_i32 : i32, i32, i32
  }
  func.func @transform_1(%arg0: i32, %arg1: i32) -> (i32, i32) {
    %c0_i32 = arith.constant 0 : i32
    %c0_i32_0 = arith.constant 0 : i32
    %c0_i32_1 = arith.constant 0 : i32
    return %c0_i32, %c0_i32_0 : i32, i32
  }
  func.func @transform_2(%arg0: i32, %arg1: i32) -> (i32, i32) {
    %c0_i32 = arith.constant 0 : i32
    %c0_i32_0 = arith.constant 0 : i32
    %c0_i32_1 = arith.constant 0 : i32
    return %c0_i32, %c0_i32_0 : i32, i32
  }
  func.func @transform_3(%arg0: i32, %arg1: i32) -> (i32, i32) {
    %c0_i32 = arith.constant 0 : i32
    %c0_i32_0 = arith.constant 0 : i32
    %c0_i32_1 = arith.constant 0 : i32
    return %c0_i32, %c0_i32_0 : i32, i32
  }
  func.func @transform_4(%arg0: i32, %arg1: i32) -> (i32, i32) {
    %c0_i32 = arith.constant 0 : i32
    %c0_i32_0 = arith.constant 0 : i32
    %c0_i32_1 = arith.constant 0 : i32
    return %c0_i32, %c0_i32_0 : i32, i32
  }
  func.func @transform_5(%arg0: i32, %arg1: i32) -> (i32, i32, i32) {
    %c0_i32 = arith.constant 0 : i32
    %c0_i32_0 = arith.constant 0 : i32
    %c0_i32_1 = arith.constant 0 : i32
    return %arg0, %c0_i32, %c0_i32_0 : i32, i32, i32
  }
}

module attributes {stable_mosaic.version = 11 : i64} {
  func.func @head_kernel(%arg0: memref<2x1024xf32, #tpu.memory_space<vmem>>, %arg1: memref<1024x512xbf16, #tpu.memory_space<vmem>>, %arg2: memref<1x512xf32, #tpu.memory_space<vmem>>, %arg3: memref<512x256xbf16, #tpu.memory_space<vmem>>, %arg4: memref<1x256xf32, #tpu.memory_space<vmem>>, %arg5: memref<256x8xbf16, #tpu.memory_space<vmem>>, %arg6: memref<1x8xf32, #tpu.memory_space<vmem>>, %arg7: memref<2x8xf32, #tpu.memory_space<vmem>>) attributes {dimension_semantics = [], scalar_prefetch = 0 : i64, scratch_operands = 0 : i64, tpu.core_type = #tpu.core_type<tc>} {
    %c0 = arith.constant 0 : index
    %c0_0 = arith.constant 0 : index
    %0 = vector.load %arg0[%c0, %c0_0] : memref<2x1024xf32, #tpu.memory_space<vmem>>, vector<2x1024xf32>
    %1 = arith.truncf %0 : vector<2x1024xf32> to vector<2x1024xbf16>
    %c0_1 = arith.constant 0 : index
    %c0_2 = arith.constant 0 : index
    %2 = vector.load %arg1[%c0_1, %c0_2] : memref<1024x512xbf16, #tpu.memory_space<vmem>>, vector<1024x512xbf16>
    %cst = arith.constant dense<0.000000e+00> : vector<2x512xf32>
    %3 = tpu.matmul %1, %2, %cst {dimension_numbers = #tpu.dot_dimension_numbers<[1], [0], [0], [1], [0, 0, 1, 1], [], []>} : vector<2x1024xbf16>, vector<1024x512xbf16>, vector<2x512xf32> -> vector<2x512xf32>
    %c0_3 = arith.constant 0 : index
    %c0_4 = arith.constant 0 : index
    %4 = vector.load %arg2[%c0_3, %c0_4] : memref<1x512xf32, #tpu.memory_space<vmem>>, vector<1x512xf32>
    %5 = vector.broadcast %4 : vector<1x512xf32> to vector<2x512xf32>
    %6 = arith.addf %3, %5 : vector<2x512xf32>
    %cst_5 = arith.constant 0.000000e+00 : f32
    %7 = vector.broadcast %cst_5 : f32 to vector<2x512xf32>
    %8 = arith.maximumf %6, %7 : vector<2x512xf32>
    %9 = arith.truncf %8 : vector<2x512xf32> to vector<2x512xbf16>
    %c0_6 = arith.constant 0 : index
    %c0_7 = arith.constant 0 : index
    %10 = vector.load %arg3[%c0_6, %c0_7] : memref<512x256xbf16, #tpu.memory_space<vmem>>, vector<512x256xbf16>
    %cst_8 = arith.constant dense<0.000000e+00> : vector<2x256xf32>
    %11 = tpu.matmul %9, %10, %cst_8 {dimension_numbers = #tpu.dot_dimension_numbers<[1], [0], [0], [1], [0, 0, 1, 1], [], []>} : vector<2x512xbf16>, vector<512x256xbf16>, vector<2x256xf32> -> vector<2x256xf32>
    %c0_9 = arith.constant 0 : index
    %c0_10 = arith.constant 0 : index
    %12 = vector.load %arg4[%c0_9, %c0_10] : memref<1x256xf32, #tpu.memory_space<vmem>>, vector<1x256xf32>
    %13 = vector.broadcast %12 : vector<1x256xf32> to vector<2x256xf32>
    %14 = arith.addf %11, %13 : vector<2x256xf32>
    %cst_11 = arith.constant 0.000000e+00 : f32
    %15 = vector.broadcast %cst_11 : f32 to vector<2x256xf32>
    %16 = arith.maximumf %14, %15 : vector<2x256xf32>
    %17 = arith.truncf %16 : vector<2x256xf32> to vector<2x256xbf16>
    %c0_12 = arith.constant 0 : index
    %c0_13 = arith.constant 0 : index
    %18 = vector.load %arg5[%c0_12, %c0_13] : memref<256x8xbf16, #tpu.memory_space<vmem>>, vector<256x8xbf16>
    %cst_14 = arith.constant dense<0.000000e+00> : vector<2x8xf32>
    %19 = tpu.matmul %17, %18, %cst_14 {dimension_numbers = #tpu.dot_dimension_numbers<[1], [0], [0], [1], [0, 0, 1, 1], [], []>} : vector<2x256xbf16>, vector<256x8xbf16>, vector<2x8xf32> -> vector<2x8xf32>
    %c0_15 = arith.constant 0 : index
    %c0_16 = arith.constant 0 : index
    %20 = vector.load %arg6[%c0_15, %c0_16] : memref<1x8xf32, #tpu.memory_space<vmem>>, vector<1x8xf32>
    %21 = vector.broadcast %20 : vector<1x8xf32> to vector<2x8xf32>
    %22 = arith.addf %19, %21 : vector<2x8xf32>
    %cst_17 = arith.constant 0.000000e+00 : f32
    %23 = vector.broadcast %cst_17 : f32 to vector<2x8xf32>
    %24 = arith.maximumf %22, %23 : vector<2x8xf32>
    %c0_18 = arith.constant 0 : index
    %c0_19 = arith.constant 0 : index
    %25 = vector.load %arg7[%c0_18, %c0_19] : memref<2x8xf32, #tpu.memory_space<vmem>>, vector<2x8xf32>
    tpu.vector_store %arg7[%c0_18, %c0_19], %24 {strides = array<i32>} : memref<2x8xf32, #tpu.memory_space<vmem>>, vector<2x8xf32>,
    return
  }
}

</mosaic_0001>

<llo_original>
// kernel: pointnet_cls_forward.2
$region0: #{pointnet_cls_forward.2}
  #allocation0 [shape = 'u32[]', space=smem, size = 0x4, offset = 0x4, fixed_abs, tag = 'smem constant byte address 0x4 - core index']
  #allocation1 [shape = 'u32[72,128]{1,0:T(1,128)}', space=vmem, size = 0x9000, scoped, tag = 'internal scratch']
  %s0 = inlined_call_operand.vmem [shape: bf16[2,16,3], index: 0, kind: input, shape index: {}]
  %s1 = inlined_call_operand.vmem [shape: f32[3,64], index: 1, kind: input, shape index: {}]
  %s2 = inlined_call_operand.hbm [shape: bf16[64,64], index: 2, kind: input, shape index: {}]
  %s3 = inlined_call_operand.hbm [shape: bf16[64,128], index: 3, kind: input, shape index: {}]
  %s4 = inlined_call_operand.hbm [shape: bf16[128,1024], index: 4, kind: input, shape index: {}]
  %s5 = inlined_call_operand.vmem [shape: f32[2,1,1024], index: 5, kind: output, shape index: {}]
  %s6 = sld [smem:[#allocation0]]
  $region73: #{pointnet_cls_forward.2} parent=0
    _
  %s8 = ssub.s32 1, %s6
  %s9 = scalar_select 0, %s8, %s6
  $region1: #{pointnet_cls_forward.2} parent=0
    #allocation2 [shape = 'u8[16384]{0}', space=vmem, size = 0x4000, scoped, tag = 'input window, operand 2, single buffered']
    #allocation3 [shape = 's32[2]{0}', space=sflag, size = 0x8, scoped, tag = 'scoped memory for pointnet_cls_forward.2']
    #allocation4 [shape = 'u8[16384]{0}', space=vmem, size = 0x4000, scoped, tag = 'input window, operand 3, single buffered']
    #allocation5 [shape = 's32[1]{0}', space=sflag, size = 0x4, scoped, tag = 'scoped memory for pointnet_cls_forward.2']
    #allocation6 [shape = 'u8[262144]{0}', space=vmem, size = 0x40000, scoped, tag = 'input window, operand 4, single buffered']
    %10 = vsyncpa [#allocation3], 0
    %11 = vsyncpa [#allocation5], 0
    loop: start=0, step=1, limit=4
    $region2: #{pointnet_cls_forward.2} parent=1 // loop_pre_header
      _
    $region3: #{pointnet_cls_forward.2} parent=1 // loop_header
      %s13 = sphi 0, %s17
      %p14 = scmp.ge.s32.totalorder %s13, 4
      %s20 = sphi 0, %s32
      %s21 = sphi 0, %s28
      %s22 = sphi 0, %s20
      %s23 = sphi 0, %s21
      %s24 = sphi 0, %s22
      %s25 = sphi 0, %s23
      %s37 = sphi 0, %s39
      %s40 = sphi 0, %s37
      %s41 = sphi 0, %s40
      %s57 = sphi 0, %s41
      %s61 = sphi 0, %s61
      %s63 = sphi 0, %s61
      %s64 = sphi 0, %s63
      %s78 = sphi 0, %s64
      %s82 = sphi 0, %s82
      %s84 = sphi 0, %s82
      %s85 = sphi 0, %s84
      %s99 = sphi 0, %s85
      %s103 = sphi 0, %s103
      %s105 = sphi 0, %s103
      %s106 = sphi 0, %s105
      %s120 = sphi 0, %s106
      %s124 = sphi 0, %s124
      %s126 = sphi 0, %s124
      %s127 = sphi 0, %s126
      %s141 = sphi 0, %s127
      %s147 = sphi 0, %s149
      %s150 = sphi 0, %s147
      %s151 = sphi 0, %s150
      %s167 = sphi 0, %s151
    $region4: #{pointnet_cls_forward.2} parent=1 // loop_header_branch
      %16 = sbr.rel (%p14) target = $region8
    $region5: #{pointnet_cls_forward.2} parent=1 // loop_body
      %s18 = ssub.s32 %s13, 1
      %s19 = ssub.s32 %s13, 2
      %s26 = sadd.s32 1, %s21
      %p27 = scmp.ge.s32.totalorder %s26, 1
      %s28 = scalar_select %p27, 0, %s26
      %s29 = sadd.s32 1, %s20
      %s30 = scalar_select %p27, %s29, %s20
      %p31 = scmp.ge.s32.totalorder %s30, 2
      %s32 = scalar_select %p31, 0, %s30
      %s33 = ssub.s32 %s20, %s32
      %s34 = ssub.s32 %s21, %s28
      %s35 = sor.u32 %s33, %s34
      %p36 = scmp.eq.s32.totalorder %s35, 0
      %s38 = sadd.s32 %s37, 1
      %s39 = scalar_select %p36, %s37, %s38
      %p42 = pneg %p36
      %p43 = scmp.eq.s32.totalorder %s13, 1
      %p44 = por %p42, %p43
      %p45 = scmp.ne.s32.totalorder %s37, %s40
      %p46 = scmp.eq.s32.totalorder %s13, 0
      %p47 = por %p45, %p46
      %p48 = scmp.ne.s32.totalorder %s37, %s40
      %p49 = scmp.eq.s32.totalorder %s18, 1
      %p50 = por %p48, %p49
      %p51 = scmp.ne.s32.totalorder %s40, %s41
      %p52 = scmp.eq.s32.totalorder %s18, 0
      %p53 = por %p51, %p52
      %p54 = scmp.ne.s32.totalorder %s40, %s41
      %p55 = scmp.eq.s32.totalorder %s19, 1
      %p56 = por %p54, %p55
      %p58 = scmp.ne.s32.totalorder %s41, %s57
      %p59 = scmp.eq.s32.totalorder %s19, 0
      %p60 = por %p58, %p59
      %s62 = sadd.s32 %s61, 1
      %p65 = scmp.eq.s32.totalorder %s13, 1
      %p66 = scmp.ne.s32.totalorder %s61, %s63
      %p67 = scmp.eq.s32.totalorder %s13, 0
      %p68 = por %p66, %p67
      %p69 = scmp.ne.s32.totalorder %s61, %s63
      %p70 = scmp.eq.s32.totalorder %s18, 1
      %p71 = por %p69, %p70
      %p72 = scmp.ne.s32.totalorder %s63, %s64
      %p73 = scmp.eq.s32.totalorder %s18, 0
      %p74 = por %p72, %p73
      %p75 = scmp.ne.s32.totalorder %s63, %s64
      %p76 = scmp.eq.s32.totalorder %s19, 1
      %p77 = por %p75, %p76
      %p79 = scmp.ne.s32.totalorder %s64, %s78
      %p80 = scmp.eq.s32.totalorder %s19, 0
      %p81 = por %p79, %p80
      %s83 = sadd.s32 %s82, 1
      %p86 = scmp.eq.s32.totalorder %s13, 1
      %p87 = scmp.ne.s32.totalorder %s82, %s84
      %p88 = scmp.eq.s32.totalorder %s13, 0
      %p89 = por %p87, %p88
      %p90 = scmp.ne.s32.totalorder %s82, %s84
      %p91 = scmp.eq.s32.totalorder %s18, 1
      %p92 = por %p90, %p91
      %p93 = scmp.ne.s32.totalorder %s84, %s85
      %p94 = scmp.eq.s32.totalorder %s18, 0
      %p95 = por %p93, %p94
      %p96 = scmp.ne.s32.totalorder %s84, %s85
      %p97 = scmp.eq.s32.totalorder %s19, 1
      %p98 = por %p96, %p97
      %p100 = scmp.ne.s32.totalorder %s85, %s99
      %p101 = scmp.eq.s32.totalorder %s19, 0
      %p102 = por %p100, %p101
      %s104 = sadd.s32 %s103, 1
      %p107 = scmp.eq.s32.totalorder %s13, 1
      %p108 = scmp.ne.s32.totalorder %s103, %s105
      %p109 = scmp.eq.s32.totalorder %s13, 0
      %p110 = por %p108, %p109
      %p111 = scmp.ne.s32.totalorder %s103, %s105
      %p112 = scmp.eq.s32.totalorder %s18, 1
      %p113 = por %p111, %p112
      %p114 = scmp.ne.s32.totalorder %s105, %s106
      %p115 = scmp.eq.s32.totalorder %s18, 0
      %p116 = por %p114, %p115
      %p117 = scmp.ne.s32.totalorder %s105, %s106
      %p118 = scmp.eq.s32.totalorder %s19, 1
      %p119 = por %p117, %p118
      %p121 = scmp.ne.s32.totalorder %s106, %s120
      %p122 = scmp.eq.s32.totalorder %s19, 0
      %p123 = por %p121, %p122
      %s125 = sadd.s32 %s124, 1
      %p128 = scmp.eq.s32.totalorder %s13, 1
      %p129 = scmp.ne.s32.totalorder %s124, %s126
      %p130 = scmp.eq.s32.totalorder %s13, 0
      %p131 = por %p129, %p130
      %p132 = scmp.ne.s32.totalorder %s124, %s126
      %p133 = scmp.eq.s32.totalorder %s18, 1
      %p134 = por %p132, %p133
      %p135 = scmp.ne.s32.totalorder %s126, %s127
      %p136 = scmp.eq.s32.totalorder %s18, 0
      %p137 = por %p135, %p136
      %p138 = scmp.ne.s32.totalorder %s126, %s127
      %p139 = scmp.eq.s32.totalorder %s19, 1
      %p140 = por %p138, %p139
      %p142 = scmp.ne.s32.totalorder %s127, %s141
      %p143 = scmp.eq.s32.totalorder %s19, 0
      %p144 = por %p142, %p143
      %s145 = ssub.s32 %s20, %s32
      %p146 = scmp.eq.s32.totalorder %s145, 0
      %s148 = sadd.s32 %s147, 1
      %s149 = scalar_select %p146, %s147, %s148
      %p152 = pneg %p146
      %p153 = scmp.eq.s32.totalorder %s13, 1
      %p154 = por %p152, %p153
      %p155 = scmp.ne.s32.totalorder %s147, %s150
      %p156 = scmp.eq.s32.totalorder %s13, 0
      %p157 = por %p155, %p156
      %p158 = scmp.ne.s32.totalorder %s147, %s150
      %p159 = scmp.eq.s32.totalorder %s18, 1
      %p160 = por %p158, %p159
      %p161 = scmp.ne.s32.totalorder %s150, %s151
      %p162 = scmp.eq.s32.totalorder %s18, 0
      %p163 = por %p161, %p162
      %p164 = scmp.ne.s32.totalorder %s150, %s151
      %p165 = scmp.eq.s32.totalorder %s19, 1
      %p166 = por %p164, %p165
      %p168 = scmp.ne.s32.totalorder %s151, %s167
      %p169 = scmp.eq.s32.totalorder %s19, 0
      %p170 = por %p168, %p169
      %p171 = scmp.le.s32.totalorder 1, %s13
      %p172 = scmp.lt.s32.totalorder %s13, 3
      %p173 = pnand %p171, %p172
      %p174 = pneg %p173
      // Predicated region
      $region9: #{pointnet_cls_forward.2} parent=5 // pred_check
        _
      $region10: #{pointnet_cls_forward.2} parent=5 // pred_check_branch
        %176 = sbr.rel (%p173) target = $region12
      $region11: #{pointnet_cls_forward.2} parent=5 // pred_region
        %s177 = ssub.s32 %s13, 1
        // Predicated region
        $region13: #{pointnet_cls_forward.2} parent=11 // pred_check
          %p178 = pneg %p74
        $region14: #{pointnet_cls_forward.2} parent=11 // pred_check_branch
          %180 = sbr.rel (%p178) target = $region16
        $region15: #{pointnet_cls_forward.2} parent=11 // pred_region
          _
        $region16: #{pointnet_cls_forward.2} parent=11 // pred_fallthru
          _
        // Predicated region
        $region17: #{pointnet_cls_forward.2} parent=11 // pred_check
          %p181 = pneg %p95
        $region18: #{pointnet_cls_forward.2} parent=11 // pred_check_branch
          %183 = sbr.rel (%p181) target = $region20
        $region19: #{pointnet_cls_forward.2} parent=11 // pred_region
          %185 = vsyncadd [#allocation3], 0
          %s186 = sshll.u32 %s2, 4
          %s187 = int_to_ptr.hbm [resolvable:$true] %s186
          %s188 = sshll.u32 [#allocation2], 4
          %s189 = int_to_ptr.vmem [resolvable:$true] %s188
          %194 = dma.hbm_to_vmem [thread:$0]  %s187, 512, %s189, [#allocation3], 64, 64, 4
        $region20: #{pointnet_cls_forward.2} parent=11 // pred_fallthru
          _
        // Predicated region
        $region21: #{pointnet_cls_forward.2} parent=11 // pred_check
          %p195 = pneg %p116
        $region22: #{pointnet_cls_forward.2} parent=11 // pred_check_branch
          %197 = sbr.rel (%p195) target = $region24
        $region23: #{pointnet_cls_forward.2} parent=11 // pred_region
          %199 = vsyncadd [#allocation5], 0
          %s200 = sshll.u32 %s3, 4
          %s201 = int_to_ptr.hbm [resolvable:$true] %s200
          %s202 = sshll.u32 [#allocation4], 4
          %s203 = int_to_ptr.vmem [resolvable:$true] %s202
          %208 = dma.hbm_to_vmem [thread:$0]  %s201, 512, %s203, [#allocation5], 64, 64, 4
        $region24: #{pointnet_cls_forward.2} parent=11 // pred_fallthru
          _
        // Predicated region
        $region25: #{pointnet_cls_forward.2} parent=11 // pred_check
          %p209 = pneg %p137
        $region26: #{pointnet_cls_forward.2} parent=11 // pred_check_branch
          %211 = sbr.rel (%p209) target = $region28
        $region27: #{pointnet_cls_forward.2} parent=11 // pred_region
          %213 = vsyncadd [#allocation5], 0
          %s214 = sshll.u32 %s4, 4
          %s215 = int_to_ptr.hbm [resolvable:$true] %s214
          %s216 = sshll.u32 [#allocation6], 4
          %s217 = int_to_ptr.vmem [resolvable:$true] %s216
          %222 = dma.hbm_to_vmem [thread:$0]  %s215, 8192, %s217, [#allocation5], 512, 512, 32
        $region28: #{pointnet_cls_forward.2} parent=11 // pred_fallthru
          _
      $region12: #{pointnet_cls_forward.2} parent=5 // pred_fallthru
        _
      %p223 = scmp.lt.s32.totalorder %s13, 2
      // Predicated region
      $region29: #{pointnet_cls_forward.2} parent=5 // pred_check
        %p224 = pneg %p223
      $region30: #{pointnet_cls_forward.2} parent=5 // pred_check_branch
        %226 = sbr.rel (%p224) target = $region32
      $region31: #{pointnet_cls_forward.2} parent=5 // pred_region
        // Predicated region
        $region33: #{pointnet_cls_forward.2} parent=31 // pred_check
          %p227 = pneg %p47
        $region34: #{pointnet_cls_forward.2} parent=31 // pred_check_branch
          %229 = sbr.rel (%p227) target = $region36
        $region35: #{pointnet_cls_forward.2} parent=31 // pred_region
          %s230 = smul.u32 2, %s21
          %p231 = scmp.lt.s32.totalorder %s20, 1
          %s232 = scalar_select %p231, %s20, 1
          %p233 = scmp.lt.s32.totalorder %s230, 1
          %s234 = scalar_select %p233, %s230, 1
          %s235 = smul.addr %s232, 2
          %s236 = sadd.s32 %s234, %s235
          %s237 = smul.addr %s236, 4
          %s238 = scalar_lea.vmem %s0, %s237
          %s239 = smul.u32 2, %s21
        $region36: #{pointnet_cls_forward.2} parent=31 // pred_fallthru
          _
      $region32: #{pointnet_cls_forward.2} parent=5 // pred_fallthru
        _
      %p240 = scmp.le.s32.totalorder 1, %s13
      %p241 = scmp.lt.s32.totalorder %s13, 3
      %p242 = pnand %p240, %p241
      %p243 = pneg %p242
      // Predicated region
      $region37: #{pointnet_cls_forward.2} parent=5 // pred_check
        _
      $region38: #{pointnet_cls_forward.2} parent=5 // pred_check_branch
        %245 = sbr.rel (%p242) target = $region40
      $region39: #{pointnet_cls_forward.2} parent=5 // pred_region
        %s246 = ssub.s32 %s13, 1
        // Predicated region
        $region41: #{pointnet_cls_forward.2} parent=39 // pred_check
          %p247 = pneg %p95
        $region42: #{pointnet_cls_forward.2} parent=39 // pred_check_branch
          %249 = sbr.rel (%p247) target = $region44
        $region43: #{pointnet_cls_forward.2} parent=39 // pred_region
          %251 = dma.done [#allocation3], 512
        $region44: #{pointnet_cls_forward.2} parent=39 // pred_fallthru
          _
        // Predicated region
        $region45: #{pointnet_cls_forward.2} parent=39 // pred_check
          %p252 = pneg %p116
        $region46: #{pointnet_cls_forward.2} parent=39 // pred_check_branch
          %254 = sbr.rel (%p252) target = $region48
        $region47: #{pointnet_cls_forward.2} parent=39 // pred_region
          %256 = dma.done [#allocation5], 512
        $region48: #{pointnet_cls_forward.2} parent=39 // pred_fallthru
          _
        // Predicated region
        $region49: #{pointnet_cls_forward.2} parent=39 // pred_check
          %p257 = pneg %p137
        $region50: #{pointnet_cls_forward.2} parent=39 // pred_check_branch
          %259 = sbr.rel (%p257) target = $region52
        $region51: #{pointnet_cls_forward.2} parent=39 // pred_region
          %261 = dma.done [#allocation5], 8192
        $region52: #{pointnet_cls_forward.2} parent=39 // pred_fallthru
          _
        %s262 = smul.u32 2, %s23
        %p263 = scmp.lt.s32.totalorder %s22, 1
        %s264 = scalar_select %p263, %s22, 1
        %p265 = scmp.lt.s32.totalorder %s262, 1
        %s266 = scalar_select %p265, %s262, 1
        %s267 = smul.addr %s264, 2
        %s268 = sadd.s32 %s266, %s267
        %s269 = smul.addr %s268, 4
        %s270 = scalar_lea.vmem %s0, %s269
        %p271 = pneg %p53
        %p272 = pneg %p50
        %p273 = pneg %p74
        %p274 = pneg %p71
        %p275 = pneg %p95
        %p276 = pneg %p92
        %p277 = pneg %p116
        %p278 = pneg %p113
        %p279 = pneg %p137
        %p280 = pneg %p134
        %p281 = pneg %p163
        %p282 = pneg %p160
        %p283 = scmp.lt.s32.totalorder %s22, 1
        %s284 = scalar_select %p283, %s22, 1
        %s285 = smul.addr %s284, 8
        %s286 = scalar_lea.vmem %s5, %s285
        %s287 = smul.u32 2, %s23
        %p288 = scmp.lt.s32.totalorder %s22, 1
        %s289 = scalar_select %p288, %s22, 1
        %p290 = scmp.lt.s32.totalorder %s287, 1
        %s291 = scalar_select %p290, %s287, 1
        %s292 = smul.addr %s289, 2
        %s293 = sadd.s32 %s291, %s292
        %s294 = smul.addr %s293, 4
        %s295 = scalar_lea.vmem %s0, %s294
        %s296 = smul.u32 2, %s23
        %p297 = scmp.lt.s32.totalorder %s22, 1
        %s298 = scalar_select %p297, %s22, 1
        %s299 = smul.addr %s298, 8
        %s300 = scalar_lea.vmem %s5, %s299
        %v302 = vld [vmem:[%s295] sm:$0xf]
        %v303 = vld [vmem:[%s295 + $0x4] sm:$0xf]
        %v304 = vld [vmem:[%s1] sm:$0x7]
        %v305 = vunpack.c.l.bf16 %v302
        %v306 = vunpack.c.l.bf16 %v303
        %308 = vset.pattern.permute.xlu0 0
        %309 = vperm.xlu0 %308, %v305
        %v310 = vpop.permute.xlu0 %309
        %313 = vset.pattern.permute.xlu0 0
        %314 = vperm.xlu0 %313, %v306
        %v315 = vpop.permute.xlu0 %314
        %v317 = vperm.slane %v304, 0
        %v318 = vmul.f32 %v310, %v317
        %v319 = vmul.f32 %v315, %v317
        %320 = vset.pattern.permute.xlu0 1
        %321 = vperm.xlu0 %320, %v305
        %v322 = vpop.permute.xlu0 %321
        %324 = vset.pattern.permute.xlu0 1
        %325 = vperm.xlu0 %324, %v306
        %v326 = vpop.permute.xlu0 %325
        %v328 = vperm.slane %v304, 1
        %v329 = vmul.f32 %v322, %v328
        %v330 = vmul.f32 %v326, %v328
        %v331 = vadd.f32 %v318, %v329
        %v332 = vadd.f32 %v319, %v330
        %333 = vset.pattern.permute.xlu0 2
        %334 = vperm.xlu0 %333, %v305
        %v335 = vpop.permute.xlu0 %334
        %337 = vset.pattern.permute.xlu0 2
        %338 = vperm.xlu0 %337, %v306
        %v339 = vpop.permute.xlu0 %338
        %v341 = vperm.slane %v304, 2
        %v342 = vmul.f32 %v335, %v341
        %v343 = vmul.f32 %v339, %v341
        %v344 = vadd.f32 %v331, %v342
        %v345 = vadd.f32 %v332, %v343
        %v346 = vmax.f32 %v344, 0.0
        %v347 = vmax.f32 %v345, 0.0
        %v348 = vpack.c.bf16 %v347, %v346
        %v349 = vld [vmem:[#allocation2] sm:$0xf]
        %v350 = vld [vmem:[#allocation2 + $0x4] sm:$0xf]
        %v351 = vld [vmem:[#allocation2 + $0x8] sm:$0xf]
        %v352 = vld [vmem:[#allocation2 + $0xc] sm:$0xf]
        %v353 = vld [vmem:[#allocation2 + $0x10] sm:$0xf]
        %v354 = vld [vmem:[#allocation2 + $0x14] sm:$0xf]
        %v355 = vld [vmem:[#allocation2 + $0x18] sm:$0xf]
        %v356 = vld [vmem:[#allocation2 + $0x1c] sm:$0xf]
        %v365 = vunpack.c.l.b16 %v349
        %v366 = vunpack.c.l.b16 %v350
        %v367 = vunpack.c.l.b16 %v351
        %v368 = vunpack.c.l.b16 %v352
        %v369 = vunpack.c.l.b16 %v353
        %v370 = vunpack.c.l.b16 %v354
        %v371 = vunpack.c.l.b16 %v355
        %v372 = vunpack.c.l.b16 %v356
        %v373 = vpack.c.b16 %v366, %v365
        %v374 = vpack.c.b16 %v368, %v367
        %v375 = vpack.c.b16 %v370, %v369
        %v376 = vpack.c.b16 %v372, %v371
        %vm381 = vcmask 523264
        %v383 = vsel %vm381, %v348, 0
        %385 = vmatpush.bf16.msra.mxu0 0
        %386 = vmatpush.bf16.msra.mxu0 0
        %387 = vmatpush.bf16.msra.mxu0 0
        %388 = vmatpush.bf16.msra.mxu0 0
        %389 = vmatpush.bf16.msra.mxu0 %v376
        %390 = vmatpush.bf16.msra.mxu0 %v375
        %391 = vmatpush.bf16.msra.mxu0 %v374
        %392 = vmatpush.bf16.msra.mxu0 %v373
        %393 = vmatmul.bf16.gmra.mxu0 %v383
        %v394 = vpop.f32.mrf.mxu0
        %v395 = vadd.f32 0.0, %v394
        %v396 = vpop.f32.mrf.mxu0
        %v397 = vadd.f32 0.0, %v396
        %398 = vdwg.mxu0
        %v399 = vmax.f32 %v395, 0.0
        %v400 = vmax.f32 %v397, 0.0
        %v401 = vpack.c.bf16 %v400, %v399
        %v402 = vld [vmem:[#allocation4] sm:$0xf]
        %v403 = vld [vmem:[#allocation4 + $0x4] sm:$0xf]
        %v404 = vld [vmem:[#allocation4 + $0x8] sm:$0xf]
        %v405 = vld [vmem:[#allocation4 + $0xc] sm:$0xf]
        %v406 = vld [vmem:[#allocation4 + $0x10] sm:$0xf]
        %v407 = vld [vmem:[#allocation4 + $0x14] sm:$0xf]
        %v408 = vld [vmem:[#allocation4 + $0x18] sm:$0xf]
        %v409 = vld [vmem:[#allocation4 + $0x1c] sm:$0xf]
        %v418 = vunpack.c.l.b16 %v402
        %v419 = vunpack.c.l.b16 %v403
        %v420 = vunpack.c.l.b16 %v404
        %v421 = vunpack.c.l.b16 %v405
        %v422 = vunpack.c.l.b16 %v406
        %v423 = vunpack.c.l.b16 %v407
        %v424 = vunpack.c.l.b16 %v408
        %v425 = vunpack.c.l.b16 %v409
        %v426 = vpack.c.b16 %v419, %v418
        %v427 = vpack.c.b16 %v421, %v420
        %v428 = vpack.c.b16 %v423, %v422
        %v429 = vpack.c.b16 %v425, %v424
        %v435 = vsel %vm381, %v401, 0
        %437 = vmatpush.bf16.msra.mxu0 0
        %438 = vmatpush.bf16.msra.mxu0 0
        %439 = vmatpush.bf16.msra.mxu0 0
        %440 = vmatpush.bf16.msra.mxu0 0
        %441 = vmatpush.bf16.msra.mxu0 %v429
        %442 = vmatpush.bf16.msra.mxu0 %v428
        %443 = vmatpush.bf16.msra.mxu0 %v427
        %444 = vmatpush.bf16.msra.mxu0 %v426
        %445 = vmatmul.bf16.gmra.mxu0 %v435
        %v446 = vpop.f32.mrf.mxu0
        %v447 = vadd.f32 0.0, %v446
        %v448 = vpop.f32.mrf.mxu0
        %v449 = vadd.f32 0.0, %v448
        %450 = vdwg.mxu0
        %v451 = vmax.f32 %v447, 0.0
        %v452 = vmax.f32 %v449, 0.0
        %v453 = vpack.c.bf16 %v452, %v451
        %v454 = vld [vmem:[#allocation6] sm:$0xff]
        %v455 = vld [vmem:[#allocation6 + $0x8] sm:$0xff]
        %v456 = vld [vmem:[#allocation6 + $0x10] sm:$0xff]
        %v457 = vld [vmem:[#allocation6 + $0x18] sm:$0xff]
        %v458 = vld [vmem:[#allocation6 + $0x20] sm:$0xff]
        %v459 = vld [vmem:[#allocation6 + $0x28] sm:$0xff]
        %v460 = vld [vmem:[#allocation6 + $0x30] sm:$0xff]
        %v461 = vld [vmem:[#allocation6 + $0x38] sm:$0xff]
        %v462 = vld [vmem:[#allocation6 + $0x40] sm:$0xff]
        %v463 = vld [vmem:[#allocation6 + $0x48] sm:$0xff]
        %v464 = vld [vmem:[#allocation6 + $0x50] sm:$0xff]
        %v465 = vld [vmem:[#allocation6 + $0x58] sm:$0xff]
        %v466 = vld [vmem:[#allocation6 + $0x60] sm:$0xff]
        %v467 = vld [vmem:[#allocation6 + $0x68] sm:$0xff]
        %v468 = vld [vmem:[#allocation6 + $0x70] sm:$0xff]
        %v469 = vld [vmem:[#allocation6 + $0x78] sm:$0xff]
        %v470 = vld [vmem:[#allocation6 + $0x80] sm:$0xff]
        %v471 = vld [vmem:[#allocation6 + $0x88] sm:$0xff]
        %v472 = vld [vmem:[#allocation6 + $0x90] sm:$0xff]
        %v473 = vld [vmem:[#allocation6 + $0x98] sm:$0xff]
        %v474 = vld [vmem:[#allocation6 + $0xa0] sm:$0xff]
        %v475 = vld [vmem:[#allocation6 + $0xa8] sm:$0xff]
        %v476 = vld [vmem:[#allocation6 + $0xb0] sm:$0xff]
        %v477 = vld [vmem:[#allocation6 + $0xb8] sm:$0xff]
        %v478 = vld [vmem:[#allocation6 + $0xc0] sm:$0xff]
        %v479 = vld [vmem:[#allocation6 + $0xc8] sm:$0xff]
        %v480 = vld [vmem:[#allocation6 + $0xd0] sm:$0xff]
        %v481 = vld [vmem:[#allocation6 + $0xd8] sm:$0xff]
        %v482 = vld [vmem:[#allocation6 + $0xe0] sm:$0xff]
        %v483 = vld [vmem:[#allocation6 + $0xe8] sm:$0xff]
        %v484 = vld [vmem:[#allocation6 + $0xf0] sm:$0xff]
        %v485 = vld [vmem:[#allocation6 + $0xf8] sm:$0xff]
        %v486 = vld [vmem:[#allocation6 + $0x100] sm:$0xff]
        %v487 = vld [vmem:[#allocation6 + $0x108] sm:$0xff]
        %v488 = vld [vmem:[#allocation6 + $0x110] sm:$0xff]
        %v489 = vld [vmem:[#allocation6 + $0x118] sm:$0xff]
        %v490 = vld [vmem:[#allocation6 + $0x120] sm:$0xff]
        %v491 = vld [vmem:[#allocation6 + $0x128] sm:$0xff]
        %v492 = vld [vmem:[#allocation6 + $0x130] sm:$0xff]
        %v493 = vld [vmem:[#allocation6 + $0x138] sm:$0xff]
        %v494 = vld [vmem:[#allocation6 + $0x140] sm:$0xff]
        %v495 = vld [vmem:[#allocation6 + $0x148] sm:$0xff]
        %v496 = vld [vmem:[#allocation6 + $0x150] sm:$0xff]
        %v497 = vld [vmem:[#allocation6 + $0x158] sm:$0xff]
        %v498 = vld [vmem:[#allocation6 + $0x160] sm:$0xff]
        %v499 = vld [vmem:[#allocation6 + $0x168] sm:$0xff]
        %v500 = vld [vmem:[#allocation6 + $0x170] sm:$0xff]
        %v501 = vld [vmem:[#allocation6 + $0x178] sm:$0xff]
        %v502 = vld [vmem:[#allocation6 + $0x180] sm:$0xff]
        %v503 = vld [vmem:[#allocation6 + $0x188] sm:$0xff]
        %v504 = vld [vmem:[#allocation6 + $0x190] sm:$0xff]
        %v505 = vld [vmem:[#allocation6 + $0x198] sm:$0xff]
        %v506 = vld [vmem:[#allocation6 + $0x1a0] sm:$0xff]
        %v507 = vld [vmem:[#allocation6 + $0x1a8] sm:$0xff]
        %v508 = vld [vmem:[#allocation6 + $0x1b0] sm:$0xff]
        %v509 = vld [vmem:[#allocation6 + $0x1b8] sm:$0xff]
        %v510 = vld [vmem:[#allocation6 + $0x1c0] sm:$0xff]
        %v511 = vld [vmem:[#allocation6 + $0x1c8] sm:$0xff]
        %v512 = vld [vmem:[#allocation6 + $0x1d0] sm:$0xff]
        %v513 = vld [vmem:[#allocation6 + $0x1d8] sm:$0xff]
        %v514 = vld [vmem:[#allocation6 + $0x1e0] sm:$0xff]
        %v515 = vld [vmem:[#allocation6 + $0x1e8] sm:$0xff]
        %v516 = vld [vmem:[#allocation6 + $0x1f0] sm:$0xff]
        %v517 = vld [vmem:[#allocation6 + $0x1f8] sm:$0xff]
        %v582 = vunpack.c.l.b16 %v454
        %v583 = vunpack.c.h.b16 %v454
        %v584 = vunpack.c.l.b16 %v455
        %v585 = vunpack.c.h.b16 %v455
        %v586 = vunpack.c.l.b16 %v456
        %v587 = vunpack.c.h.b16 %v456
        %v588 = vunpack.c.l.b16 %v457
        %v589 = vunpack.c.h.b16 %v457
        %v590 = vunpack.c.l.b16 %v458
        %v591 = vunpack.c.h.b16 %v458
        %v592 = vunpack.c.l.b16 %v459
        %v593 = vunpack.c.h.b16 %v459
        %v594 = vunpack.c.l.b16 %v460
        %v595 = vunpack.c.h.b16 %v460
        %v596 = vunpack.c.l.b16 %v461
        %v597 = vunpack.c.h.b16 %v461
        %v598 = vunpack.c.l.b16 %v462
        %v599 = vunpack.c.h.b16 %v462
        %v600 = vunpack.c.l.b16 %v463
        %v601 = vunpack.c.h.b16 %v463
        %v602 = vunpack.c.l.b16 %v464
        %v603 = vunpack.c.h.b16 %v464
        %v604 = vunpack.c.l.b16 %v465
        %v605 = vunpack.c.h.b16 %v465
        %v606 = vunpack.c.l.b16 %v466
        %v607 = vunpack.c.h.b16 %v466
        %v608 = vunpack.c.l.b16 %v467
        %v609 = vunpack.c.h.b16 %v467
        %v610 = vunpack.c.l.b16 %v468
        %v611 = vunpack.c.h.b16 %v468
        %v612 = vunpack.c.l.b16 %v469
        %v613 = vunpack.c.h.b16 %v469
        %v614 = vunpack.c.l.b16 %v470
        %v615 = vunpack.c.h.b16 %v470
        %v616 = vunpack.c.l.b16 %v471
        %v617 = vunpack.c.h.b16 %v471
        %v618 = vunpack.c.l.b16 %v472
        %v619 = vunpack.c.h.b16 %v472
        %v620 = vunpack.c.l.b16 %v473
        %v621 = vunpack.c.h.b16 %v473
        %v622 = vunpack.c.l.b16 %v474
        %v623 = vunpack.c.h.b16 %v474
        %v624 = vunpack.c.l.b16 %v475
        %v625 = vunpack.c.h.b16 %v475
        %v626 = vunpack.c.l.b16 %v476
        %v627 = vunpack.c.h.b16 %v476
        %v628 = vunpack.c.l.b16 %v477
        %v629 = vunpack.c.h.b16 %v477
        %v630 = vunpack.c.l.b16 %v478
        %v631 = vunpack.c.h.b16 %v478
        %v632 = vunpack.c.l.b16 %v479
        %v633 = vunpack.c.h.b16 %v479
        %v634 = vunpack.c.l.b16 %v480
        %v635 = vunpack.c.h.b16 %v480
        %v636 = vunpack.c.l.b16 %v481
        %v637 = vunpack.c.h.b16 %v481
        %v638 = vunpack.c.l.b16 %v482
        %v639 = vunpack.c.h.b16 %v482
        %v640 = vunpack.c.l.b16 %v483
        %v641 = vunpack.c.h.b16 %v483
        %v642 = vunpack.c.l.b16 %v484
        %v643 = vunpack.c.h.b16 %v484
        %v644 = vunpack.c.l.b16 %v485
        %v645 = vunpack.c.h.b16 %v485
        %v646 = vunpack.c.l.b16 %v486
        %v647 = vunpack.c.h.b16 %v486
        %v648 = vunpack.c.l.b16 %v487
        %v649 = vunpack.c.h.b16 %v487
        %v650 = vunpack.c.l.b16 %v488
        %v651 = vunpack.c.h.b16 %v488
        %v652 = vunpack.c.l.b16 %v489
        %v653 = vunpack.c.h.b16 %v489
        %v654 = vunpack.c.l.b16 %v490
        %v655 = vunpack.c.h.b16 %v490
        %v656 = vunpack.c.l.b16 %v491
        %v657 = vunpack.c.h.b16 %v491
        %v658 = vunpack.c.l.b16 %v492
        %v659 = vunpack.c.h.b16 %v492
        %v660 = vunpack.c.l.b16 %v493
        %v661 = vunpack.c.h.b16 %v493
        %v662 = vunpack.c.l.b16 %v494
        %v663 = vunpack.c.h.b16 %v494
        %v664 = vunpack.c.l.b16 %v495
        %v665 = vunpack.c.h.b16 %v495
        %v666 = vunpack.c.l.b16 %v496
        %v667 = vunpack.c.h.b16 %v496
        %v668 = vunpack.c.l.b16 %v497
        %v669 = vunpack.c.h.b16 %v497
        %v670 = vunpack.c.l.b16 %v498
        %v671 = vunpack.c.h.b16 %v498
        %v672 = vunpack.c.l.b16 %v499
        %v673 = vunpack.c.h.b16 %v499
        %v674 = vunpack.c.l.b16 %v500
        %v675 = vunpack.c.h.b16 %v500
        %v676 = vunpack.c.l.b16 %v501
        %v677 = vunpack.c.h.b16 %v501
        %v678 = vunpack.c.l.b16 %v502
        %v679 = vunpack.c.h.b16 %v502
        %v680 = vunpack.c.l.b16 %v503
        %v681 = vunpack.c.h.b16 %v503
        %v682 = vunpack.c.l.b16 %v504
        %v683 = vunpack.c.h.b16 %v504
        %v684 = vunpack.c.l.b16 %v505
        %v685 = vunpack.c.h.b16 %v505
        %v686 = vunpack.c.l.b16 %v506
        %v687 = vunpack.c.h.b16 %v506
        %v688 = vunpack.c.l.b16 %v507
        %v689 = vunpack.c.h.b16 %v507
        %v690 = vunpack.c.l.b16 %v508
        %v691 = vunpack.c.h.b16 %v508
        %v692 = vunpack.c.l.b16 %v509
        %v693 = vunpack.c.h.b16 %v509
        %v694 = vunpack.c.l.b16 %v510
        %v695 = vunpack.c.h.b16 %v510
        %v696 = vunpack.c.l.b16 %v511
        %v697 = vunpack.c.h.b16 %v511
        %v698 = vunpack.c.l.b16 %v512
        %v699 = vunpack.c.h.b16 %v512
        %v700 = vunpack.c.l.b16 %v513
        %v701 = vunpack.c.h.b16 %v513
        %v702 = vunpack.c.l.b16 %v514
        %v703 = vunpack.c.h.b16 %v514
        %v704 = vunpack.c.l.b16 %v515
        %v705 = vunpack.c.h.b16 %v515
        %v706 = vunpack.c.l.b16 %v516
        %v707 = vunpack.c.h.b16 %v516
        %v708 = vunpack.c.l.b16 %v517
        %v709 = vunpack.c.h.b16 %v517
        %v710 = vpack.c.b16 %v590, %v582
        %v711 = vpack.c.b16 %v591, %v583
        %v712 = vpack.c.b16 %v592, %v584
        %v713 = vpack.c.b16 %v593, %v585
        %v714 = vpack.c.b16 %v594, %v586
        %v715 = vpack.c.b16 %v595, %v587
        %v716 = vpack.c.b16 %v596, %v588
        %v717 = vpack.c.b16 %v597, %v589
        %v718 = vpack.c.b16 %v606, %v598
        %v719 = vpack.c.b16 %v607, %v599
        %v720 = vpack.c.b16 %v608, %v600
        %v721 = vpack.c.b16 %v609, %v601
        %v722 = vpack.c.b16 %v610, %v602
        %v723 = vpack.c.b16 %v611, %v603
        %v724 = vpack.c.b16 %v612, %v604
        %v725 = vpack.c.b16 %v613, %v605
        %v726 = vpack.c.b16 %v622, %v614
        %v727 = vpack.c.b16 %v623, %v615
        %v728 = vpack.c.b16 %v624, %v616
        %v729 = vpack.c.b16 %v625, %v617
        %v730 = vpack.c.b16 %v626, %v618
        %v731 = vpack.c.b16 %v627, %v619
        %v732 = vpack.c.b16 %v628, %v620
        %v733 = vpack.c.b16 %v629, %v621
        %v734 = vpack.c.b16 %v638, %v630
        %v735 = vpack.c.b16 %v639, %v631
        %v736 = vpack.c.b16 %v640, %v632
        %v737 = vpack.c.b16 %v641, %v633
        %v738 = vpack.c.b16 %v642, %v634
        %v739 = vpack.c.b16 %v643, %v635
        %v740 = vpack.c.b16 %v644, %v636
        %v741 = vpack.c.b16 %v645, %v637
        %v742 = vpack.c.b16 %v654, %v646
        %v743 = vpack.c.b16 %v655, %v647
        %v744 = vpack.c.b16 %v656, %v648
        %v745 = vpack.c.b16 %v657, %v649
        %v746 = vpack.c.b16 %v658, %v650
        %v747 = vpack.c.b16 %v659, %v651
        %v748 = vpack.c.b16 %v660, %v652
        %v749 = vpack.c.b16 %v661, %v653
        %v750 = vpack.c.b16 %v670, %v662
        %v751 = vpack.c.b16 %v671, %v663
        %v752 = vpack.c.b16 %v672, %v664
        %v753 = vpack.c.b16 %v673, %v665
        %v754 = vpack.c.b16 %v674, %v666
        %v755 = vpack.c.b16 %v675, %v667
        %v756 = vpack.c.b16 %v676, %v668
        %v757 = vpack.c.b16 %v677, %v669
        %v758 = vpack.c.b16 %v686, %v678
        %v759 = vpack.c.b16 %v687, %v679
        %v760 = vpack.c.b16 %v688, %v680
        %v761 = vpack.c.b16 %v689, %v681
        %v762 = vpack.c.b16 %v690, %v682
        %v763 = vpack.c.b16 %v691, %v683
        %v764 = vpack.c.b16 %v692, %v684
        %v765 = vpack.c.b16 %v693, %v685
        %v766 = vpack.c.b16 %v702, %v694
        %v767 = vpack.c.b16 %v703, %v695
        %v768 = vpack.c.b16 %v704, %v696
        %v769 = vpack.c.b16 %v705, %v697
        %v770 = vpack.c.b16 %v706, %v698
        %v771 = vpack.c.b16 %v707, %v699
        %v772 = vpack.c.b16 %v708, %v700
        %v773 = vpack.c.b16 %v709, %v701
        %838 = vmatpush.bf16.msra.mxu0 %v766
        %839 = vmatpush.bf16.msra.mxu0 %v758
        %840 = vmatpush.bf16.msra.mxu0 %v750
        %841 = vmatpush.bf16.msra.mxu0 %v742
        %842 = vmatpush.bf16.msra.mxu0 %v734
        %843 = vmatpush.bf16.msra.mxu0 %v726
        %844 = vmatpush.bf16.msra.mxu0 %v718
        %845 = vmatpush.bf16.msra.mxu0 %v710
        %846 = vmatmul.bf16.gmra.mxu0 %v453
        %v847 = vpop.f32.mrf.mxu0
        %v848 = vadd.f32 0.0, %v847
        %v849 = vpop.f32.mrf.mxu0
        %v850 = vadd.f32 0.0, %v849
        %851 = vdwg.mxu0
        %852 = vmatpush.bf16.msra.mxu0 %v767
        %853 = vmatpush.bf16.msra.mxu0 %v759
        %854 = vmatpush.bf16.msra.mxu0 %v751
        %855 = vmatpush.bf16.msra.mxu0 %v743
        %856 = vmatpush.bf16.msra.mxu0 %v735
        %857 = vmatpush.bf16.msra.mxu0 %v727
        %858 = vmatpush.bf16.msra.mxu0 %v719
        %859 = vmatpush.bf16.msra.mxu0 %v711
        %860 = vmatmul.bf16.gmra.mxu0 %v453
        %v861 = vpop.f32.mrf.mxu0
        %v862 = vadd.f32 0.0, %v861
        %v863 = vpop.f32.mrf.mxu0
        %v864 = vadd.f32 0.0, %v863
        %865 = vdwg.mxu0
        %866 = vmatpush.bf16.msra.mxu0 %v768
        %867 = vmatpush.bf16.msra.mxu0 %v760
        %868 = vmatpush.bf16.msra.mxu0 %v752
        %869 = vmatpush.bf16.msra.mxu0 %v744
        %870 = vmatpush.bf16.msra.mxu0 %v736
        %871 = vmatpush.bf16.msra.mxu0 %v728
        %872 = vmatpush.bf16.msra.mxu0 %v720
        %873 = vmatpush.bf16.msra.mxu0 %v712
        %874 = vmatmul.bf16.gmra.mxu0 %v453
        %v875 = vpop.f32.mrf.mxu0
        %v876 = vadd.f32 0.0, %v875
        %v877 = vpop.f32.mrf.mxu0
        %v878 = vadd.f32 0.0, %v877
        %879 = vdwg.mxu0
        %880 = vmatpush.bf16.msra.mxu0 %v769
        %881 = vmatpush.bf16.msra.mxu0 %v761
        %882 = vmatpush.bf16.msra.mxu0 %v753
        %883 = vmatpush.bf16.msra.mxu0 %v745
        %884 = vmatpush.bf16.msra.mxu0 %v737
        %885 = vmatpush.bf16.msra.mxu0 %v729
        %886 = vmatpush.bf16.msra.mxu0 %v721
        %887 = vmatpush.bf16.msra.mxu0 %v713
        %888 = vmatmul.bf16.gmra.mxu0 %v453
        %v889 = vpop.f32.mrf.mxu0
        %v890 = vadd.f32 0.0, %v889
        %v891 = vpop.f32.mrf.mxu0
        %v892 = vadd.f32 0.0, %v891
        %893 = vdwg.mxu0
        %894 = vmatpush.bf16.msra.mxu0 %v770
        %895 = vmatpush.bf16.msra.mxu0 %v762
        %896 = vmatpush.bf16.msra.mxu0 %v754
        %897 = vmatpush.bf16.msra.mxu0 %v746
        %898 = vmatpush.bf16.msra.mxu0 %v738
        %899 = vmatpush.bf16.msra.mxu0 %v730
        %900 = vmatpush.bf16.msra.mxu0 %v722
        %901 = vmatpush.bf16.msra.mxu0 %v714
        %902 = vmatmul.bf16.gmra.mxu0 %v453
        %v903 = vpop.f32.mrf.mxu0
        %v904 = vadd.f32 0.0, %v903
        %v905 = vpop.f32.mrf.mxu0
        %v906 = vadd.f32 0.0, %v905
        %907 = vdwg.mxu0
        %908 = vmatpush.bf16.msra.mxu0 %v771
        %909 = vmatpush.bf16.msra.mxu0 %v763
        %910 = vmatpush.bf16.msra.mxu0 %v755
        %911 = vmatpush.bf16.msra.mxu0 %v747
        %912 = vmatpush.bf16.msra.mxu0 %v739
        %913 = vmatpush.bf16.msra.mxu0 %v731
        %914 = vmatpush.bf16.msra.mxu0 %v723
        %915 = vmatpush.bf16.msra.mxu0 %v715
        %916 = vmatmul.bf16.gmra.mxu0 %v453
        %v917 = vpop.f32.mrf.mxu0
        %v918 = vadd.f32 0.0, %v917
        %v919 = vpop.f32.mrf.mxu0
        %v920 = vadd.f32 0.0, %v919
        %921 = vdwg.mxu0
        %922 = vmatpush.bf16.msra.mxu0 %v772
        %923 = vmatpush.bf16.msra.mxu0 %v764
        %924 = vmatpush.bf16.msra.mxu0 %v756
        %925 = vmatpush.bf16.msra.mxu0 %v748
        %926 = vmatpush.bf16.msra.mxu0 %v740
        %927 = vmatpush.bf16.msra.mxu0 %v732
        %928 = vmatpush.bf16.msra.mxu0 %v724
        %929 = vmatpush.bf16.msra.mxu0 %v716
        %930 = vmatmul.bf16.gmra.mxu0 %v453
        %v931 = vpop.f32.mrf.mxu0
        %v932 = vadd.f32 0.0, %v931
        %v933 = vpop.f32.mrf.mxu0
        %v934 = vadd.f32 0.0, %v933
        %935 = vdwg.mxu0
        %936 = vmatpush.bf16.msra.mxu0 %v773
        %937 = vmatpush.bf16.msra.mxu0 %v765
        %938 = vmatpush.bf16.msra.mxu0 %v757
        %939 = vmatpush.bf16.msra.mxu0 %v749
        %940 = vmatpush.bf16.msra.mxu0 %v741
        %941 = vmatpush.bf16.msra.mxu0 %v733
        %942 = vmatpush.bf16.msra.mxu0 %v725
        %943 = vmatpush.bf16.msra.mxu0 %v717
        %944 = vmatmul.bf16.gmra.mxu0 %v453
        %v945 = vpop.f32.mrf.mxu0
        %v946 = vadd.f32 0.0, %v945
        %v947 = vpop.f32.mrf.mxu0
        %v948 = vadd.f32 0.0, %v947
        %949 = vdwg.mxu0
        %v950 = vmax.f32 %v848, 0.0
        %v951 = vmax.f32 %v862, 0.0
        %v952 = vmax.f32 %v876, 0.0
        %v953 = vmax.f32 %v890, 0.0
        %v954 = vmax.f32 %v904, 0.0
        %v955 = vmax.f32 %v918, 0.0
        %v956 = vmax.f32 %v932, 0.0
        %v957 = vmax.f32 %v946, 0.0
        %v958 = vmax.f32 %v850, 0.0
        %v959 = vmax.f32 %v864, 0.0
        %v960 = vmax.f32 %v878, 0.0
        %v961 = vmax.f32 %v892, 0.0
        %v962 = vmax.f32 %v906, 0.0
        %v963 = vmax.f32 %v920, 0.0
        %v964 = vmax.f32 %v934, 0.0
        %v965 = vmax.f32 %v948, 0.0
        %v966 = vmax.f32 %v950, %v958
        %v967 = vrot.slane %v966, 4
        %v968 = vmax.f32 %v966, %v967
        %v969 = vrot.slane %v968, 2
        %v970 = vmax.f32 %v968, %v969
        %v971 = vrot.slane %v970, 1
        %v972 = vmax.f32 %v970, %v971
        %v973 = vmax.f32 %v951, %v959
        %v974 = vrot.slane %v973, 4
        %v975 = vmax.f32 %v973, %v974
        %v976 = vrot.slane %v975, 2
        %v977 = vmax.f32 %v975, %v976
        %v978 = vrot.slane %v977, 1
        %v979 = vmax.f32 %v977, %v978
        %v980 = vmax.f32 %v952, %v960
        %v981 = vrot.slane %v980, 4
        %v982 = vmax.f32 %v980, %v981
        %v983 = vrot.slane %v982, 2
        %v984 = vmax.f32 %v982, %v983
        %v985 = vrot.slane %v984, 1
        %v986 = vmax.f32 %v984, %v985
        %v987 = vmax.f32 %v953, %v961
        %v988 = vrot.slane %v987, 4
        %v989 = vmax.f32 %v987, %v988
        %v990 = vrot.slane %v989, 2
        %v991 = vmax.f32 %v989, %v990
        %v992 = vrot.slane %v991, 1
        %v993 = vmax.f32 %v991, %v992
        %v994 = vmax.f32 %v954, %v962
        %v995 = vrot.slane %v994, 4
        %v996 = vmax.f32 %v994, %v995
        %v997 = vrot.slane %v996, 2
        %v998 = vmax.f32 %v996, %v997
        %v999 = vrot.slane %v998, 1
        %v1000 = vmax.f32 %v998, %v999
        %v1001 = vmax.f32 %v955, %v963
        %v1002 = vrot.slane %v1001, 4
        %v1003 = vmax.f32 %v1001, %v1002
        %v1004 = vrot.slane %v1003, 2
        %v1005 = vmax.f32 %v1003, %v1004
        %v1006 = vrot.slane %v1005, 1
        %v1007 = vmax.f32 %v1005, %v1006
        %v1008 = vmax.f32 %v956, %v964
        %v1009 = vrot.slane %v1008, 4
        %v1010 = vmax.f32 %v1008, %v1009
        %v1011 = vrot.slane %v1010, 2
        %v1012 = vmax.f32 %v1010, %v1011
        %v1013 = vrot.slane %v1012, 1
        %v1014 = vmax.f32 %v1012, %v1013
        %v1015 = vmax.f32 %v957, %v965
        %v1016 = vrot.slane %v1015, 4
        %v1017 = vmax.f32 %v1015, %v1016
        %v1018 = vrot.slane %v1017, 2
        %v1019 = vmax.f32 %v1017, %v1018
        %v1020 = vrot.slane %v1019, 1
        %v1021 = vmax.f32 %v1019, %v1020
        %p1022 = scmp.eq.s32.totalorder %s23, 0
        // Predicated region
        $region53: #{pointnet_cls_forward.2} parent=39 // pred_check
          %p1023 = pneg %p1022
        $region54: #{pointnet_cls_forward.2} parent=39 // pred_check_branch
          %1025 = sbr.rel (%p1023) target = $region56
        $region55: #{pointnet_cls_forward.2} parent=39 // pred_region
          %v1034 = vrot.slane %v979, 7
          %v1035 = vrot.slane %v986, 6
          %v1036 = vrot.slane %v993, 5
          %v1037 = vrot.slane %v1000, 4
          %v1038 = vrot.slane %v1007, 3
          %v1039 = vrot.slane %v1014, 2
          %v1040 = vrot.slane %v1021, 1
          %vm1041 = vcmask 1040384
          %v1042 = vsel %vm1041, %v972, %v1034
          %vm1043 = vcmask 1042434
          %v1044 = vsel %vm1043, %v1035, %v1036
          %vm1045 = vcmask 1041408
          %v1046 = vsel %vm1045, %v1042, %v1044
          %vm1047 = vcmask 1044484
          %v1048 = vsel %vm1047, %v1037, %v1038
          %vm1049 = vcmask 1046534
          %v1050 = vsel %vm1049, %v1039, %v1040
          %vm1051 = vcmask 1045508
          %v1052 = vsel %vm1051, %v1048, %v1050
          %vm1053 = vcmask 1043456
          %v1054 = vsel %vm1053, %v1046, %v1052
          %1056 = vst [vmem:[%s300] sm:$0xff] %v1054
        $region56: #{pointnet_cls_forward.2} parent=39 // pred_fallthru
          _
        %p1057 = scmp.gt.s32.totalorder %s23, 0
        // Predicated region
        $region57: #{pointnet_cls_forward.2} parent=39 // pred_check
          %p1058 = pneg %p1057
        $region58: #{pointnet_cls_forward.2} parent=39 // pred_check_branch
          %1060 = sbr.rel (%p1058) target = $region60
        $region59: #{pointnet_cls_forward.2} parent=39 // pred_region
          %v1061 = vld [vmem:[%s300] sm:$0xff]
          %v1070 = vrot.slane %v979, 7
          %v1071 = vrot.slane %v986, 6
          %v1072 = vrot.slane %v993, 5
          %v1073 = vrot.slane %v1000, 4
          %v1074 = vrot.slane %v1007, 3
          %v1075 = vrot.slane %v1014, 2
          %v1076 = vrot.slane %v1021, 1
          %vm1077 = vcmask 1040384
          %v1078 = vsel %vm1077, %v972, %v1070
          %vm1079 = vcmask 1042434
          %v1080 = vsel %vm1079, %v1071, %v1072
          %vm1081 = vcmask 1041408
          %v1082 = vsel %vm1081, %v1078, %v1080
          %vm1083 = vcmask 1044484
          %v1084 = vsel %vm1083, %v1073, %v1074
          %vm1085 = vcmask 1046534
          %v1086 = vsel %vm1085, %v1075, %v1076
          %vm1087 = vcmask 1045508
          %v1088 = vsel %vm1087, %v1084, %v1086
          %vm1089 = vcmask 1043456
          %v1090 = vsel %vm1089, %v1082, %v1088
          %v1092 = vmax.f32 %v1061, %v1090
          %1093 = vst [vmem:[%s300] sm:$0xff] %v1092
        $region60: #{pointnet_cls_forward.2} parent=39 // pred_fallthru
          _
        %p1094 = scmp.lt.s32.totalorder %s22, 1
        %s1095 = scalar_select %p1094, %s22, 1
        %s1096 = smul.addr %s1095, 8
        %s1097 = scalar_lea.vmem %s5, %s1096
        // Predicated region
        $region61: #{pointnet_cls_forward.2} parent=39 // pred_check
          %p1098 = pneg %p160
        $region62: #{pointnet_cls_forward.2} parent=39 // pred_check_branch
          %1100 = sbr.rel (%p1098) target = $region64
        $region63: #{pointnet_cls_forward.2} parent=39 // pred_region
          _
        $region64: #{pointnet_cls_forward.2} parent=39 // pred_fallthru
          _
      $region40: #{pointnet_cls_forward.2} parent=5 // pred_fallthru
        _
      %p1101 = scmp.le.s32.totalorder 2, %s13
      // Predicated region
      $region65: #{pointnet_cls_forward.2} parent=5 // pred_check
        %p1102 = pneg %p1101
      $region66: #{pointnet_cls_forward.2} parent=5 // pred_check_branch
        %1104 = sbr.rel (%p1102) target = $region68
      $region67: #{pointnet_cls_forward.2} parent=5 // pred_region
        %s1105 = ssub.s32 %s13, 2
        // Predicated region
        $region69: #{pointnet_cls_forward.2} parent=67 // pred_check
          %p1106 = pneg %p166
        $region70: #{pointnet_cls_forward.2} parent=67 // pred_check_branch
          %1108 = sbr.rel (%p1106) target = $region72
        $region71: #{pointnet_cls_forward.2} parent=67 // pred_region
          %p1109 = scmp.lt.s32.totalorder %s24, 1
          %s1110 = scalar_select %p1109, %s24, 1
          %s1111 = smul.addr %s1110, 8
          %s1112 = scalar_lea.vmem %s5, %s1111
        $region72: #{pointnet_cls_forward.2} parent=67 // pred_fallthru
          _
      $region68: #{pointnet_cls_forward.2} parent=5 // pred_fallthru
        _
    $region6: #{pointnet_cls_forward.2} parent=1 // loop_footer
      %s17 = sadd.s32 1, %s13
    $region7: #{pointnet_cls_forward.2} parent=1 // loop_footer_branch
      %12 = sbr.rel target = $region3
    $region8: #{pointnet_cls_forward.2} parent=1 // loop_exit
      _
    %1113 = vsyncpa [#allocation3], 1
    %s1114 = scalar_lea.sflag [#allocation3], 1
    %1115 = vsyncpa %s1114, 1
    %1116 = vsyncpa [#allocation5], 1

// kernel: pointnet_cls_forward.3
$region0: #{pointnet_cls_forward.3}
  #allocation0 [shape = 'u32[]', space=smem, size = 0x4, offset = 0x4, fixed_abs, tag = 'smem constant byte address 0x4 - core index']
  #allocation1 [shape = 'u32[72,128]{1,0:T(1,128)}', space=vmem, size = 0x9000, scoped, tag = 'internal scratch']
  %s0 = inlined_call_operand.vmem [shape: f32[2,1024], index: 0, kind: input, shape index: {}]
  %s1 = inlined_call_operand.hbm [shape: bf16[1024,512], index: 1, kind: input, shape index: {}]
  %s2 = inlined_call_operand.vmem [shape: f32[1,512], index: 2, kind: input, shape index: {}]
  %s3 = inlined_call_operand.hbm [shape: bf16[512,256], index: 3, kind: input, shape index: {}]
  %s4 = inlined_call_operand.vmem [shape: f32[1,256], index: 4, kind: input, shape index: {}]
  %s5 = inlined_call_operand.vmem [shape: bf16[256,8], index: 5, kind: input, shape index: {}]
  %s6 = inlined_call_operand.vmem [shape: f32[1,8], index: 6, kind: input, shape index: {}]
  %s7 = inlined_call_operand.hbm [shape: f32[2,8], index: 7, kind: output, shape index: {}]
  %s8 = sld [smem:[#allocation0]]
  $region46: #{pointnet_cls_forward.3} parent=0
    _
  %s10 = ssub.s32 1, %s8
  %s11 = scalar_select 0, %s10, %s8
  $region1: #{pointnet_cls_forward.3} parent=0
    #allocation2 [shape = 'u8[1048576]{0}', space=vmem, size = 0x100000, scoped, tag = 'input window, operand 1, single buffered']
    #allocation3 [shape = 's32[1]{0}', space=sflag, size = 0x4, scoped, tag = 'scoped memory for pointnet_cls_forward.3']
    #allocation4 [shape = 's32[1]{0}', space=sflag, size = 0x4, scoped, tag = 'scoped memory for pointnet_cls_forward.3']
    #allocation5 [shape = 'u8[262144]{0}', space=vmem, size = 0x40000, scoped, tag = 'input window, operand 3, single buffered']
    #allocation6 [shape = 's32[1]{0}', space=sflag, size = 0x4, scoped, tag = 'scoped memory for pointnet_cls_forward.3']
    #allocation7 [shape = 'u8[1024]{0}', space=vmem, size = 0x400, scoped, tag = 'output window, operand 0, single buffered']
    %12 = vsyncpa [#allocation3], 0
    %13 = vsyncpa [#allocation6], 0
    %14 = vsyncpa [#allocation4], 0
    // Predicated region
    $region2: #{pointnet_cls_forward.3} parent=1 // pred_check
      _
    $region3: #{pointnet_cls_forward.3} parent=1 // pred_check_branch
      %16 = sbr.rel (0) target = $region5
    $region4: #{pointnet_cls_forward.3} parent=1 // pred_region
      _
    $region5: #{pointnet_cls_forward.3} parent=1 // pred_fallthru
      _
    // Predicated region
    $region6: #{pointnet_cls_forward.3} parent=1 // pred_check
      _
    $region7: #{pointnet_cls_forward.3} parent=1 // pred_check_branch
      %18 = sbr.rel (0) target = $region9
    $region8: #{pointnet_cls_forward.3} parent=1 // pred_region
      %20 = vsyncadd [#allocation3], 0
      %s21 = sshll.u32 %s1, 4
      %s22 = int_to_ptr.hbm [resolvable:$true] %s21
      %s23 = sshll.u32 [#allocation2], 4
      %s24 = int_to_ptr.vmem [resolvable:$true] %s23
      %29 = dma.hbm_to_vmem [thread:$0]  %s22, 32768, %s24, [#allocation3], 256, 256, 16
    $region9: #{pointnet_cls_forward.3} parent=1 // pred_fallthru
      _
    // Predicated region
    $region10: #{pointnet_cls_forward.3} parent=1 // pred_check
      _
    $region11: #{pointnet_cls_forward.3} parent=1 // pred_check_branch
      %31 = sbr.rel (0) target = $region13
    $region12: #{pointnet_cls_forward.3} parent=1 // pred_region
      _
    $region13: #{pointnet_cls_forward.3} parent=1 // pred_fallthru
      _
    // Predicated region
    $region14: #{pointnet_cls_forward.3} parent=1 // pred_check
      _
    $region15: #{pointnet_cls_forward.3} parent=1 // pred_check_branch
      %33 = sbr.rel (0) target = $region17
    $region16: #{pointnet_cls_forward.3} parent=1 // pred_region
      %35 = vsyncadd [#allocation6], 0
      %s36 = sshll.u32 %s3, 4
      %s37 = int_to_ptr.hbm [resolvable:$true] %s36
      %s38 = sshll.u32 [#allocation5], 4
      %s39 = int_to_ptr.vmem [resolvable:$true] %s38
      %44 = dma.hbm_to_vmem [thread:$0]  %s37, 8192, %s39, [#allocation6], 128, 128, 8
    $region17: #{pointnet_cls_forward.3} parent=1 // pred_fallthru
      _
    // Predicated region
    $region18: #{pointnet_cls_forward.3} parent=1 // pred_check
      _
    $region19: #{pointnet_cls_forward.3} parent=1 // pred_check_branch
      %46 = sbr.rel (0) target = $region21
    $region20: #{pointnet_cls_forward.3} parent=1 // pred_region
      _
    $region21: #{pointnet_cls_forward.3} parent=1 // pred_fallthru
      _
    // Predicated region
    $region22: #{pointnet_cls_forward.3} parent=1 // pred_check
      _
    $region23: #{pointnet_cls_forward.3} parent=1 // pred_check_branch
      %48 = sbr.rel (0) target = $region25
    $region24: #{pointnet_cls_forward.3} parent=1 // pred_region
      _
    $region25: #{pointnet_cls_forward.3} parent=1 // pred_fallthru
      _
    // Predicated region
    $region26: #{pointnet_cls_forward.3} parent=1 // pred_check
      _
    $region27: #{pointnet_cls_forward.3} parent=1 // pred_check_branch
      %50 = sbr.rel (0) target = $region29
    $region28: #{pointnet_cls_forward.3} parent=1 // pred_region
      _
    $region29: #{pointnet_cls_forward.3} parent=1 // pred_fallthru
      _
    // Predicated region
    $region30: #{pointnet_cls_forward.3} parent=1 // pred_check
      _
    $region31: #{pointnet_cls_forward.3} parent=1 // pred_check_branch
      %52 = sbr.rel (0) target = $region33
    $region32: #{pointnet_cls_forward.3} parent=1 // pred_region
      %54 = dma.done [#allocation3], 32768
    $region33: #{pointnet_cls_forward.3} parent=1 // pred_fallthru
      _
    // Predicated region
    $region34: #{pointnet_cls_forward.3} parent=1 // pred_check
      _
    $region35: #{pointnet_cls_forward.3} parent=1 // pred_check_branch
      %56 = sbr.rel (0) target = $region37
    $region36: #{pointnet_cls_forward.3} parent=1 // pred_region
      %58 = dma.done [#allocation6], 8192
    $region37: #{pointnet_cls_forward.3} parent=1 // pred_fallthru
      _
    %v59 = vld [vmem:[%s0] sm:$0xff]
    %v60 = vld [vmem:[%s0 + $0x8] sm:$0xff]
    %63 = vst [vmem:[#allocation1] ss:$4 sm:$0xff] %v59
    %s64 = scalar_lea.vmem [#allocation1], 32
    %65 = vst [vmem:[%s64] ss:$4 sm:$0xff] %v60
    %v66 = vld.sshfl [vmem:[#allocation1] sm:$0xff pattern:$0x73625140]
    %v67 = vld.sshfl [vmem:[#allocation1 + $0x8] sm:$0xff pattern:$0x73625140]
    %v68 = vld.sshfl [vmem:[#allocation1 + $0x10] sm:$0xff pattern:$0x73625140]
    %v69 = vld.sshfl [vmem:[#allocation1 + $0x18] sm:$0xff pattern:$0x73625140]
    %v70 = vld.sshfl [vmem:[#allocation1 + $0x20] sm:$0xff pattern:$0x73625140]
    %v71 = vld.sshfl [vmem:[#allocation1 + $0x28] sm:$0xff pattern:$0x73625140]
    %v72 = vld.sshfl [vmem:[#allocation1 + $0x30] sm:$0xff pattern:$0x73625140]
    %v73 = vld.sshfl [vmem:[#allocation1 + $0x38] sm:$0xff pattern:$0x73625140]
    %v82 = vpack.c.bf16 %v66, %v66
    %v83 = vpack.c.bf16 %v67, %v67
    %v84 = vpack.c.bf16 %v68, %v68
    %v85 = vpack.c.bf16 %v69, %v69
    %v86 = vpack.c.bf16 %v70, %v70
    %v87 = vpack.c.bf16 %v71, %v71
    %v88 = vpack.c.bf16 %v72, %v72
    %v89 = vpack.c.bf16 %v73, %v73
    %v90 = vld [vmem:[#allocation2] sm:$0xff]
    %v91 = vld [vmem:[#allocation2 + $0x8] sm:$0xff]
    %v92 = vld [vmem:[#allocation2 + $0x10] sm:$0xff]
    %v93 = vld [vmem:[#allocation2 + $0x18] sm:$0xff]
    %v94 = vld [vmem:[#allocation2 + $0x20] sm:$0xff]
    %v95 = vld [vmem:[#allocation2 + $0x28] sm:$0xff]
    %v96 = vld [vmem:[#allocation2 + $0x30] sm:$0xff]
    %v97 = vld [vmem:[#allocation2 + $0x38] sm:$0xff]
    %v98 = vld [vmem:[#allocation2 + $0x40] sm:$0xff]
    %v99 = vld [vmem:[#allocation2 + $0x48] sm:$0xff]
    %v100 = vld [vmem:[#allocation2 + $0x50] sm:$0xff]
    %v101 = vld [vmem:[#allocation2 + $0x58] sm:$0xff]
    %v102 = vld [vmem:[#allocation2 + $0x60] sm:$0xff]
    %v103 = vld [vmem:[#allocation2 + $0x68] sm:$0xff]
    %v104 = vld [vmem:[#allocation2 + $0x70] sm:$0xff]
    %v105 = vld [vmem:[#allocation2 + $0x78] sm:$0xff]
    %v106 = vld [vmem:[#allocation2 + $0x80] sm:$0xff]
    %v107 = vld [vmem:[#allocation2 + $0x88] sm:$0xff]
    %v108 = vld [vmem:[#allocation2 + $0x90] sm:$0xff]
    %v109 = vld [vmem:[#allocation2 + $0x98] sm:$0xff]
    %v110 = vld [vmem:[#allocation2 + $0xa0] sm:$0xff]
    %v111 = vld [vmem:[#allocation2 + $0xa8] sm:$0xff]
    %v112 = vld [vmem:[#allocation2 + $0xb0] sm:$0xff]
    %v113 = vld [vmem:[#allocation2 + $0xb8] sm:$0xff]
    %v114 = vld [vmem:[#allocation2 + $0xc0] sm:$0xff]
    %v115 = vld [vmem:[#allocation2 + $0xc8] sm:$0xff]
    %v116 = vld [vmem:[#allocation2 + $0xd0] sm:$0xff]
    %v117 = vld [vmem:[#allocation2 + $0xd8] sm:$0xff]
    %v118 = vld [vmem:[#allocation2 + $0xe0] sm:$0xff]
    %v119 = vld [vmem:[#allocation2 + $0xe8] sm:$0xff]
    %v120 = vld [vmem:[#allocation2 + $0xf0] sm:$0xff]
    %v121 = vld [vmem:[#allocation2 + $0xf8] sm:$0xff]
    %v122 = vld [vmem:[#allocation2 + $0x100] sm:$0xff]
    %v123 = vld [vmem:[#allocation2 + $0x108] sm:$0xff]
    %v124 = vld [vmem:[#allocation2 + $0x110] sm:$0xff]
    %v125 = vld [vmem:[#allocation2 + $0x118] sm:$0xff]
    %v126 = vld [vmem:[#allocation2 + $0x120] sm:$0xff]
    %v127 = vld [vmem:[#allocation2 + $0x128] sm:$0xff]
    %v128 = vld [vmem:[#allocation2 + $0x130] sm:$0xff]
    %v129 = vld [vmem:[#allocation2 + $0x138] sm:$0xff]
    %v130 = vld [vmem:[#allocation2 + $0x140] sm:$0xff]
    %v131 = vld [vmem:[#allocation2 + $0x148] sm:$0xff]
    %v132 = vld [vmem:[#allocation2 + $0x150] sm:$0xff]
    %v133 = vld [vmem:[#allocation2 + $0x158] sm:$0xff]
    %v134 = vld [vmem:[#allocation2 + $0x160] sm:$0xff]
    %v135 = vld [vmem:[#allocation2 + $0x168] sm:$0xff]
    %v136 = vld [vmem:[#allocation2 + $0x170] sm:$0xff]
    %v137 = vld [vmem:[#allocation2 + $0x178] sm:$0xff]
    %v138 = vld [vmem:[#allocation2 + $0x180] sm:$0xff]
    %v139 = vld [vmem:[#allocation2 + $0x188] sm:$0xff]
    %v140 = vld [vmem:[#allocation2 + $0x190] sm:$0xff]
    %v141 = vld [vmem:[#allocation2 + $0x198] sm:$0xff]
    %v142 = vld [vmem:[#allocation2 + $0x1a0] sm:$0xff]
    %v143 = vld [vmem:[#allocation2 + $0x1a8] sm:$0xff]
    %v144 = vld [vmem:[#allocation2 + $0x1b0] sm:$0xff]
    %v145 = vld [vmem:[#allocation2 + $0x1b8] sm:$0xff]
    %v146 = vld [vmem:[#allocation2 + $0x1c0] sm:$0xff]
    %v147 = vld [vmem:[#allocation2 + $0x1c8] sm:$0xff]
    %v148 = vld [vmem:[#allocation2 + $0x1d0] sm:$0xff]
    %v149 = vld [vmem:[#allocation2 + $0x1d8] sm:$0xff]
    %v150 = vld [vmem:[#allocation2 + $0x1e0] sm:$0xff]
    %v151 = vld [vmem:[#allocation2 + $0x1e8] sm:$0xff]
    %v152 = vld [vmem:[#allocation2 + $0x1f0] sm:$0xff]
    %v153 = vld [vmem:[#allocation2 + $0x1f8] sm:$0xff]
    %v154 = vld [vmem:[#allocation2 + $0x200] sm:$0xff]
    %v155 = vld [vmem:[#allocation2 + $0x208] sm:$0xff]
    %v156 = vld [vmem:[#allocation2 + $0x210] sm:$0xff]
    %v157 = vld [vmem:[#allocation2 + $0x218] sm:$0xff]
    %v158 = vld [vmem:[#allocation2 + $0x220] sm:$0xff]
    %v159 = vld [vmem:[#allocation2 + $0x228] sm:$0xff]
    %v160 = vld [vmem:[#allocation2 + $0x230] sm:$0xff]
    %v161 = vld [vmem:[#allocation2 + $0x238] sm:$0xff]
    %v162 = vld [vmem:[#allocation2 + $0x240] sm:$0xff]
    %v163 = vld [vmem:[#allocation2 + $0x248] sm:$0xff]
    %v164 = vld [vmem:[#allocation2 + $0x250] sm:$0xff]
    %v165 = vld [vmem:[#allocation2 + $0x258] sm:$0xff]
    %v166 = vld [vmem:[#allocation2 + $0x260] sm:$0xff]
    %v167 = vld [vmem:[#allocation2 + $0x268] sm:$0xff]
    %v168 = vld [vmem:[#allocation2 + $0x270] sm:$0xff]
    %v169 = vld [vmem:[#allocation2 + $0x278] sm:$0xff]
    %v170 = vld [vmem:[#allocation2 + $0x280] sm:$0xff]
    %v171 = vld [vmem:[#allocation2 + $0x288] sm:$0xff]
    %v172 = vld [vmem:[#allocation2 + $0x290] sm:$0xff]
    %v173 = vld [vmem:[#allocation2 + $0x298] sm:$0xff]
    %v174 = vld [vmem:[#allocation2 + $0x2a0] sm:$0xff]
    %v175 = vld [vmem:[#allocation2 + $0x2a8] sm:$0xff]
    %v176 = vld [vmem:[#allocation2 + $0x2b0] sm:$0xff]
    %v177 = vld [vmem:[#allocation2 + $0x2b8] sm:$0xff]
    %v178 = vld [vmem:[#allocation2 + $0x2c0] sm:$0xff]
    %v179 = vld [vmem:[#allocation2 + $0x2c8] sm:$0xff]
    %v180 = vld [vmem:[#allocation2 + $0x2d0] sm:$0xff]
    %v181 = vld [vmem:[#allocation2 + $0x2d8] sm:$0xff]
    %v182 = vld [vmem:[#allocation2 + $0x2e0] sm:$0xff]
    %v183 = vld [vmem:[#allocation2 + $0x2e8] sm:$0xff]
    %v184 = vld [vmem:[#allocation2 + $0x2f0] sm:$0xff]
    %v185 = vld [vmem:[#allocation2 + $0x2f8] sm:$0xff]
    %v186 = vld [vmem:[#allocation2 + $0x300] sm:$0xff]
    %v187 = vld [vmem:[#allocation2 + $0x308] sm:$0xff]
    %v188 = vld [vmem:[#allocation2 + $0x310] sm:$0xff]
    %v189 = vld [vmem:[#allocation2 + $0x318] sm:$0xff]
    %v190 = vld [vmem:[#allocation2 + $0x320] sm:$0xff]
    %v191 = vld [vmem:[#allocation2 + $0x328] sm:$0xff]
    %v192 = vld [vmem:[#allocation2 + $0x330] sm:$0xff]
    %v193 = vld [vmem:[#allocation2 + $0x338] sm:$0xff]
    %v194 = vld [vmem:[#allocation2 + $0x340] sm:$0xff]
    %v195 = vld [vmem:[#allocation2 + $0x348] sm:$0xff]
    %v196 = vld [vmem:[#allocation2 + $0x350] sm:$0xff]
    %v197 = vld [vmem:[#allocation2 + $0x358] sm:$0xff]
    %v198 = vld [vmem:[#allocation2 + $0x360] sm:$0xff]
    %v199 = vld [vmem:[#allocation2 + $0x368] sm:$0xff]
    %v200 = vld [vmem:[#allocation2 + $0x370] sm:$0xff]
    %v201 = vld [vmem:[#allocation2 + $0x378] sm:$0xff]
    %v202 = vld [vmem:[#allocation2 + $0x380] sm:$0xff]
    %v203 = vld [vmem:[#allocation2 + $0x388] sm:$0xff]
    %v204 = vld [vmem:[#allocation2 + $0x390] sm:$0xff]
    %v205 = vld [vmem:[#allocation2 + $0x398] sm:$0xff]
    %v206 = vld [vmem:[#allocation2 + $0x3a0] sm:$0xff]
    %v207 = vld [vmem:[#allocation2 + $0x3a8] sm:$0xff]
    %v208 = vld [vmem:[#allocation2 + $0x3b0] sm:$0xff]
    %v209 = vld [vmem:[#allocation2 + $0x3b8] sm:$0xff]
    %v210 = vld [vmem:[#allocation2 + $0x3c0] sm:$0xff]
    %v211 = vld [vmem:[#allocation2 + $0x3c8] sm:$0xff]
    %v212 = vld [vmem:[#allocation2 + $0x3d0] sm:$0xff]
    %v213 = vld [vmem:[#allocation2 + $0x3d8] sm:$0xff]
    %v214 = vld [vmem:[#allocation2 + $0x3e0] sm:$0xff]
    %v215 = vld [vmem:[#allocation2 + $0x3e8] sm:$0xff]
    %v216 = vld [vmem:[#allocation2 + $0x3f0] sm:$0xff]
    %v217 = vld [vmem:[#allocation2 + $0x3f8] sm:$0xff]
    %v218 = vld [vmem:[#allocation2 + $0x400] sm:$0xff]
    %v219 = vld [vmem:[#allocation2 + $0x408] sm:$0xff]
    %v220 = vld [vmem:[#allocation2 + $0x410] sm:$0xff]
    %v221 = vld [vmem:[#allocation2 + $0x418] sm:$0xff]
    %v222 = vld [vmem:[#allocation2 + $0x420] sm:$0xff]
    %v223 = vld [vmem:[#allocation2 + $0x428] sm:$0xff]
    %v224 = vld [vmem:[#allocation2 + $0x430] sm:$0xff]
    %v225 = vld [vmem:[#allocation2 + $0x438] sm:$0xff]
    %v226 = vld [vmem:[#allocation2 + $0x440] sm:$0xff]
    %v227 = vld [vmem:[#allocation2 + $0x448] sm:$0xff]
    %v228 = vld [vmem:[#allocation2 + $0x450] sm:$0xff]
    %v229 = vld [vmem:[#allocation2 + $0x458] sm:$0xff]
    %v230 = vld [vmem:[#allocation2 + $0x460] sm:$0xff]
    %v231 = vld [vmem:[#allocation2 + $0x468] sm:$0xff]
    %v232 = vld [vmem:[#allocation2 + $0x470] sm:$0xff]
    %v233 = vld [vmem:[#allocation2 + $0x478] sm:$0xff]
    %v234 = vld [vmem:[#allocation2 + $0x480] sm:$0xff]
    %v235 = vld [vmem:[#allocation2 + $0x488] sm:$0xff]
    %v236 = vld [vmem:[#allocation2 + $0x490] sm:$0xff]
    %v237 = vld [vmem:[#allocation2 + $0x498] sm:$0xff]
    %v238 = vld [vmem:[#allocation2 + $0x4a0] sm:$0xff]
    %v239 = vld [vmem:[#allocation2 + $0x4a8] sm:$0xff]
    %v240 = vld [vmem:[#allocation2 + $0x4b0] sm:$0xff]
    %v241 = vld [vmem:[#allocation2 + $0x4b8] sm:$0xff]
    %v242 = vld [vmem:[#allocation2 + $0x4c0] sm:$0xff]
    %v243 = vld [vmem:[#allocation2 + $0x4c8] sm:$0xff]
    %v244 = vld [vmem:[#allocation2 + $0x4d0] sm:$0xff]
    %v245 = vld [vmem:[#allocation2 + $0x4d8] sm:$0xff]
    %v246 = vld [vmem:[#allocation2 + $0x4e0] sm:$0xff]
    %v247 = vld [vmem:[#allocation2 + $0x4e8] sm:$0xff]
    %v248 = vld [vmem:[#allocation2 + $0x4f0] sm:$0xff]
    %v249 = vld [vmem:[#allocation2 + $0x4f8] sm:$0xff]
    %v250 = vld [vmem:[#allocation2 + $0x500] sm:$0xff]
    %v251 = vld [vmem:[#allocation2 + $0x508] sm:$0xff]
    %v252 = vld [vmem:[#allocation2 + $0x510] sm:$0xff]
    %v253 = vld [vmem:[#allocation2 + $0x518] sm:$0xff]
    %v254 = vld [vmem:[#allocation2 + $0x520] sm:$0xff]
    %v255 = vld [vmem:[#allocation2 + $0x528] sm:$0xff]
    %v256 = vld [vmem:[#allocation2 + $0x530] sm:$0xff]
    %v257 = vld [vmem:[#allocation2 + $0x538] sm:$0xff]
    %v258 = vld [vmem:[#allocation2 + $0x540] sm:$0xff]
    %v259 = vld [vmem:[#allocation2 + $0x548] sm:$0xff]
    %v260 = vld [vmem:[#allocation2 + $0x550] sm:$0xff]
    %v261 = vld [vmem:[#allocation2 + $0x558] sm:$0xff]
    %v262 = vld [vmem:[#allocation2 + $0x560] sm:$0xff]
    %v263 = vld [vmem:[#allocation2 + $0x568] sm:$0xff]
    %v264 = vld [vmem:[#allocation2 + $0x570] sm:$0xff]
    %v265 = vld [vmem:[#allocation2 + $0x578] sm:$0xff]
    %v266 = vld [vmem:[#allocation2 + $0x580] sm:$0xff]
    %v267 = vld [vmem:[#allocation2 + $0x588] sm:$0xff]
    %v268 = vld [vmem:[#allocation2 + $0x590] sm:$0xff]
    %v269 = vld [vmem:[#allocation2 + $0x598] sm:$0xff]
    %v270 = vld [vmem:[#allocation2 + $0x5a0] sm:$0xff]
    %v271 = vld [vmem:[#allocation2 + $0x5a8] sm:$0xff]
    %v272 = vld [vmem:[#allocation2 + $0x5b0] sm:$0xff]
    %v273 = vld [vmem:[#allocation2 + $0x5b8] sm:$0xff]
    %v274 = vld [vmem:[#allocation2 + $0x5c0] sm:$0xff]
    %v275 = vld [vmem:[#allocation2 + $0x5c8] sm:$0xff]
    %v276 = vld [vmem:[#allocation2 + $0x5d0] sm:$0xff]
    %v277 = vld [vmem:[#allocation2 + $0x5d8] sm:$0xff]
    %v278 = vld [vmem:[#allocation2 + $0x5e0] sm:$0xff]
    %v279 = vld [vmem:[#allocation2 + $0x5e8] sm:$0xff]
    %v280 = vld [vmem:[#allocation2 + $0x5f0] sm:$0xff]
    %v281 = vld [vmem:[#allocation2 + $0x5f8] sm:$0xff]
    %v282 = vld [vmem:[#allocation2 + $0x600] sm:$0xff]
    %v283 = vld [vmem:[#allocation2 + $0x608] sm:$0xff]
    %v284 = vld [vmem:[#allocation2 + $0x610] sm:$0xff]
    %v285 = vld [vmem:[#allocation2 + $0x618] sm:$0xff]
    %v286 = vld [vmem:[#allocation2 + $0x620] sm:$0xff]
    %v287 = vld [vmem:[#allocation2 + $0x628] sm:$0xff]
    %v288 = vld [vmem:[#allocation2 + $0x630] sm:$0xff]
    %v289 = vld [vmem:[#allocation2 + $0x638] sm:$0xff]
    %v290 = vld [vmem:[#allocation2 + $0x640] sm:$0xff]
    %v291 = vld [vmem:[#allocation2 + $0x648] sm:$0xff]
    %v292 = vld [vmem:[#allocation2 + $0x650] sm:$0xff]
    %v293 = vld [vmem:[#allocation2 + $0x658] sm:$0xff]
    %v294 = vld [vmem:[#allocation2 + $0x660] sm:$0xff]
    %v295 = vld [vmem:[#allocation2 + $0x668] sm:$0xff]
    %v296 = vld [vmem:[#allocation2 + $0x670] sm:$0xff]
    %v297 = vld [vmem:[#allocation2 + $0x678] sm:$0xff]
    %v298 = vld [vmem:[#allocation2 + $0x680] sm:$0xff]
    %v299 = vld [vmem:[#allocation2 + $0x688] sm:$0xff]
    %v300 = vld [vmem:[#allocation2 + $0x690] sm:$0xff]
    %v301 = vld [vmem:[#allocation2 + $0x698] sm:$0xff]
    %v302 = vld [vmem:[#allocation2 + $0x6a0] sm:$0xff]
    %v303 = vld [vmem:[#allocation2 + $0x6a8] sm:$0xff]
    %v304 = vld [vmem:[#allocation2 + $0x6b0] sm:$0xff]
    %v305 = vld [vmem:[#allocation2 + $0x6b8] sm:$0xff]
    %v306 = vld [vmem:[#allocation2 + $0x6c0] sm:$0xff]
    %v307 = vld [vmem:[#allocation2 + $0x6c8] sm:$0xff]
    %v308 = vld [vmem:[#allocation2 + $0x6d0] sm:$0xff]
    %v309 = vld [vmem:[#allocation2 + $0x6d8] sm:$0xff]
    %v310 = vld [vmem:[#allocation2 + $0x6e0] sm:$0xff]
    %v311 = vld [vmem:[#allocation2 + $0x6e8] sm:$0xff]
    %v312 = vld [vmem:[#allocation2 + $0x6f0] sm:$0xff]
    %v313 = vld [vmem:[#allocation2 + $0x6f8] sm:$0xff]
    %v314 = vld [vmem:[#allocation2 + $0x700] sm:$0xff]
    %v315 = vld [vmem:[#allocation2 + $0x708] sm:$0xff]
    %v316 = vld [vmem:[#allocation2 + $0x710] sm:$0xff]
    %v317 = vld [vmem:[#allocation2 + $0x718] sm:$0xff]
    %v318 = vld [vmem:[#allocation2 + $0x720] sm:$0xff]
    %v319 = vld [vmem:[#allocation2 + $0x728] sm:$0xff]
    %v320 = vld [vmem:[#allocation2 + $0x730] sm:$0xff]
    %v321 = vld [vmem:[#allocation2 + $0x738] sm:$0xff]
    %v322 = vld [vmem:[#allocation2 + $0x740] sm:$0xff]
    %v323 = vld [vmem:[#allocation2 + $0x748] sm:$0xff]
    %v324 = vld [vmem:[#allocation2 + $0x750] sm:$0xff]
    %v325 = vld [vmem:[#allocation2 + $0x758] sm:$0xff]
    %v326 = vld [vmem:[#allocation2 + $0x760] sm:$0xff]
    %v327 = vld [vmem:[#allocation2 + $0x768] sm:$0xff]
    %v328 = vld [vmem:[#allocation2 + $0x770] sm:$0xff]
    %v329 = vld [vmem:[#allocation2 + $0x778] sm:$0xff]
    %v330 = vld [vmem:[#allocation2 + $0x780] sm:$0xff]
    %v331 = vld [vmem:[#allocation2 + $0x788] sm:$0xff]
    %v332 = vld [vmem:[#allocation2 + $0x790] sm:$0xff]
    %v333 = vld [vmem:[#allocation2 + $0x798] sm:$0xff]
    %v334 = vld [vmem:[#allocation2 + $0x7a0] sm:$0xff]
    %v335 = vld [vmem:[#allocation2 + $0x7a8] sm:$0xff]
    %v336 = vld [vmem:[#allocation2 + $0x7b0] sm:$0xff]
    %v337 = vld [vmem:[#allocation2 + $0x7b8] sm:$0xff]
    %v338 = vld [vmem:[#allocation2 + $0x7c0] sm:$0xff]
    %v339 = vld [vmem:[#allocation2 + $0x7c8] sm:$0xff]
    %v340 = vld [vmem:[#allocation2 + $0x7d0] sm:$0xff]
    %v341 = vld [vmem:[#allocation2 + $0x7d8] sm:$0xff]
    %v342 = vld [vmem:[#allocation2 + $0x7e0] sm:$0xff]
    %v343 = vld [vmem:[#allocation2 + $0x7e8] sm:$0xff]
    %v344 = vld [vmem:[#allocation2 + $0x7f0] sm:$0xff]
    %v345 = vld [vmem:[#allocation2 + $0x7f8] sm:$0xff]
    %v346 = vld [vmem:[%s2] sm:$0xf]
    %v348 = vperm.slane %v346, 0
    %v349 = vperm.slane %v346, 1
    %v350 = vperm.slane %v346, 2
    %v351 = vperm.slane %v346, 3
    %v612 = vunpack.c.l.b16 %v90
    %v613 = vunpack.c.h.b16 %v90
    %v614 = vunpack.c.l.b16 %v91
    %v615 = vunpack.c.h.b16 %v91
    %v616 = vunpack.c.l.b16 %v92
    %v617 = vunpack.c.h.b16 %v92
    %v618 = vunpack.c.l.b16 %v93
    %v619 = vunpack.c.h.b16 %v93
    %v620 = vunpack.c.l.b16 %v94
    %v621 = vunpack.c.h.b16 %v94
    %v622 = vunpack.c.l.b16 %v95
    %v623 = vunpack.c.h.b16 %v95
    %v624 = vunpack.c.l.b16 %v96
    %v625 = vunpack.c.h.b16 %v96
    %v626 = vunpack.c.l.b16 %v97
    %v627 = vunpack.c.h.b16 %v97
    %v628 = vunpack.c.l.b16 %v98
    %v629 = vunpack.c.h.b16 %v98
    %v630 = vunpack.c.l.b16 %v99
    %v631 = vunpack.c.h.b16 %v99
    %v632 = vunpack.c.l.b16 %v100
    %v633 = vunpack.c.h.b16 %v100
    %v634 = vunpack.c.l.b16 %v101
    %v635 = vunpack.c.h.b16 %v101
    %v636 = vunpack.c.l.b16 %v102
    %v637 = vunpack.c.h.b16 %v102
    %v638 = vunpack.c.l.b16 %v103
    %v639 = vunpack.c.h.b16 %v103
    %v640 = vunpack.c.l.b16 %v104
    %v641 = vunpack.c.h.b16 %v104
    %v642 = vunpack.c.l.b16 %v105
    %v643 = vunpack.c.h.b16 %v105
    %v644 = vunpack.c.l.b16 %v106
    %v645 = vunpack.c.h.b16 %v106
    %v646 = vunpack.c.l.b16 %v107
    %v647 = vunpack.c.h.b16 %v107
    %v648 = vunpack.c.l.b16 %v108
    %v649 = vunpack.c.h.b16 %v108
    %v650 = vunpack.c.l.b16 %v109
    %v651 = vunpack.c.h.b16 %v109
    %v652 = vunpack.c.l.b16 %v110
    %v653 = vunpack.c.h.b16 %v110
    %v654 = vunpack.c.l.b16 %v111
    %v655 = vunpack.c.h.b16 %v111
    %v656 = vunpack.c.l.b16 %v112
    %v657 = vunpack.c.h.b16 %v112
    %v658 = vunpack.c.l.b16 %v113
    %v659 = vunpack.c.h.b16 %v113
    %v660 = vunpack.c.l.b16 %v114
    %v661 = vunpack.c.h.b16 %v114
    %v662 = vunpack.c.l.b16 %v115
    %v663 = vunpack.c.h.b16 %v115
    %v664 = vunpack.c.l.b16 %v116
    %v665 = vunpack.c.h.b16 %v116
    %v666 = vunpack.c.l.b16 %v117
    %v667 = vunpack.c.h.b16 %v117
    %v668 = vunpack.c.l.b16 %v118
    %v669 = vunpack.c.h.b16 %v118
    %v670 = vunpack.c.l.b16 %v119
    %v671 = vunpack.c.h.b16 %v119
    %v672 = vunpack.c.l.b16 %v120
    %v673 = vunpack.c.h.b16 %v120
    %v674 = vunpack.c.l.b16 %v121
    %v675 = vunpack.c.h.b16 %v121
    %v676 = vunpack.c.l.b16 %v122
    %v677 = vunpack.c.h.b16 %v122
    %v678 = vunpack.c.l.b16 %v123
    %v679 = vunpack.c.h.b16 %v123
    %v680 = vunpack.c.l.b16 %v124
    %v681 = vunpack.c.h.b16 %v124
    %v682 = vunpack.c.l.b16 %v125
    %v683 = vunpack.c.h.b16 %v125
    %v684 = vunpack.c.l.b16 %v126
    %v685 = vunpack.c.h.b16 %v126
    %v686 = vunpack.c.l.b16 %v127
    %v687 = vunpack.c.h.b16 %v127
    %v688 = vunpack.c.l.b16 %v128
    %v689 = vunpack.c.h.b16 %v128
    %v690 = vunpack.c.l.b16 %v129
    %v691 = vunpack.c.h.b16 %v129
    %v692 = vunpack.c.l.b16 %v130
    %v693 = vunpack.c.h.b16 %v130
    %v694 = vunpack.c.l.b16 %v131
    %v695 = vunpack.c.h.b16 %v131
    %v696 = vunpack.c.l.b16 %v132
    %v697 = vunpack.c.h.b16 %v132
    %v698 = vunpack.c.l.b16 %v133
    %v699 = vunpack.c.h.b16 %v133
    %v700 = vunpack.c.l.b16 %v134
    %v701 = vunpack.c.h.b16 %v134
    %v702 = vunpack.c.l.b16 %v135
    %v703 = vunpack.c.h.b16 %v135
    %v704 = vunpack.c.l.b16 %v136
    %v705 = vunpack.c.h.b16 %v136
    %v706 = vunpack.c.l.b16 %v137
    %v707 = vunpack.c.h.b16 %v137
    %v708 = vunpack.c.l.b16 %v138
    %v709 = vunpack.c.h.b16 %v138
    %v710 = vunpack.c.l.b16 %v139
    %v711 = vunpack.c.h.b16 %v139
    %v712 = vunpack.c.l.b16 %v140
    %v713 = vunpack.c.h.b16 %v140
    %v714 = vunpack.c.l.b16 %v141
    %v715 = vunpack.c.h.b16 %v141
    %v716 = vunpack.c.l.b16 %v142
    %v717 = vunpack.c.h.b16 %v142
    %v718 = vunpack.c.l.b16 %v143
    %v719 = vunpack.c.h.b16 %v143
    %v720 = vunpack.c.l.b16 %v144
    %v721 = vunpack.c.h.b16 %v144
    %v722 = vunpack.c.l.b16 %v145
    %v723 = vunpack.c.h.b16 %v145
    %v724 = vunpack.c.l.b16 %v146
    %v725 = vunpack.c.h.b16 %v146
    %v726 = vunpack.c.l.b16 %v147
    %v727 = vunpack.c.h.b16 %v147
    %v728 = vunpack.c.l.b16 %v148
    %v729 = vunpack.c.h.b16 %v148
    %v730 = vunpack.c.l.b16 %v149
    %v731 = vunpack.c.h.b16 %v149
    %v732 = vunpack.c.l.b16 %v150
    %v733 = vunpack.c.h.b16 %v150
    %v734 = vunpack.c.l.b16 %v151
    %v735 = vunpack.c.h.b16 %v151
    %v736 = vunpack.c.l.b16 %v152
    %v737 = vunpack.c.h.b16 %v152
    %v738 = vunpack.c.l.b16 %v153
    %v739 = vunpack.c.h.b16 %v153
    %v740 = vunpack.c.l.b16 %v154
    %v741 = vunpack.c.h.b16 %v154
    %v742 = vunpack.c.l.b16 %v155
    %v743 = vunpack.c.h.b16 %v155
    %v744 = vunpack.c.l.b16 %v156
    %v745 = vunpack.c.h.b16 %v156
    %v746 = vunpack.c.l.b16 %v157
    %v747 = vunpack.c.h.b16 %v157
    %v748 = vunpack.c.l.b16 %v158
    %v749 = vunpack.c.h.b16 %v158
    %v750 = vunpack.c.l.b16 %v159
    %v751 = vunpack.c.h.b16 %v159
    %v752 = vunpack.c.l.b16 %v160
    %v753 = vunpack.c.h.b16 %v160
    %v754 = vunpack.c.l.b16 %v161
    %v755 = vunpack.c.h.b16 %v161
    %v756 = vunpack.c.l.b16 %v162
    %v757 = vunpack.c.h.b16 %v162
    %v758 = vunpack.c.l.b16 %v163
    %v759 = vunpack.c.h.b16 %v163
    %v760 = vunpack.c.l.b16 %v164
    %v761 = vunpack.c.h.b16 %v164
    %v762 = vunpack.c.l.b16 %v165
    %v763 = vunpack.c.h.b16 %v165
    %v764 = vunpack.c.l.b16 %v166
    %v765 = vunpack.c.h.b16 %v166
    %v766 = vunpack.c.l.b16 %v167
    %v767 = vunpack.c.h.b16 %v167
    %v768 = vunpack.c.l.b16 %v168
    %v769 = vunpack.c.h.b16 %v168
    %v770 = vunpack.c.l.b16 %v169
    %v771 = vunpack.c.h.b16 %v169
    %v772 = vunpack.c.l.b16 %v170
    %v773 = vunpack.c.h.b16 %v170
    %v774 = vunpack.c.l.b16 %v171
    %v775 = vunpack.c.h.b16 %v171
    %v776 = vunpack.c.l.b16 %v172
    %v777 = vunpack.c.h.b16 %v172
    %v778 = vunpack.c.l.b16 %v173
    %v779 = vunpack.c.h.b16 %v173
    %v780 = vunpack.c.l.b16 %v174
    %v781 = vunpack.c.h.b16 %v174
    %v782 = vunpack.c.l.b16 %v175
    %v783 = vunpack.c.h.b16 %v175
    %v784 = vunpack.c.l.b16 %v176
    %v785 = vunpack.c.h.b16 %v176
    %v786 = vunpack.c.l.b16 %v177
    %v787 = vunpack.c.h.b16 %v177
    %v788 = vunpack.c.l.b16 %v178
    %v789 = vunpack.c.h.b16 %v178
    %v790 = vunpack.c.l.b16 %v179
    %v791 = vunpack.c.h.b16 %v179
    %v792 = vunpack.c.l.b16 %v180
    %v793 = vunpack.c.h.b16 %v180
    %v794 = vunpack.c.l.b16 %v181
    %v795 = vunpack.c.h.b16 %v181
    %v796 = vunpack.c.l.b16 %v182
    %v797 = vunpack.c.h.b16 %v182
    %v798 = vunpack.c.l.b16 %v183
    %v799 = vunpack.c.h.b16 %v183
    %v800 = vunpack.c.l.b16 %v184
    %v801 = vunpack.c.h.b16 %v184
    %v802 = vunpack.c.l.b16 %v185
    %v803 = vunpack.c.h.b16 %v185
    %v804 = vunpack.c.l.b16 %v186
    %v805 = vunpack.c.h.b16 %v186
    %v806 = vunpack.c.l.b16 %v187
    %v807 = vunpack.c.h.b16 %v187
    %v808 = vunpack.c.l.b16 %v188
    %v809 = vunpack.c.h.b16 %v188
    %v810 = vunpack.c.l.b16 %v189
    %v811 = vunpack.c.h.b16 %v189
    %v812 = vunpack.c.l.b16 %v190
    %v813 = vunpack.c.h.b16 %v190
    %v814 = vunpack.c.l.b16 %v191
    %v815 = vunpack.c.h.b16 %v191
    %v816 = vunpack.c.l.b16 %v192
    %v817 = vunpack.c.h.b16 %v192
    %v818 = vunpack.c.l.b16 %v193
    %v819 = vunpack.c.h.b16 %v193
    %v820 = vunpack.c.l.b16 %v194
    %v821 = vunpack.c.h.b16 %v194
    %v822 = vunpack.c.l.b16 %v195
    %v823 = vunpack.c.h.b16 %v195
    %v824 = vunpack.c.l.b16 %v196
    %v825 = vunpack.c.h.b16 %v196
    %v826 = vunpack.c.l.b16 %v197
    %v827 = vunpack.c.h.b16 %v197
    %v828 = vunpack.c.l.b16 %v198
    %v829 = vunpack.c.h.b16 %v198
    %v830 = vunpack.c.l.b16 %v199
    %v831 = vunpack.c.h.b16 %v199
    %v832 = vunpack.c.l.b16 %v200
    %v833 = vunpack.c.h.b16 %v200
    %v834 = vunpack.c.l.b16 %v201
    %v835 = vunpack.c.h.b16 %v201
    %v836 = vunpack.c.l.b16 %v202
    %v837 = vunpack.c.h.b16 %v202
    %v838 = vunpack.c.l.b16 %v203
    %v839 = vunpack.c.h.b16 %v203
    %v840 = vunpack.c.l.b16 %v204
    %v841 = vunpack.c.h.b16 %v204
    %v842 = vunpack.c.l.b16 %v205
    %v843 = vunpack.c.h.b16 %v205
    %v844 = vunpack.c.l.b16 %v206
    %v845 = vunpack.c.h.b16 %v206
    %v846 = vunpack.c.l.b16 %v207
    %v847 = vunpack.c.h.b16 %v207
    %v848 = vunpack.c.l.b16 %v208
    %v849 = vunpack.c.h.b16 %v208
    %v850 = vunpack.c.l.b16 %v209
    %v851 = vunpack.c.h.b16 %v209
    %v852 = vunpack.c.l.b16 %v210
    %v853 = vunpack.c.h.b16 %v210
    %v854 = vunpack.c.l.b16 %v211
    %v855 = vunpack.c.h.b16 %v211
    %v856 = vunpack.c.l.b16 %v212
    %v857 = vunpack.c.h.b16 %v212
    %v858 = vunpack.c.l.b16 %v213
    %v859 = vunpack.c.h.b16 %v213
    %v860 = vunpack.c.l.b16 %v214
    %v861 = vunpack.c.h.b16 %v214
    %v862 = vunpack.c.l.b16 %v215
    %v863 = vunpack.c.h.b16 %v215
    %v864 = vunpack.c.l.b16 %v216
    %v865 = vunpack.c.h.b16 %v216
    %v866 = vunpack.c.l.b16 %v217
    %v867 = vunpack.c.h.b16 %v217
    %v868 = vunpack.c.l.b16 %v218
    %v869 = vunpack.c.h.b16 %v218
    %v870 = vunpack.c.l.b16 %v219
    %v871 = vunpack.c.h.b16 %v219
    %v872 = vunpack.c.l.b16 %v220
    %v873 = vunpack.c.h.b16 %v220
    %v874 = vunpack.c.l.b16 %v221
    %v875 = vunpack.c.h.b16 %v221
    %v876 = vunpack.c.l.b16 %v222
    %v877 = vunpack.c.h.b16 %v222
    %v878 = vunpack.c.l.b16 %v223
    %v879 = vunpack.c.h.b16 %v223
    %v880 = vunpack.c.l.b16 %v224
    %v881 = vunpack.c.h.b16 %v224
    %v882 = vunpack.c.l.b16 %v225
    %v883 = vunpack.c.h.b16 %v225
    %v884 = vunpack.c.l.b16 %v226
    %v885 = vunpack.c.h.b16 %v226
    %v886 = vunpack.c.l.b16 %v227
    %v887 = vunpack.c.h.b16 %v227
    %v888 = vunpack.c.l.b16 %v228
    %v889 = vunpack.c.h.b16 %v228
    %v890 = vunpack.c.l.b16 %v229
    %v891 = vunpack.c.h.b16 %v229
    %v892 = vunpack.c.l.b16 %v230
    %v893 = vunpack.c.h.b16 %v230
    %v894 = vunpack.c.l.b16 %v231
    %v895 = vunpack.c.h.b16 %v231
    %v896 = vunpack.c.l.b16 %v232
    %v897 = vunpack.c.h.b16 %v232
    %v898 = vunpack.c.l.b16 %v233
    %v899 = vunpack.c.h.b16 %v233
    %v900 = vunpack.c.l.b16 %v234
    %v901 = vunpack.c.h.b16 %v234
    %v902 = vunpack.c.l.b16 %v235
    %v903 = vunpack.c.h.b16 %v235
    %v904 = vunpack.c.l.b16 %v236
    %v905 = vunpack.c.h.b16 %v236
    %v906 = vunpack.c.l.b16 %v237
    %v907 = vunpack.c.h.b16 %v237
    %v908 = vunpack.c.l.b16 %v238
    %v909 = vunpack.c.h.b16 %v238
    %v910 = vunpack.c.l.b16 %v239
    %v911 = vunpack.c.h.b16 %v239
    %v912 = vunpack.c.l.b16 %v240
    %v913 = vunpack.c.h.b16 %v240
    %v914 = vunpack.c.l.b16 %v241
    %v915 = vunpack.c.h.b16 %v241
    %v916 = vunpack.c.l.b16 %v242
    %v917 = vunpack.c.h.b16 %v242
    %v918 = vunpack.c.l.b16 %v243
    %v919 = vunpack.c.h.b16 %v243
    %v920 = vunpack.c.l.b16 %v244
    %v921 = vunpack.c.h.b16 %v244
    %v922 = vunpack.c.l.b16 %v245
    %v923 = vunpack.c.h.b16 %v245
    %v924 = vunpack.c.l.b16 %v246
    %v925 = vunpack.c.h.b16 %v246
    %v926 = vunpack.c.l.b16 %v247
    %v927 = vunpack.c.h.b16 %v247
    %v928 = vunpack.c.l.b16 %v248
    %v929 = vunpack.c.h.b16 %v248
    %v930 = vunpack.c.l.b16 %v249
    %v931 = vunpack.c.h.b16 %v249
    %v932 = vunpack.c.l.b16 %v250
    %v933 = vunpack.c.h.b16 %v250
    %v934 = vunpack.c.l.b16 %v251
    %v935 = vunpack.c.h.b16 %v251
    %v936 = vunpack.c.l.b16 %v252
    %v937 = vunpack.c.h.b16 %v252
    %v938 = vunpack.c.l.b16 %v253
    %v939 = vunpack.c.h.b16 %v253
    %v940 = vunpack.c.l.b16 %v254
    %v941 = vunpack.c.h.b16 %v254
    %v942 = vunpack.c.l.b16 %v255
    %v943 = vunpack.c.h.b16 %v255
    %v944 = vunpack.c.l.b16 %v256
    %v945 = vunpack.c.h.b16 %v256
    %v946 = vunpack.c.l.b16 %v257
    %v947 = vunpack.c.h.b16 %v257
    %v948 = vunpack.c.l.b16 %v258
    %v949 = vunpack.c.h.b16 %v258
    %v950 = vunpack.c.l.b16 %v259
    %v951 = vunpack.c.h.b16 %v259
    %v952 = vunpack.c.l.b16 %v260
    %v953 = vunpack.c.h.b16 %v260
    %v954 = vunpack.c.l.b16 %v261
    %v955 = vunpack.c.h.b16 %v261
    %v956 = vunpack.c.l.b16 %v262
    %v957 = vunpack.c.h.b16 %v262
    %v958 = vunpack.c.l.b16 %v263
    %v959 = vunpack.c.h.b16 %v263
    %v960 = vunpack.c.l.b16 %v264
    %v961 = vunpack.c.h.b16 %v264
    %v962 = vunpack.c.l.b16 %v265
    %v963 = vunpack.c.h.b16 %v265
    %v964 = vunpack.c.l.b16 %v266
    %v965 = vunpack.c.h.b16 %v266
    %v966 = vunpack.c.l.b16 %v267
    %v967 = vunpack.c.h.b16 %v267
    %v968 = vunpack.c.l.b16 %v268
    %v969 = vunpack.c.h.b16 %v268
    %v970 = vunpack.c.l.b16 %v269
    %v971 = vunpack.c.h.b16 %v269
    %v972 = vunpack.c.l.b16 %v270
    %v973 = vunpack.c.h.b16 %v270
    %v974 = vunpack.c.l.b16 %v271
    %v975 = vunpack.c.h.b16 %v271
    %v976 = vunpack.c.l.b16 %v272
    %v977 = vunpack.c.h.b16 %v272
    %v978 = vunpack.c.l.b16 %v273
    %v979 = vunpack.c.h.b16 %v273
    %v980 = vunpack.c.l.b16 %v274
    %v981 = vunpack.c.h.b16 %v274
    %v982 = vunpack.c.l.b16 %v275
    %v983 = vunpack.c.h.b16 %v275
    %v984 = vunpack.c.l.b16 %v276
    %v985 = vunpack.c.h.b16 %v276
    %v986 = vunpack.c.l.b16 %v277
    %v987 = vunpack.c.h.b16 %v277
    %v988 = vunpack.c.l.b16 %v278
    %v989 = vunpack.c.h.b16 %v278
    %v990 = vunpack.c.l.b16 %v279
    %v991 = vunpack.c.h.b16 %v279
    %v992 = vunpack.c.l.b16 %v280
    %v993 = vunpack.c.h.b16 %v280
    %v994 = vunpack.c.l.b16 %v281
    %v995 = vunpack.c.h.b16 %v281
    %v996 = vunpack.c.l.b16 %v282
    %v997 = vunpack.c.h.b16 %v282
    %v998 = vunpack.c.l.b16 %v283
    %v999 = vunpack.c.h.b16 %v283
    %v1000 = vunpack.c.l.b16 %v284
    %v1001 = vunpack.c.h.b16 %v284
    %v1002 = vunpack.c.l.b16 %v285
    %v1003 = vunpack.c.h.b16 %v285
    %v1004 = vunpack.c.l.b16 %v286
    %v1005 = vunpack.c.h.b16 %v286
    %v1006 = vunpack.c.l.b16 %v287
    %v1007 = vunpack.c.h.b16 %v287
    %v1008 = vunpack.c.l.b16 %v288
    %v1009 = vunpack.c.h.b16 %v288
    %v1010 = vunpack.c.l.b16 %v289
    %v1011 = vunpack.c.h.b16 %v289
    %v1012 = vunpack.c.l.b16 %v290
    %v1013 = vunpack.c.h.b16 %v290
    %v1014 = vunpack.c.l.b16 %v291
    %v1015 = vunpack.c.h.b16 %v291
    %v1016 = vunpack.c.l.b16 %v292
    %v1017 = vunpack.c.h.b16 %v292
    %v1018 = vunpack.c.l.b16 %v293
    %v1019 = vunpack.c.h.b16 %v293
    %v1020 = vunpack.c.l.b16 %v294
    %v1021 = vunpack.c.h.b16 %v294
    %v1022 = vunpack.c.l.b16 %v295
    %v1023 = vunpack.c.h.b16 %v295
    %v1024 = vunpack.c.l.b16 %v296
    %v1025 = vunpack.c.h.b16 %v296
    %v1026 = vunpack.c.l.b16 %v297
    %v1027 = vunpack.c.h.b16 %v297
    %v1028 = vunpack.c.l.b16 %v298
    %v1029 = vunpack.c.h.b16 %v298
    %v1030 = vunpack.c.l.b16 %v299
    %v1031 = vunpack.c.h.b16 %v299
    %v1032 = vunpack.c.l.b16 %v300
    %v1033 = vunpack.c.h.b16 %v300
    %v1034 = vunpack.c.l.b16 %v301
    %v1035 = vunpack.c.h.b16 %v301
    %v1036 = vunpack.c.l.b16 %v302
    %v1037 = vunpack.c.h.b16 %v302
    %v1038 = vunpack.c.l.b16 %v303
    %v1039 = vunpack.c.h.b16 %v303
    %v1040 = vunpack.c.l.b16 %v304
    %v1041 = vunpack.c.h.b16 %v304
    %v1042 = vunpack.c.l.b16 %v305
    %v1043 = vunpack.c.h.b16 %v305
    %v1044 = vunpack.c.l.b16 %v306
    %v1045 = vunpack.c.h.b16 %v306
    %v1046 = vunpack.c.l.b16 %v307
    %v1047 = vunpack.c.h.b16 %v307
    %v1048 = vunpack.c.l.b16 %v308
    %v1049 = vunpack.c.h.b16 %v308
    %v1050 = vunpack.c.l.b16 %v309
    %v1051 = vunpack.c.h.b16 %v309
    %v1052 = vunpack.c.l.b16 %v310
    %v1053 = vunpack.c.h.b16 %v310
    %v1054 = vunpack.c.l.b16 %v311
    %v1055 = vunpack.c.h.b16 %v311
    %v1056 = vunpack.c.l.b16 %v312
    %v1057 = vunpack.c.h.b16 %v312
    %v1058 = vunpack.c.l.b16 %v313
    %v1059 = vunpack.c.h.b16 %v313
    %v1060 = vunpack.c.l.b16 %v314
    %v1061 = vunpack.c.h.b16 %v314
    %v1062 = vunpack.c.l.b16 %v315
    %v1063 = vunpack.c.h.b16 %v315
    %v1064 = vunpack.c.l.b16 %v316
    %v1065 = vunpack.c.h.b16 %v316
    %v1066 = vunpack.c.l.b16 %v317
    %v1067 = vunpack.c.h.b16 %v317
    %v1068 = vunpack.c.l.b16 %v318
    %v1069 = vunpack.c.h.b16 %v318
    %v1070 = vunpack.c.l.b16 %v319
    %v1071 = vunpack.c.h.b16 %v319
    %v1072 = vunpack.c.l.b16 %v320
    %v1073 = vunpack.c.h.b16 %v320
    %v1074 = vunpack.c.l.b16 %v321
    %v1075 = vunpack.c.h.b16 %v321
    %v1076 = vunpack.c.l.b16 %v322
    %v1077 = vunpack.c.h.b16 %v322
    %v1078 = vunpack.c.l.b16 %v323
    %v1079 = vunpack.c.h.b16 %v323
    %v1080 = vunpack.c.l.b16 %v324
    %v1081 = vunpack.c.h.b16 %v324
    %v1082 = vunpack.c.l.b16 %v325
    %v1083 = vunpack.c.h.b16 %v325
    %v1084 = vunpack.c.l.b16 %v326
    %v1085 = vunpack.c.h.b16 %v326
    %v1086 = vunpack.c.l.b16 %v327
    %v1087 = vunpack.c.h.b16 %v327
    %v1088 = vunpack.c.l.b16 %v328
    %v1089 = vunpack.c.h.b16 %v328
    %v1090 = vunpack.c.l.b16 %v329
    %v1091 = vunpack.c.h.b16 %v329
    %v1092 = vunpack.c.l.b16 %v330
    %v1093 = vunpack.c.h.b16 %v330
    %v1094 = vunpack.c.l.b16 %v331
    %v1095 = vunpack.c.h.b16 %v331
    %v1096 = vunpack.c.l.b16 %v332
    %v1097 = vunpack.c.h.b16 %v332
    %v1098 = vunpack.c.l.b16 %v333
    %v1099 = vunpack.c.h.b16 %v333
    %v1100 = vunpack.c.l.b16 %v334
    %v1101 = vunpack.c.h.b16 %v334
    %v1102 = vunpack.c.l.b16 %v335
    %v1103 = vunpack.c.h.b16 %v335
    %v1104 = vunpack.c.l.b16 %v336
    %v1105 = vunpack.c.h.b16 %v336
    %v1106 = vunpack.c.l.b16 %v337
    %v1107 = vunpack.c.h.b16 %v337
    %v1108 = vunpack.c.l.b16 %v338
    %v1109 = vunpack.c.h.b16 %v338
    %v1110 = vunpack.c.l.b16 %v339
    %v1111 = vunpack.c.h.b16 %v339
    %v1112 = vunpack.c.l.b16 %v340
    %v1113 = vunpack.c.h.b16 %v340
    %v1114 = vunpack.c.l.b16 %v341
    %v1115 = vunpack.c.h.b16 %v341
    %v1116 = vunpack.c.l.b16 %v342
    %v1117 = vunpack.c.h.b16 %v342
    %v1118 = vunpack.c.l.b16 %v343
    %v1119 = vunpack.c.h.b16 %v343
    %v1120 = vunpack.c.l.b16 %v344
    %v1121 = vunpack.c.h.b16 %v344
    %v1122 = vunpack.c.l.b16 %v345
    %v1123 = vunpack.c.h.b16 %v345
    %v1124 = vpack.c.b16 %v616, %v612
    %v1125 = vpack.c.b16 %v617, %v613
    %v1126 = vpack.c.b16 %v618, %v614
    %v1127 = vpack.c.b16 %v619, %v615
    %v1128 = vpack.c.b16 %v624, %v620
    %v1129 = vpack.c.b16 %v625, %v621
    %v1130 = vpack.c.b16 %v626, %v622
    %v1131 = vpack.c.b16 %v627, %v623
    %v1132 = vpack.c.b16 %v632, %v628
    %v1133 = vpack.c.b16 %v633, %v629
    %v1134 = vpack.c.b16 %v634, %v630
    %v1135 = vpack.c.b16 %v635, %v631
    %v1136 = vpack.c.b16 %v640, %v636
    %v1137 = vpack.c.b16 %v641, %v637
    %v1138 = vpack.c.b16 %v642, %v638
    %v1139 = vpack.c.b16 %v643, %v639
    %v1140 = vpack.c.b16 %v648, %v644
    %v1141 = vpack.c.b16 %v649, %v645
    %v1142 = vpack.c.b16 %v650, %v646
    %v1143 = vpack.c.b16 %v651, %v647
    %v1144 = vpack.c.b16 %v656, %v652
    %v1145 = vpack.c.b16 %v657, %v653
    %v1146 = vpack.c.b16 %v658, %v654
    %v1147 = vpack.c.b16 %v659, %v655
    %v1148 = vpack.c.b16 %v664, %v660
    %v1149 = vpack.c.b16 %v665, %v661
    %v1150 = vpack.c.b16 %v666, %v662
    %v1151 = vpack.c.b16 %v667, %v663
    %v1152 = vpack.c.b16 %v672, %v668
    %v1153 = vpack.c.b16 %v673, %v669
    %v1154 = vpack.c.b16 %v674, %v670
    %v1155 = vpack.c.b16 %v675, %v671
    %v1156 = vpack.c.b16 %v680, %v676
    %v1157 = vpack.c.b16 %v681, %v677
    %v1158 = vpack.c.b16 %v682, %v678
    %v1159 = vpack.c.b16 %v683, %v679
    %v1160 = vpack.c.b16 %v688, %v684
    %v1161 = vpack.c.b16 %v689, %v685
    %v1162 = vpack.c.b16 %v690, %v686
    %v1163 = vpack.c.b16 %v691, %v687
    %v1164 = vpack.c.b16 %v696, %v692
    %v1165 = vpack.c.b16 %v697, %v693
    %v1166 = vpack.c.b16 %v698, %v694
    %v1167 = vpack.c.b16 %v699, %v695
    %v1168 = vpack.c.b16 %v704, %v700
    %v1169 = vpack.c.b16 %v705, %v701
    %v1170 = vpack.c.b16 %v706, %v702
    %v1171 = vpack.c.b16 %v707, %v703
    %v1172 = vpack.c.b16 %v712, %v708
    %v1173 = vpack.c.b16 %v713, %v709
    %v1174 = vpack.c.b16 %v714, %v710
    %v1175 = vpack.c.b16 %v715, %v711
    %v1176 = vpack.c.b16 %v720, %v716
    %v1177 = vpack.c.b16 %v721, %v717
    %v1178 = vpack.c.b16 %v722, %v718
    %v1179 = vpack.c.b16 %v723, %v719
    %v1180 = vpack.c.b16 %v728, %v724
    %v1181 = vpack.c.b16 %v729, %v725
    %v1182 = vpack.c.b16 %v730, %v726
    %v1183 = vpack.c.b16 %v731, %v727
    %v1184 = vpack.c.b16 %v736, %v732
    %v1185 = vpack.c.b16 %v737, %v733
    %v1186 = vpack.c.b16 %v738, %v734
    %v1187 = vpack.c.b16 %v739, %v735
    %v1188 = vpack.c.b16 %v744, %v740
    %v1189 = vpack.c.b16 %v745, %v741
    %v1190 = vpack.c.b16 %v746, %v742
    %v1191 = vpack.c.b16 %v747, %v743
    %v1192 = vpack.c.b16 %v752, %v748
    %v1193 = vpack.c.b16 %v753, %v749
    %v1194 = vpack.c.b16 %v754, %v750
    %v1195 = vpack.c.b16 %v755, %v751
    %v1196 = vpack.c.b16 %v760, %v756
    %v1197 = vpack.c.b16 %v761, %v757
    %v1198 = vpack.c.b16 %v762, %v758
    %v1199 = vpack.c.b16 %v763, %v759
    %v1200 = vpack.c.b16 %v768, %v764
    %v1201 = vpack.c.b16 %v769, %v765
    %v1202 = vpack.c.b16 %v770, %v766
    %v1203 = vpack.c.b16 %v771, %v767
    %v1204 = vpack.c.b16 %v776, %v772
    %v1205 = vpack.c.b16 %v777, %v773
    %v1206 = vpack.c.b16 %v778, %v774
    %v1207 = vpack.c.b16 %v779, %v775
    %v1208 = vpack.c.b16 %v784, %v780
    %v1209 = vpack.c.b16 %v785, %v781
    %v1210 = vpack.c.b16 %v786, %v782
    %v1211 = vpack.c.b16 %v787, %v783
    %v1212 = vpack.c.b16 %v792, %v788
    %v1213 = vpack.c.b16 %v793, %v789
    %v1214 = vpack.c.b16 %v794, %v790
    %v1215 = vpack.c.b16 %v795, %v791
    %v1216 = vpack.c.b16 %v800, %v796
    %v1217 = vpack.c.b16 %v801, %v797
    %v1218 = vpack.c.b16 %v802, %v798
    %v1219 = vpack.c.b16 %v803, %v799
    %v1220 = vpack.c.b16 %v808, %v804
    %v1221 = vpack.c.b16 %v809, %v805
    %v1222 = vpack.c.b16 %v810, %v806
    %v1223 = vpack.c.b16 %v811, %v807
    %v1224 = vpack.c.b16 %v816, %v812
    %v1225 = vpack.c.b16 %v817, %v813
    %v1226 = vpack.c.b16 %v818, %v814
    %v1227 = vpack.c.b16 %v819, %v815
    %v1228 = vpack.c.b16 %v824, %v820
    %v1229 = vpack.c.b16 %v825, %v821
    %v1230 = vpack.c.b16 %v826, %v822
    %v1231 = vpack.c.b16 %v827, %v823
    %v1232 = vpack.c.b16 %v832, %v828
    %v1233 = vpack.c.b16 %v833, %v829
    %v1234 = vpack.c.b16 %v834, %v830
    %v1235 = vpack.c.b16 %v835, %v831
    %v1236 = vpack.c.b16 %v840, %v836
    %v1237 = vpack.c.b16 %v841, %v837
    %v1238 = vpack.c.b16 %v842, %v838
    %v1239 = vpack.c.b16 %v843, %v839
    %v1240 = vpack.c.b16 %v848, %v844
    %v1241 = vpack.c.b16 %v849, %v845
    %v1242 = vpack.c.b16 %v850, %v846
    %v1243 = vpack.c.b16 %v851, %v847
    %v1244 = vpack.c.b16 %v856, %v852
    %v1245 = vpack.c.b16 %v857, %v853
    %v1246 = vpack.c.b16 %v858, %v854
    %v1247 = vpack.c.b16 %v859, %v855
    %v1248 = vpack.c.b16 %v864, %v860
    %v1249 = vpack.c.b16 %v865, %v861
    %v1250 = vpack.c.b16 %v866, %v862
    %v1251 = vpack.c.b16 %v867, %v863
    %v1252 = vpack.c.b16 %v872, %v868
    %v1253 = vpack.c.b16 %v873, %v869
    %v1254 = vpack.c.b16 %v874, %v870
    %v1255 = vpack.c.b16 %v875, %v871
    %v1256 = vpack.c.b16 %v880, %v876
    %v1257 = vpack.c.b16 %v881, %v877
    %v1258 = vpack.c.b16 %v882, %v878
    %v1259 = vpack.c.b16 %v883, %v879
    %v1260 = vpack.c.b16 %v888, %v884
    %v1261 = vpack.c.b16 %v889, %v885
    %v1262 = vpack.c.b16 %v890, %v886
    %v1263 = vpack.c.b16 %v891, %v887
    %v1264 = vpack.c.b16 %v896, %v892
    %v1265 = vpack.c.b16 %v897, %v893
    %v1266 = vpack.c.b16 %v898, %v894
    %v1267 = vpack.c.b16 %v899, %v895
    %v1268 = vpack.c.b16 %v904, %v900
    %v1269 = vpack.c.b16 %v905, %v901
    %v1270 = vpack.c.b16 %v906, %v902
    %v1271 = vpack.c.b16 %v907, %v903
    %v1272 = vpack.c.b16 %v912, %v908
    %v1273 = vpack.c.b16 %v913, %v909
    %v1274 = vpack.c.b16 %v914, %v910
    %v1275 = vpack.c.b16 %v915, %v911
    %v1276 = vpack.c.b16 %v920, %v916
    %v1277 = vpack.c.b16 %v921, %v917
    %v1278 = vpack.c.b16 %v922, %v918
    %v1279 = vpack.c.b16 %v923, %v919
    %v1280 = vpack.c.b16 %v928, %v924
    %v1281 = vpack.c.b16 %v929, %v925
    %v1282 = vpack.c.b16 %v930, %v926
    %v1283 = vpack.c.b16 %v931, %v927
    %v1284 = vpack.c.b16 %v936, %v932
    %v1285 = vpack.c.b16 %v937, %v933
    %v1286 = vpack.c.b16 %v938, %v934
    %v1287 = vpack.c.b16 %v939, %v935
    %v1288 = vpack.c.b16 %v944, %v940
    %v1289 = vpack.c.b16 %v945, %v941
    %v1290 = vpack.c.b16 %v946, %v942
    %v1291 = vpack.c.b16 %v947, %v943
    %v1292 = vpack.c.b16 %v952, %v948
    %v1293 = vpack.c.b16 %v953, %v949
    %v1294 = vpack.c.b16 %v954, %v950
    %v1295 = vpack.c.b16 %v955, %v951
    %v1296 = vpack.c.b16 %v960, %v956
    %v1297 = vpack.c.b16 %v961, %v957
    %v1298 = vpack.c.b16 %v962, %v958
    %v1299 = vpack.c.b16 %v963, %v959
    %v1300 = vpack.c.b16 %v968, %v964
    %v1301 = vpack.c.b16 %v969, %v965
    %v1302 = vpack.c.b16 %v970, %v966
    %v1303 = vpack.c.b16 %v971, %v967
    %v1304 = vpack.c.b16 %v976, %v972
    %v1305 = vpack.c.b16 %v977, %v973
    %v1306 = vpack.c.b16 %v978, %v974
    %v1307 = vpack.c.b16 %v979, %v975
    %v1308 = vpack.c.b16 %v984, %v980
    %v1309 = vpack.c.b16 %v985, %v981
    %v1310 = vpack.c.b16 %v986, %v982
    %v1311 = vpack.c.b16 %v987, %v983
    %v1312 = vpack.c.b16 %v992, %v988
    %v1313 = vpack.c.b16 %v993, %v989
    %v1314 = vpack.c.b16 %v994, %v990
    %v1315 = vpack.c.b16 %v995, %v991
    %v1316 = vpack.c.b16 %v1000, %v996
    %v1317 = vpack.c.b16 %v1001, %v997
    %v1318 = vpack.c.b16 %v1002, %v998
    %v1319 = vpack.c.b16 %v1003, %v999
    %v1320 = vpack.c.b16 %v1008, %v1004
    %v1321 = vpack.c.b16 %v1009, %v1005
    %v1322 = vpack.c.b16 %v1010, %v1006
    %v1323 = vpack.c.b16 %v1011, %v1007
    %v1324 = vpack.c.b16 %v1016, %v1012
    %v1325 = vpack.c.b16 %v1017, %v1013
    %v1326 = vpack.c.b16 %v1018, %v1014
    %v1327 = vpack.c.b16 %v1019, %v1015
    %v1328 = vpack.c.b16 %v1024, %v1020
    %v1329 = vpack.c.b16 %v1025, %v1021
    %v1330 = vpack.c.b16 %v1026, %v1022
    %v1331 = vpack.c.b16 %v1027, %v1023
    %v1332 = vpack.c.b16 %v1032, %v1028
    %v1333 = vpack.c.b16 %v1033, %v1029
    %v1334 = vpack.c.b16 %v1034, %v1030
    %v1335 = vpack.c.b16 %v1035, %v1031
    %v1336 = vpack.c.b16 %v1040, %v1036
    %v1337 = vpack.c.b16 %v1041, %v1037
    %v1338 = vpack.c.b16 %v1042, %v1038
    %v1339 = vpack.c.b16 %v1043, %v1039
    %v1340 = vpack.c.b16 %v1048, %v1044
    %v1341 = vpack.c.b16 %v1049, %v1045
    %v1342 = vpack.c.b16 %v1050, %v1046
    %v1343 = vpack.c.b16 %v1051, %v1047
    %v1344 = vpack.c.b16 %v1056, %v1052
    %v1345 = vpack.c.b16 %v1057, %v1053
    %v1346 = vpack.c.b16 %v1058, %v1054
    %v1347 = vpack.c.b16 %v1059, %v1055
    %v1348 = vpack.c.b16 %v1064, %v1060
    %v1349 = vpack.c.b16 %v1065, %v1061
    %v1350 = vpack.c.b16 %v1066, %v1062
    %v1351 = vpack.c.b16 %v1067, %v1063
    %v1352 = vpack.c.b16 %v1072, %v1068
    %v1353 = vpack.c.b16 %v1073, %v1069
    %v1354 = vpack.c.b16 %v1074, %v1070
    %v1355 = vpack.c.b16 %v1075, %v1071
    %v1356 = vpack.c.b16 %v1080, %v1076
    %v1357 = vpack.c.b16 %v1081, %v1077
    %v1358 = vpack.c.b16 %v1082, %v1078
    %v1359 = vpack.c.b16 %v1083, %v1079
    %v1360 = vpack.c.b16 %v1088, %v1084
    %v1361 = vpack.c.b16 %v1089, %v1085
    %v1362 = vpack.c.b16 %v1090, %v1086
    %v1363 = vpack.c.b16 %v1091, %v1087
    %v1364 = vpack.c.b16 %v1096, %v1092
    %v1365 = vpack.c.b16 %v1097, %v1093
    %v1366 = vpack.c.b16 %v1098, %v1094
    %v1367 = vpack.c.b16 %v1099, %v1095
    %v1368 = vpack.c.b16 %v1104, %v1100
    %v1369 = vpack.c.b16 %v1105, %v1101
    %v1370 = vpack.c.b16 %v1106, %v1102
    %v1371 = vpack.c.b16 %v1107, %v1103
    %v1372 = vpack.c.b16 %v1112, %v1108
    %v1373 = vpack.c.b16 %v1113, %v1109
    %v1374 = vpack.c.b16 %v1114, %v1110
    %v1375 = vpack.c.b16 %v1115, %v1111
    %v1376 = vpack.c.b16 %v1120, %v1116
    %v1377 = vpack.c.b16 %v1121, %v1117
    %v1378 = vpack.c.b16 %v1122, %v1118
    %v1379 = vpack.c.b16 %v1123, %v1119
    %1636 = vmatpush.bf16.msra.mxu0 %v1152
    %1637 = vmatpush.bf16.msra.mxu0 %v1148
    %1638 = vmatpush.bf16.msra.mxu0 %v1144
    %1639 = vmatpush.bf16.msra.mxu0 %v1140
    %1640 = vmatpush.bf16.msra.mxu0 %v1136
    %1641 = vmatpush.bf16.msra.mxu0 %v1132
    %1642 = vmatpush.bf16.msra.mxu0 %v1128
    %1643 = vmatpush.bf16.msra.mxu0 %v1124
    %1644 = vmatmul.bf16.gmra.mxu0 %v82
    %v1645 = vpop.f32.mrf.mxu0
    %v1646 = vadd.f32 %v348, %v1645
    %v1647 = vpop.f32.mrf.mxu0
    %1648 = vdwg.mxu0
    %1649 = vmatpush.bf16.msra.mxu0 %v1184
    %1650 = vmatpush.bf16.msra.mxu0 %v1180
    %1651 = vmatpush.bf16.msra.mxu0 %v1176
    %1652 = vmatpush.bf16.msra.mxu0 %v1172
    %1653 = vmatpush.bf16.msra.mxu0 %v1168
    %1654 = vmatpush.bf16.msra.mxu0 %v1164
    %1655 = vmatpush.bf16.msra.mxu0 %v1160
    %1656 = vmatpush.bf16.msra.mxu0 %v1156
    %1657 = vmatmul.bf16.gmra.mxu0 %v83
    %v1658 = vpop.f32.mrf.mxu0
    %v1659 = vadd.f32 %v1646, %v1658
    %v1660 = vpop.f32.mrf.mxu0
    %1661 = vdwg.mxu0
    %1662 = vmatpush.bf16.msra.mxu0 %v1216
    %1663 = vmatpush.bf16.msra.mxu0 %v1212
    %1664 = vmatpush.bf16.msra.mxu0 %v1208
    %1665 = vmatpush.bf16.msra.mxu0 %v1204
    %1666 = vmatpush.bf16.msra.mxu0 %v1200
    %1667 = vmatpush.bf16.msra.mxu0 %v1196
    %1668 = vmatpush.bf16.msra.mxu0 %v1192
    %1669 = vmatpush.bf16.msra.mxu0 %v1188
    %1670 = vmatmul.bf16.gmra.mxu0 %v84
    %v1671 = vpop.f32.mrf.mxu0
    %v1672 = vadd.f32 %v1659, %v1671
    %v1673 = vpop.f32.mrf.mxu0
    %1674 = vdwg.mxu0
    %1675 = vmatpush.bf16.msra.mxu0 %v1248
    %1676 = vmatpush.bf16.msra.mxu0 %v1244
    %1677 = vmatpush.bf16.msra.mxu0 %v1240
    %1678 = vmatpush.bf16.msra.mxu0 %v1236
    %1679 = vmatpush.bf16.msra.mxu0 %v1232
    %1680 = vmatpush.bf16.msra.mxu0 %v1228
    %1681 = vmatpush.bf16.msra.mxu0 %v1224
    %1682 = vmatpush.bf16.msra.mxu0 %v1220
    %1683 = vmatmul.bf16.gmra.mxu0 %v85
    %v1684 = vpop.f32.mrf.mxu0
    %v1685 = vadd.f32 %v1672, %v1684
    %v1686 = vpop.f32.mrf.mxu0
    %1687 = vdwg.mxu0
    %1688 = vmatpush.bf16.msra.mxu0 %v1280
    %1689 = vmatpush.bf16.msra.mxu0 %v1276
    %1690 = vmatpush.bf16.msra.mxu0 %v1272
    %1691 = vmatpush.bf16.msra.mxu0 %v1268
    %1692 = vmatpush.bf16.msra.mxu0 %v1264
    %1693 = vmatpush.bf16.msra.mxu0 %v1260
    %1694 = vmatpush.bf16.msra.mxu0 %v1256
    %1695 = vmatpush.bf16.msra.mxu0 %v1252
    %1696 = vmatmul.bf16.gmra.mxu0 %v86
    %v1697 = vpop.f32.mrf.mxu0
    %v1698 = vadd.f32 %v1685, %v1697
    %v1699 = vpop.f32.mrf.mxu0
    %1700 = vdwg.mxu0
    %1701 = vmatpush.bf16.msra.mxu0 %v1312
    %1702 = vmatpush.bf16.msra.mxu0 %v1308
    %1703 = vmatpush.bf16.msra.mxu0 %v1304
    %1704 = vmatpush.bf16.msra.mxu0 %v1300
    %1705 = vmatpush.bf16.msra.mxu0 %v1296
    %1706 = vmatpush.bf16.msra.mxu0 %v1292
    %1707 = vmatpush.bf16.msra.mxu0 %v1288
    %1708 = vmatpush.bf16.msra.mxu0 %v1284
    %1709 = vmatmul.bf16.gmra.mxu0 %v87
    %v1710 = vpop.f32.mrf.mxu0
    %v1711 = vadd.f32 %v1698, %v1710
    %v1712 = vpop.f32.mrf.mxu0
    %1713 = vdwg.mxu0
    %1714 = vmatpush.bf16.msra.mxu0 %v1344
    %1715 = vmatpush.bf16.msra.mxu0 %v1340
    %1716 = vmatpush.bf16.msra.mxu0 %v1336
    %1717 = vmatpush.bf16.msra.mxu0 %v1332
    %1718 = vmatpush.bf16.msra.mxu0 %v1328
    %1719 = vmatpush.bf16.msra.mxu0 %v1324
    %1720 = vmatpush.bf16.msra.mxu0 %v1320
    %1721 = vmatpush.bf16.msra.mxu0 %v1316
    %1722 = vmatmul.bf16.gmra.mxu0 %v88
    %v1723 = vpop.f32.mrf.mxu0
    %v1724 = vadd.f32 %v1711, %v1723
    %v1725 = vpop.f32.mrf.mxu0
    %1726 = vdwg.mxu0
    %1727 = vmatpush.bf16.msra.mxu0 %v1376
    %1728 = vmatpush.bf16.msra.mxu0 %v1372
    %1729 = vmatpush.bf16.msra.mxu0 %v1368
    %1730 = vmatpush.bf16.msra.mxu0 %v1364
    %1731 = vmatpush.bf16.msra.mxu0 %v1360
    %1732 = vmatpush.bf16.msra.mxu0 %v1356
    %1733 = vmatpush.bf16.msra.mxu0 %v1352
    %1734 = vmatpush.bf16.msra.mxu0 %v1348
    %1735 = vmatmul.bf16.gmra.mxu0 %v89
    %v1736 = vpop.f32.mrf.mxu0
    %v1737 = vadd.f32 %v1724, %v1736
    %v1738 = vpop.f32.mrf.mxu0
    %1739 = vdwg.mxu0
    %1740 = vmatpush.bf16.msra.mxu0 %v1153
    %1741 = vmatpush.bf16.msra.mxu0 %v1149
    %1742 = vmatpush.bf16.msra.mxu0 %v1145
    %1743 = vmatpush.bf16.msra.mxu0 %v1141
    %1744 = vmatpush.bf16.msra.mxu0 %v1137
    %1745 = vmatpush.bf16.msra.mxu0 %v1133
    %1746 = vmatpush.bf16.msra.mxu0 %v1129
    %1747 = vmatpush.bf16.msra.mxu0 %v1125
    %1748 = vmatmul.bf16.gmra.mxu0 %v82
    %v1749 = vpop.f32.mrf.mxu0
    %v1750 = vadd.f32 %v349, %v1749
    %v1751 = vpop.f32.mrf.mxu0
    %1752 = vdwg.mxu0
    %1753 = vmatpush.bf16.msra.mxu0 %v1185
    %1754 = vmatpush.bf16.msra.mxu0 %v1181
    %1755 = vmatpush.bf16.msra.mxu0 %v1177
    %1756 = vmatpush.bf16.msra.mxu0 %v1173
    %1757 = vmatpush.bf16.msra.mxu0 %v1169
    %1758 = vmatpush.bf16.msra.mxu0 %v1165
    %1759 = vmatpush.bf16.msra.mxu0 %v1161
    %1760 = vmatpush.bf16.msra.mxu0 %v1157
    %1761 = vmatmul.bf16.gmra.mxu0 %v83
    %v1762 = vpop.f32.mrf.mxu0
    %v1763 = vadd.f32 %v1750, %v1762
    %v1764 = vpop.f32.mrf.mxu0
    %1765 = vdwg.mxu0
    %1766 = vmatpush.bf16.msra.mxu0 %v1217
    %1767 = vmatpush.bf16.msra.mxu0 %v1213
    %1768 = vmatpush.bf16.msra.mxu0 %v1209
    %1769 = vmatpush.bf16.msra.mxu0 %v1205
    %1770 = vmatpush.bf16.msra.mxu0 %v1201
    %1771 = vmatpush.bf16.msra.mxu0 %v1197
    %1772 = vmatpush.bf16.msra.mxu0 %v1193
    %1773 = vmatpush.bf16.msra.mxu0 %v1189
    %1774 = vmatmul.bf16.gmra.mxu0 %v84
    %v1775 = vpop.f32.mrf.mxu0
    %v1776 = vadd.f32 %v1763, %v1775
    %v1777 = vpop.f32.mrf.mxu0
    %1778 = vdwg.mxu0
    %1779 = vmatpush.bf16.msra.mxu0 %v1249
    %1780 = vmatpush.bf16.msra.mxu0 %v1245
    %1781 = vmatpush.bf16.msra.mxu0 %v1241
    %1782 = vmatpush.bf16.msra.mxu0 %v1237
    %1783 = vmatpush.bf16.msra.mxu0 %v1233
    %1784 = vmatpush.bf16.msra.mxu0 %v1229
    %1785 = vmatpush.bf16.msra.mxu0 %v1225
    %1786 = vmatpush.bf16.msra.mxu0 %v1221
    %1787 = vmatmul.bf16.gmra.mxu0 %v85
    %v1788 = vpop.f32.mrf.mxu0
    %v1789 = vadd.f32 %v1776, %v1788
    %v1790 = vpop.f32.mrf.mxu0
    %1791 = vdwg.mxu0
    %1792 = vmatpush.bf16.msra.mxu0 %v1281
    %1793 = vmatpush.bf16.msra.mxu0 %v1277
    %1794 = vmatpush.bf16.msra.mxu0 %v1273
    %1795 = vmatpush.bf16.msra.mxu0 %v1269
    %1796 = vmatpush.bf16.msra.mxu0 %v1265
    %1797 = vmatpush.bf16.msra.mxu0 %v1261
    %1798 = vmatpush.bf16.msra.mxu0 %v1257
    %1799 = vmatpush.bf16.msra.mxu0 %v1253
    %1800 = vmatmul.bf16.gmra.mxu0 %v86
    %v1801 = vpop.f32.mrf.mxu0
    %v1802 = vadd.f32 %v1789, %v1801
    %v1803 = vpop.f32.mrf.mxu0
    %1804 = vdwg.mxu0
    %1805 = vmatpush.bf16.msra.mxu0 %v1313
    %1806 = vmatpush.bf16.msra.mxu0 %v1309
    %1807 = vmatpush.bf16.msra.mxu0 %v1305
    %1808 = vmatpush.bf16.msra.mxu0 %v1301
    %1809 = vmatpush.bf16.msra.mxu0 %v1297
    %1810 = vmatpush.bf16.msra.mxu0 %v1293
    %1811 = vmatpush.bf16.msra.mxu0 %v1289
    %1812 = vmatpush.bf16.msra.mxu0 %v1285
    %1813 = vmatmul.bf16.gmra.mxu0 %v87
    %v1814 = vpop.f32.mrf.mxu0
    %v1815 = vadd.f32 %v1802, %v1814
    %v1816 = vpop.f32.mrf.mxu0
    %1817 = vdwg.mxu0
    %1818 = vmatpush.bf16.msra.mxu0 %v1345
    %1819 = vmatpush.bf16.msra.mxu0 %v1341
    %1820 = vmatpush.bf16.msra.mxu0 %v1337
    %1821 = vmatpush.bf16.msra.mxu0 %v1333
    %1822 = vmatpush.bf16.msra.mxu0 %v1329
    %1823 = vmatpush.bf16.msra.mxu0 %v1325
    %1824 = vmatpush.bf16.msra.mxu0 %v1321
    %1825 = vmatpush.bf16.msra.mxu0 %v1317
    %1826 = vmatmul.bf16.gmra.mxu0 %v88
    %v1827 = vpop.f32.mrf.mxu0
    %v1828 = vadd.f32 %v1815, %v1827
    %v1829 = vpop.f32.mrf.mxu0
    %1830 = vdwg.mxu0
    %1831 = vmatpush.bf16.msra.mxu0 %v1377
    %1832 = vmatpush.bf16.msra.mxu0 %v1373
    %1833 = vmatpush.bf16.msra.mxu0 %v1369
    %1834 = vmatpush.bf16.msra.mxu0 %v1365
    %1835 = vmatpush.bf16.msra.mxu0 %v1361
    %1836 = vmatpush.bf16.msra.mxu0 %v1357
    %1837 = vmatpush.bf16.msra.mxu0 %v1353
    %1838 = vmatpush.bf16.msra.mxu0 %v1349
    %1839 = vmatmul.bf16.gmra.mxu0 %v89
    %v1840 = vpop.f32.mrf.mxu0
    %v1841 = vadd.f32 %v1828, %v1840
    %v1842 = vpop.f32.mrf.mxu0
    %1843 = vdwg.mxu0
    %1844 = vmatpush.bf16.msra.mxu0 %v1154
    %1845 = vmatpush.bf16.msra.mxu0 %v1150
    %1846 = vmatpush.bf16.msra.mxu0 %v1146
    %1847 = vmatpush.bf16.msra.mxu0 %v1142
    %1848 = vmatpush.bf16.msra.mxu0 %v1138
    %1849 = vmatpush.bf16.msra.mxu0 %v1134
    %1850 = vmatpush.bf16.msra.mxu0 %v1130
    %1851 = vmatpush.bf16.msra.mxu0 %v1126
    %1852 = vmatmul.bf16.gmra.mxu0 %v82
    %v1853 = vpop.f32.mrf.mxu0
    %v1854 = vadd.f32 %v350, %v1853
    %v1855 = vpop.f32.mrf.mxu0
    %1856 = vdwg.mxu0
    %1857 = vmatpush.bf16.msra.mxu0 %v1186
    %1858 = vmatpush.bf16.msra.mxu0 %v1182
    %1859 = vmatpush.bf16.msra.mxu0 %v1178
    %1860 = vmatpush.bf16.msra.mxu0 %v1174
    %1861 = vmatpush.bf16.msra.mxu0 %v1170
    %1862 = vmatpush.bf16.msra.mxu0 %v1166
    %1863 = vmatpush.bf16.msra.mxu0 %v1162
    %1864 = vmatpush.bf16.msra.mxu0 %v1158
    %1865 = vmatmul.bf16.gmra.mxu0 %v83
    %v1866 = vpop.f32.mrf.mxu0
    %v1867 = vadd.f32 %v1854, %v1866
    %v1868 = vpop.f32.mrf.mxu0
    %1869 = vdwg.mxu0
    %1870 = vmatpush.bf16.msra.mxu0 %v1218
    %1871 = vmatpush.bf16.msra.mxu0 %v1214
    %1872 = vmatpush.bf16.msra.mxu0 %v1210
    %1873 = vmatpush.bf16.msra.mxu0 %v1206
    %1874 = vmatpush.bf16.msra.mxu0 %v1202
    %1875 = vmatpush.bf16.msra.mxu0 %v1198
    %1876 = vmatpush.bf16.msra.mxu0 %v1194
    %1877 = vmatpush.bf16.msra.mxu0 %v1190
    %1878 = vmatmul.bf16.gmra.mxu0 %v84
    %v1879 = vpop.f32.mrf.mxu0
    %v1880 = vadd.f32 %v1867, %v1879
    %v1881 = vpop.f32.mrf.mxu0
    %1882 = vdwg.mxu0
    %1883 = vmatpush.bf16.msra.mxu0 %v1250
    %1884 = vmatpush.bf16.msra.mxu0 %v1246
    %1885 = vmatpush.bf16.msra.mxu0 %v1242
    %1886 = vmatpush.bf16.msra.mxu0 %v1238
    %1887 = vmatpush.bf16.msra.mxu0 %v1234
    %1888 = vmatpush.bf16.msra.mxu0 %v1230
    %1889 = vmatpush.bf16.msra.mxu0 %v1226
    %1890 = vmatpush.bf16.msra.mxu0 %v1222
    %1891 = vmatmul.bf16.gmra.mxu0 %v85
    %v1892 = vpop.f32.mrf.mxu0
    %v1893 = vadd.f32 %v1880, %v1892
    %v1894 = vpop.f32.mrf.mxu0
    %1895 = vdwg.mxu0
    %1896 = vmatpush.bf16.msra.mxu0 %v1282
    %1897 = vmatpush.bf16.msra.mxu0 %v1278
    %1898 = vmatpush.bf16.msra.mxu0 %v1274
    %1899 = vmatpush.bf16.msra.mxu0 %v1270
    %1900 = vmatpush.bf16.msra.mxu0 %v1266
    %1901 = vmatpush.bf16.msra.mxu0 %v1262
    %1902 = vmatpush.bf16.msra.mxu0 %v1258
    %1903 = vmatpush.bf16.msra.mxu0 %v1254
    %1904 = vmatmul.bf16.gmra.mxu0 %v86
    %v1905 = vpop.f32.mrf.mxu0
    %v1906 = vadd.f32 %v1893, %v1905
    %v1907 = vpop.f32.mrf.mxu0
    %1908 = vdwg.mxu0
    %1909 = vmatpush.bf16.msra.mxu0 %v1314
    %1910 = vmatpush.bf16.msra.mxu0 %v1310
    %1911 = vmatpush.bf16.msra.mxu0 %v1306
    %1912 = vmatpush.bf16.msra.mxu0 %v1302
    %1913 = vmatpush.bf16.msra.mxu0 %v1298
    %1914 = vmatpush.bf16.msra.mxu0 %v1294
    %1915 = vmatpush.bf16.msra.mxu0 %v1290
    %1916 = vmatpush.bf16.msra.mxu0 %v1286
    %1917 = vmatmul.bf16.gmra.mxu0 %v87
    %v1918 = vpop.f32.mrf.mxu0
    %v1919 = vadd.f32 %v1906, %v1918
    %v1920 = vpop.f32.mrf.mxu0
    %1921 = vdwg.mxu0
    %1922 = vmatpush.bf16.msra.mxu0 %v1346
    %1923 = vmatpush.bf16.msra.mxu0 %v1342
    %1924 = vmatpush.bf16.msra.mxu0 %v1338
    %1925 = vmatpush.bf16.msra.mxu0 %v1334
    %1926 = vmatpush.bf16.msra.mxu0 %v1330
    %1927 = vmatpush.bf16.msra.mxu0 %v1326
    %1928 = vmatpush.bf16.msra.mxu0 %v1322
    %1929 = vmatpush.bf16.msra.mxu0 %v1318
    %1930 = vmatmul.bf16.gmra.mxu0 %v88
    %v1931 = vpop.f32.mrf.mxu0
    %v1932 = vadd.f32 %v1919, %v1931
    %v1933 = vpop.f32.mrf.mxu0
    %1934 = vdwg.mxu0
    %1935 = vmatpush.bf16.msra.mxu0 %v1378
    %1936 = vmatpush.bf16.msra.mxu0 %v1374
    %1937 = vmatpush.bf16.msra.mxu0 %v1370
    %1938 = vmatpush.bf16.msra.mxu0 %v1366
    %1939 = vmatpush.bf16.msra.mxu0 %v1362
    %1940 = vmatpush.bf16.msra.mxu0 %v1358
    %1941 = vmatpush.bf16.msra.mxu0 %v1354
    %1942 = vmatpush.bf16.msra.mxu0 %v1350
    %1943 = vmatmul.bf16.gmra.mxu0 %v89
    %v1944 = vpop.f32.mrf.mxu0
    %v1945 = vadd.f32 %v1932, %v1944
    %v1946 = vpop.f32.mrf.mxu0
    %1947 = vdwg.mxu0
    %1948 = vmatpush.bf16.msra.mxu0 %v1155
    %1949 = vmatpush.bf16.msra.mxu0 %v1151
    %1950 = vmatpush.bf16.msra.mxu0 %v1147
    %1951 = vmatpush.bf16.msra.mxu0 %v1143
    %1952 = vmatpush.bf16.msra.mxu0 %v1139
    %1953 = vmatpush.bf16.msra.mxu0 %v1135
    %1954 = vmatpush.bf16.msra.mxu0 %v1131
    %1955 = vmatpush.bf16.msra.mxu0 %v1127
    %1956 = vmatmul.bf16.gmra.mxu0 %v82
    %v1957 = vpop.f32.mrf.mxu0
    %v1958 = vadd.f32 %v351, %v1957
    %v1959 = vpop.f32.mrf.mxu0
    %1960 = vdwg.mxu0
    %1961 = vmatpush.bf16.msra.mxu0 %v1187
    %1962 = vmatpush.bf16.msra.mxu0 %v1183
    %1963 = vmatpush.bf16.msra.mxu0 %v1179
    %1964 = vmatpush.bf16.msra.mxu0 %v1175
    %1965 = vmatpush.bf16.msra.mxu0 %v1171
    %1966 = vmatpush.bf16.msra.mxu0 %v1167
    %1967 = vmatpush.bf16.msra.mxu0 %v1163
    %1968 = vmatpush.bf16.msra.mxu0 %v1159
    %1969 = vmatmul.bf16.gmra.mxu0 %v83
    %v1970 = vpop.f32.mrf.mxu0
    %v1971 = vadd.f32 %v1958, %v1970
    %v1972 = vpop.f32.mrf.mxu0
    %1973 = vdwg.mxu0
    %1974 = vmatpush.bf16.msra.mxu0 %v1219
    %1975 = vmatpush.bf16.msra.mxu0 %v1215
    %1976 = vmatpush.bf16.msra.mxu0 %v1211
    %1977 = vmatpush.bf16.msra.mxu0 %v1207
    %1978 = vmatpush.bf16.msra.mxu0 %v1203
    %1979 = vmatpush.bf16.msra.mxu0 %v1199
    %1980 = vmatpush.bf16.msra.mxu0 %v1195
    %1981 = vmatpush.bf16.msra.mxu0 %v1191
    %1982 = vmatmul.bf16.gmra.mxu0 %v84
    %v1983 = vpop.f32.mrf.mxu0
    %v1984 = vadd.f32 %v1971, %v1983
    %v1985 = vpop.f32.mrf.mxu0
    %1986 = vdwg.mxu0
    %1987 = vmatpush.bf16.msra.mxu0 %v1251
    %1988 = vmatpush.bf16.msra.mxu0 %v1247
    %1989 = vmatpush.bf16.msra.mxu0 %v1243
    %1990 = vmatpush.bf16.msra.mxu0 %v1239
    %1991 = vmatpush.bf16.msra.mxu0 %v1235
    %1992 = vmatpush.bf16.msra.mxu0 %v1231
    %1993 = vmatpush.bf16.msra.mxu0 %v1227
    %1994 = vmatpush.bf16.msra.mxu0 %v1223
    %1995 = vmatmul.bf16.gmra.mxu0 %v85
    %v1996 = vpop.f32.mrf.mxu0
    %v1997 = vadd.f32 %v1984, %v1996
    %v1998 = vpop.f32.mrf.mxu0
    %1999 = vdwg.mxu0
    %2000 = vmatpush.bf16.msra.mxu0 %v1283
    %2001 = vmatpush.bf16.msra.mxu0 %v1279
    %2002 = vmatpush.bf16.msra.mxu0 %v1275
    %2003 = vmatpush.bf16.msra.mxu0 %v1271
    %2004 = vmatpush.bf16.msra.mxu0 %v1267
    %2005 = vmatpush.bf16.msra.mxu0 %v1263
    %2006 = vmatpush.bf16.msra.mxu0 %v1259
    %2007 = vmatpush.bf16.msra.mxu0 %v1255
    %2008 = vmatmul.bf16.gmra.mxu0 %v86
    %v2009 = vpop.f32.mrf.mxu0
    %v2010 = vadd.f32 %v1997, %v2009
    %v2011 = vpop.f32.mrf.mxu0
    %2012 = vdwg.mxu0
    %2013 = vmatpush.bf16.msra.mxu0 %v1315
    %2014 = vmatpush.bf16.msra.mxu0 %v1311
    %2015 = vmatpush.bf16.msra.mxu0 %v1307
    %2016 = vmatpush.bf16.msra.mxu0 %v1303
    %2017 = vmatpush.bf16.msra.mxu0 %v1299
    %2018 = vmatpush.bf16.msra.mxu0 %v1295
    %2019 = vmatpush.bf16.msra.mxu0 %v1291
    %2020 = vmatpush.bf16.msra.mxu0 %v1287
    %2021 = vmatmul.bf16.gmra.mxu0 %v87
    %v2022 = vpop.f32.mrf.mxu0
    %v2023 = vadd.f32 %v2010, %v2022
    %v2024 = vpop.f32.mrf.mxu0
    %2025 = vdwg.mxu0
    %2026 = vmatpush.bf16.msra.mxu0 %v1347
    %2027 = vmatpush.bf16.msra.mxu0 %v1343
    %2028 = vmatpush.bf16.msra.mxu0 %v1339
    %2029 = vmatpush.bf16.msra.mxu0 %v1335
    %2030 = vmatpush.bf16.msra.mxu0 %v1331
    %2031 = vmatpush.bf16.msra.mxu0 %v1327
    %2032 = vmatpush.bf16.msra.mxu0 %v1323
    %2033 = vmatpush.bf16.msra.mxu0 %v1319
    %2034 = vmatmul.bf16.gmra.mxu0 %v88
    %v2035 = vpop.f32.mrf.mxu0
    %v2036 = vadd.f32 %v2023, %v2035
    %v2037 = vpop.f32.mrf.mxu0
    %2038 = vdwg.mxu0
    %2039 = vmatpush.bf16.msra.mxu0 %v1379
    %2040 = vmatpush.bf16.msra.mxu0 %v1375
    %2041 = vmatpush.bf16.msra.mxu0 %v1371
    %2042 = vmatpush.bf16.msra.mxu0 %v1367
    %2043 = vmatpush.bf16.msra.mxu0 %v1363
    %2044 = vmatpush.bf16.msra.mxu0 %v1359
    %2045 = vmatpush.bf16.msra.mxu0 %v1355
    %2046 = vmatpush.bf16.msra.mxu0 %v1351
    %2047 = vmatmul.bf16.gmra.mxu0 %v89
    %v2048 = vpop.f32.mrf.mxu0
    %v2049 = vadd.f32 %v2036, %v2048
    %v2050 = vpop.f32.mrf.mxu0
    %2051 = vdwg.mxu0
    %v2052 = vmax.f32 %v1737, 0.0
    %v2053 = vmax.f32 %v1841, 0.0
    %v2054 = vmax.f32 %v1945, 0.0
    %v2055 = vmax.f32 %v2049, 0.0
    %v2056 = vpack.c.bf16 %v2052, %v2052
    %v2057 = vpack.c.bf16 %v2053, %v2053
    %v2058 = vpack.c.bf16 %v2054, %v2054
    %v2059 = vpack.c.bf16 %v2055, %v2055
    %v2060 = vld [vmem:[#allocation5] sm:$0xff]
    %v2061 = vld [vmem:[#allocation5 + $0x8] sm:$0xff]
    %v2062 = vld [vmem:[#allocation5 + $0x10] sm:$0xff]
    %v2063 = vld [vmem:[#allocation5 + $0x18] sm:$0xff]
    %v2064 = vld [vmem:[#allocation5 + $0x20] sm:$0xff]
    %v2065 = vld [vmem:[#allocation5 + $0x28] sm:$0xff]
    %v2066 = vld [vmem:[#allocation5 + $0x30] sm:$0xff]
    %v2067 = vld [vmem:[#allocation5 + $0x38] sm:$0xff]
    %v2068 = vld [vmem:[#allocation5 + $0x40] sm:$0xff]
    %v2069 = vld [vmem:[#allocation5 + $0x48] sm:$0xff]
    %v2070 = vld [vmem:[#allocation5 + $0x50] sm:$0xff]
    %v2071 = vld [vmem:[#allocation5 + $0x58] sm:$0xff]
    %v2072 = vld [vmem:[#allocation5 + $0x60] sm:$0xff]
    %v2073 = vld [vmem:[#allocation5 + $0x68] sm:$0xff]
    %v2074 = vld [vmem:[#allocation5 + $0x70] sm:$0xff]
    %v2075 = vld [vmem:[#allocation5 + $0x78] sm:$0xff]
    %v2076 = vld [vmem:[#allocation5 + $0x80] sm:$0xff]
    %v2077 = vld [vmem:[#allocation5 + $0x88] sm:$0xff]
    %v2078 = vld [vmem:[#allocation5 + $0x90] sm:$0xff]
    %v2079 = vld [vmem:[#allocation5 + $0x98] sm:$0xff]
    %v2080 = vld [vmem:[#allocation5 + $0xa0] sm:$0xff]
    %v2081 = vld [vmem:[#allocation5 + $0xa8] sm:$0xff]
    %v2082 = vld [vmem:[#allocation5 + $0xb0] sm:$0xff]
    %v2083 = vld [vmem:[#allocation5 + $0xb8] sm:$0xff]
    %v2084 = vld [vmem:[#allocation5 + $0xc0] sm:$0xff]
    %v2085 = vld [vmem:[#allocation5 + $0xc8] sm:$0xff]
    %v2086 = vld [vmem:[#allocation5 + $0xd0] sm:$0xff]
    %v2087 = vld [vmem:[#allocation5 + $0xd8] sm:$0xff]
    %v2088 = vld [vmem:[#allocation5 + $0xe0] sm:$0xff]
    %v2089 = vld [vmem:[#allocation5 + $0xe8] sm:$0xff]
    %v2090 = vld [vmem:[#allocation5 + $0xf0] sm:$0xff]
    %v2091 = vld [vmem:[#allocation5 + $0xf8] sm:$0xff]
    %v2092 = vld [vmem:[#allocation5 + $0x100] sm:$0xff]
    %v2093 = vld [vmem:[#allocation5 + $0x108] sm:$0xff]
    %v2094 = vld [vmem:[#allocation5 + $0x110] sm:$0xff]
    %v2095 = vld [vmem:[#allocation5 + $0x118] sm:$0xff]
    %v2096 = vld [vmem:[#allocation5 + $0x120] sm:$0xff]
    %v2097 = vld [vmem:[#allocation5 + $0x128] sm:$0xff]
    %v2098 = vld [vmem:[#allocation5 + $0x130] sm:$0xff]
    %v2099 = vld [vmem:[#allocation5 + $0x138] sm:$0xff]
    %v2100 = vld [vmem:[#allocation5 + $0x140] sm:$0xff]
    %v2101 = vld [vmem:[#allocation5 + $0x148] sm:$0xff]
    %v2102 = vld [vmem:[#allocation5 + $0x150] sm:$0xff]
    %v2103 = vld [vmem:[#allocation5 + $0x158] sm:$0xff]
    %v2104 = vld [vmem:[#allocation5 + $0x160] sm:$0xff]
    %v2105 = vld [vmem:[#allocation5 + $0x168] sm:$0xff]
    %v2106 = vld [vmem:[#allocation5 + $0x170] sm:$0xff]
    %v2107 = vld [vmem:[#allocation5 + $0x178] sm:$0xff]
    %v2108 = vld [vmem:[#allocation5 + $0x180] sm:$0xff]
    %v2109 = vld [vmem:[#allocation5 + $0x188] sm:$0xff]
    %v2110 = vld [vmem:[#allocation5 + $0x190] sm:$0xff]
    %v2111 = vld [vmem:[#allocation5 + $0x198] sm:$0xff]
    %v2112 = vld [vmem:[#allocation5 + $0x1a0] sm:$0xff]
    %v2113 = vld [vmem:[#allocation5 + $0x1a8] sm:$0xff]
    %v2114 = vld [vmem:[#allocation5 + $0x1b0] sm:$0xff]
    %v2115 = vld [vmem:[#allocation5 + $0x1b8] sm:$0xff]
    %v2116 = vld [vmem:[#allocation5 + $0x1c0] sm:$0xff]
    %v2117 = vld [vmem:[#allocation5 + $0x1c8] sm:$0xff]
    %v2118 = vld [vmem:[#allocation5 + $0x1d0] sm:$0xff]
    %v2119 = vld [vmem:[#allocation5 + $0x1d8] sm:$0xff]
    %v2120 = vld [vmem:[#allocation5 + $0x1e0] sm:$0xff]
    %v2121 = vld [vmem:[#allocation5 + $0x1e8] sm:$0xff]
    %v2122 = vld [vmem:[#allocation5 + $0x1f0] sm:$0xff]
    %v2123 = vld [vmem:[#allocation5 + $0x1f8] sm:$0xff]
    %v2124 = vld [vmem:[%s4] sm:$0x3]
    %v2126 = vperm.slane %v2124, 0
    %v2127 = vperm.slane %v2124, 1
    %v2194 = vunpack.c.l.b16 %v2060
    %v2195 = vunpack.c.h.b16 %v2060
    %v2196 = vunpack.c.l.b16 %v2061
    %v2197 = vunpack.c.h.b16 %v2061
    %v2198 = vunpack.c.l.b16 %v2062
    %v2199 = vunpack.c.h.b16 %v2062
    %v2200 = vunpack.c.l.b16 %v2063
    %v2201 = vunpack.c.h.b16 %v2063
    %v2202 = vunpack.c.l.b16 %v2064
    %v2203 = vunpack.c.h.b16 %v2064
    %v2204 = vunpack.c.l.b16 %v2065
    %v2205 = vunpack.c.h.b16 %v2065
    %v2206 = vunpack.c.l.b16 %v2066
    %v2207 = vunpack.c.h.b16 %v2066
    %v2208 = vunpack.c.l.b16 %v2067
    %v2209 = vunpack.c.h.b16 %v2067
    %v2210 = vunpack.c.l.b16 %v2068
    %v2211 = vunpack.c.h.b16 %v2068
    %v2212 = vunpack.c.l.b16 %v2069
    %v2213 = vunpack.c.h.b16 %v2069
    %v2214 = vunpack.c.l.b16 %v2070
    %v2215 = vunpack.c.h.b16 %v2070
    %v2216 = vunpack.c.l.b16 %v2071
    %v2217 = vunpack.c.h.b16 %v2071
    %v2218 = vunpack.c.l.b16 %v2072
    %v2219 = vunpack.c.h.b16 %v2072
    %v2220 = vunpack.c.l.b16 %v2073
    %v2221 = vunpack.c.h.b16 %v2073
    %v2222 = vunpack.c.l.b16 %v2074
    %v2223 = vunpack.c.h.b16 %v2074
    %v2224 = vunpack.c.l.b16 %v2075
    %v2225 = vunpack.c.h.b16 %v2075
    %v2226 = vunpack.c.l.b16 %v2076
    %v2227 = vunpack.c.h.b16 %v2076
    %v2228 = vunpack.c.l.b16 %v2077
    %v2229 = vunpack.c.h.b16 %v2077
    %v2230 = vunpack.c.l.b16 %v2078
    %v2231 = vunpack.c.h.b16 %v2078
    %v2232 = vunpack.c.l.b16 %v2079
    %v2233 = vunpack.c.h.b16 %v2079
    %v2234 = vunpack.c.l.b16 %v2080
    %v2235 = vunpack.c.h.b16 %v2080
    %v2236 = vunpack.c.l.b16 %v2081
    %v2237 = vunpack.c.h.b16 %v2081
    %v2238 = vunpack.c.l.b16 %v2082
    %v2239 = vunpack.c.h.b16 %v2082
    %v2240 = vunpack.c.l.b16 %v2083
    %v2241 = vunpack.c.h.b16 %v2083
    %v2242 = vunpack.c.l.b16 %v2084
    %v2243 = vunpack.c.h.b16 %v2084
    %v2244 = vunpack.c.l.b16 %v2085
    %v2245 = vunpack.c.h.b16 %v2085
    %v2246 = vunpack.c.l.b16 %v2086
    %v2247 = vunpack.c.h.b16 %v2086
    %v2248 = vunpack.c.l.b16 %v2087
    %v2249 = vunpack.c.h.b16 %v2087
    %v2250 = vunpack.c.l.b16 %v2088
    %v2251 = vunpack.c.h.b16 %v2088
    %v2252 = vunpack.c.l.b16 %v2089
    %v2253 = vunpack.c.h.b16 %v2089
    %v2254 = vunpack.c.l.b16 %v2090
    %v2255 = vunpack.c.h.b16 %v2090
    %v2256 = vunpack.c.l.b16 %v2091
    %v2257 = vunpack.c.h.b16 %v2091
    %v2258 = vunpack.c.l.b16 %v2092
    %v2259 = vunpack.c.h.b16 %v2092
    %v2260 = vunpack.c.l.b16 %v2093
    %v2261 = vunpack.c.h.b16 %v2093
    %v2262 = vunpack.c.l.b16 %v2094
    %v2263 = vunpack.c.h.b16 %v2094
    %v2264 = vunpack.c.l.b16 %v2095
    %v2265 = vunpack.c.h.b16 %v2095
    %v2266 = vunpack.c.l.b16 %v2096
    %v2267 = vunpack.c.h.b16 %v2096
    %v2268 = vunpack.c.l.b16 %v2097
    %v2269 = vunpack.c.h.b16 %v2097
    %v2270 = vunpack.c.l.b16 %v2098
    %v2271 = vunpack.c.h.b16 %v2098
    %v2272 = vunpack.c.l.b16 %v2099
    %v2273 = vunpack.c.h.b16 %v2099
    %v2274 = vunpack.c.l.b16 %v2100
    %v2275 = vunpack.c.h.b16 %v2100
    %v2276 = vunpack.c.l.b16 %v2101
    %v2277 = vunpack.c.h.b16 %v2101
    %v2278 = vunpack.c.l.b16 %v2102
    %v2279 = vunpack.c.h.b16 %v2102
    %v2280 = vunpack.c.l.b16 %v2103
    %v2281 = vunpack.c.h.b16 %v2103
    %v2282 = vunpack.c.l.b16 %v2104
    %v2283 = vunpack.c.h.b16 %v2104
    %v2284 = vunpack.c.l.b16 %v2105
    %v2285 = vunpack.c.h.b16 %v2105
    %v2286 = vunpack.c.l.b16 %v2106
    %v2287 = vunpack.c.h.b16 %v2106
    %v2288 = vunpack.c.l.b16 %v2107
    %v2289 = vunpack.c.h.b16 %v2107
    %v2290 = vunpack.c.l.b16 %v2108
    %v2291 = vunpack.c.h.b16 %v2108
    %v2292 = vunpack.c.l.b16 %v2109
    %v2293 = vunpack.c.h.b16 %v2109
    %v2294 = vunpack.c.l.b16 %v2110
    %v2295 = vunpack.c.h.b16 %v2110
    %v2296 = vunpack.c.l.b16 %v2111
    %v2297 = vunpack.c.h.b16 %v2111
    %v2298 = vunpack.c.l.b16 %v2112
    %v2299 = vunpack.c.h.b16 %v2112
    %v2300 = vunpack.c.l.b16 %v2113
    %v2301 = vunpack.c.h.b16 %v2113
    %v2302 = vunpack.c.l.b16 %v2114
    %v2303 = vunpack.c.h.b16 %v2114
    %v2304 = vunpack.c.l.b16 %v2115
    %v2305 = vunpack.c.h.b16 %v2115
    %v2306 = vunpack.c.l.b16 %v2116
    %v2307 = vunpack.c.h.b16 %v2116
    %v2308 = vunpack.c.l.b16 %v2117
    %v2309 = vunpack.c.h.b16 %v2117
    %v2310 = vunpack.c.l.b16 %v2118
    %v2311 = vunpack.c.h.b16 %v2118
    %v2312 = vunpack.c.l.b16 %v2119
    %v2313 = vunpack.c.h.b16 %v2119
    %v2314 = vunpack.c.l.b16 %v2120
    %v2315 = vunpack.c.h.b16 %v2120
    %v2316 = vunpack.c.l.b16 %v2121
    %v2317 = vunpack.c.h.b16 %v2121
    %v2318 = vunpack.c.l.b16 %v2122
    %v2319 = vunpack.c.h.b16 %v2122
    %v2320 = vunpack.c.l.b16 %v2123
    %v2321 = vunpack.c.h.b16 %v2123
    %v2322 = vpack.c.b16 %v2196, %v2194
    %v2323 = vpack.c.b16 %v2197, %v2195
    %v2324 = vpack.c.b16 %v2200, %v2198
    %v2325 = vpack.c.b16 %v2201, %v2199
    %v2326 = vpack.c.b16 %v2204, %v2202
    %v2327 = vpack.c.b16 %v2205, %v2203
    %v2328 = vpack.c.b16 %v2208, %v2206
    %v2329 = vpack.c.b16 %v2209, %v2207
    %v2330 = vpack.c.b16 %v2212, %v2210
    %v2331 = vpack.c.b16 %v2213, %v2211
    %v2332 = vpack.c.b16 %v2216, %v2214
    %v2333 = vpack.c.b16 %v2217, %v2215
    %v2334 = vpack.c.b16 %v2220, %v2218
    %v2335 = vpack.c.b16 %v2221, %v2219
    %v2336 = vpack.c.b16 %v2224, %v2222
    %v2337 = vpack.c.b16 %v2225, %v2223
    %v2338 = vpack.c.b16 %v2228, %v2226
    %v2339 = vpack.c.b16 %v2229, %v2227
    %v2340 = vpack.c.b16 %v2232, %v2230
    %v2341 = vpack.c.b16 %v2233, %v2231
    %v2342 = vpack.c.b16 %v2236, %v2234
    %v2343 = vpack.c.b16 %v2237, %v2235
    %v2344 = vpack.c.b16 %v2240, %v2238
    %v2345 = vpack.c.b16 %v2241, %v2239
    %v2346 = vpack.c.b16 %v2244, %v2242
    %v2347 = vpack.c.b16 %v2245, %v2243
    %v2348 = vpack.c.b16 %v2248, %v2246
    %v2349 = vpack.c.b16 %v2249, %v2247
    %v2350 = vpack.c.b16 %v2252, %v2250
    %v2351 = vpack.c.b16 %v2253, %v2251
    %v2352 = vpack.c.b16 %v2256, %v2254
    %v2353 = vpack.c.b16 %v2257, %v2255
    %v2354 = vpack.c.b16 %v2260, %v2258
    %v2355 = vpack.c.b16 %v2261, %v2259
    %v2356 = vpack.c.b16 %v2264, %v2262
    %v2357 = vpack.c.b16 %v2265, %v2263
    %v2358 = vpack.c.b16 %v2268, %v2266
    %v2359 = vpack.c.b16 %v2269, %v2267
    %v2360 = vpack.c.b16 %v2272, %v2270
    %v2361 = vpack.c.b16 %v2273, %v2271
    %v2362 = vpack.c.b16 %v2276, %v2274
    %v2363 = vpack.c.b16 %v2277, %v2275
    %v2364 = vpack.c.b16 %v2280, %v2278
    %v2365 = vpack.c.b16 %v2281, %v2279
    %v2366 = vpack.c.b16 %v2284, %v2282
    %v2367 = vpack.c.b16 %v2285, %v2283
    %v2368 = vpack.c.b16 %v2288, %v2286
    %v2369 = vpack.c.b16 %v2289, %v2287
    %v2370 = vpack.c.b16 %v2292, %v2290
    %v2371 = vpack.c.b16 %v2293, %v2291
    %v2372 = vpack.c.b16 %v2296, %v2294
    %v2373 = vpack.c.b16 %v2297, %v2295
    %v2374 = vpack.c.b16 %v2300, %v2298
    %v2375 = vpack.c.b16 %v2301, %v2299
    %v2376 = vpack.c.b16 %v2304, %v2302
    %v2377 = vpack.c.b16 %v2305, %v2303
    %v2378 = vpack.c.b16 %v2308, %v2306
    %v2379 = vpack.c.b16 %v2309, %v2307
    %v2380 = vpack.c.b16 %v2312, %v2310
    %v2381 = vpack.c.b16 %v2313, %v2311
    %v2382 = vpack.c.b16 %v2316, %v2314
    %v2383 = vpack.c.b16 %v2317, %v2315
    %v2384 = vpack.c.b16 %v2320, %v2318
    %v2385 = vpack.c.b16 %v2321, %v2319
    %2450 = vmatpush.bf16.msra.mxu0 %v2336
    %2451 = vmatpush.bf16.msra.mxu0 %v2334
    %2452 = vmatpush.bf16.msra.mxu0 %v2332
    %2453 = vmatpush.bf16.msra.mxu0 %v2330
    %2454 = vmatpush.bf16.msra.mxu0 %v2328
    %2455 = vmatpush.bf16.msra.mxu0 %v2326
    %2456 = vmatpush.bf16.msra.mxu0 %v2324
    %2457 = vmatpush.bf16.msra.mxu0 %v2322
    %2458 = vmatmul.bf16.gmra.mxu0 %v2056
    %v2459 = vpop.f32.mrf.mxu0
    %v2460 = vadd.f32 %v2126, %v2459
    %v2461 = vpop.f32.mrf.mxu0
    %2462 = vdwg.mxu0
    %2463 = vmatpush.bf16.msra.mxu0 %v2352
    %2464 = vmatpush.bf16.msra.mxu0 %v2350
    %2465 = vmatpush.bf16.msra.mxu0 %v2348
    %2466 = vmatpush.bf16.msra.mxu0 %v2346
    %2467 = vmatpush.bf16.msra.mxu0 %v2344
    %2468 = vmatpush.bf16.msra.mxu0 %v2342
    %2469 = vmatpush.bf16.msra.mxu0 %v2340
    %2470 = vmatpush.bf16.msra.mxu0 %v2338
    %2471 = vmatmul.bf16.gmra.mxu0 %v2057
    %v2472 = vpop.f32.mrf.mxu0
    %v2473 = vadd.f32 %v2460, %v2472
    %v2474 = vpop.f32.mrf.mxu0
    %2475 = vdwg.mxu0
    %2476 = vmatpush.bf16.msra.mxu0 %v2368
    %2477 = vmatpush.bf16.msra.mxu0 %v2366
    %2478 = vmatpush.bf16.msra.mxu0 %v2364
    %2479 = vmatpush.bf16.msra.mxu0 %v2362
    %2480 = vmatpush.bf16.msra.mxu0 %v2360
    %2481 = vmatpush.bf16.msra.mxu0 %v2358
    %2482 = vmatpush.bf16.msra.mxu0 %v2356
    %2483 = vmatpush.bf16.msra.mxu0 %v2354
    %2484 = vmatmul.bf16.gmra.mxu0 %v2058
    %v2485 = vpop.f32.mrf.mxu0
    %v2486 = vadd.f32 %v2473, %v2485
    %v2487 = vpop.f32.mrf.mxu0
    %2488 = vdwg.mxu0
    %2489 = vmatpush.bf16.msra.mxu0 %v2384
    %2490 = vmatpush.bf16.msra.mxu0 %v2382
    %2491 = vmatpush.bf16.msra.mxu0 %v2380
    %2492 = vmatpush.bf16.msra.mxu0 %v2378
    %2493 = vmatpush.bf16.msra.mxu0 %v2376
    %2494 = vmatpush.bf16.msra.mxu0 %v2374
    %2495 = vmatpush.bf16.msra.mxu0 %v2372
    %2496 = vmatpush.bf16.msra.mxu0 %v2370
    %2497 = vmatmul.bf16.gmra.mxu0 %v2059
    %v2498 = vpop.f32.mrf.mxu0
    %v2499 = vadd.f32 %v2486, %v2498
    %v2500 = vpop.f32.mrf.mxu0
    %2501 = vdwg.mxu0
    %2502 = vmatpush.bf16.msra.mxu0 %v2337
    %2503 = vmatpush.bf16.msra.mxu0 %v2335
    %2504 = vmatpush.bf16.msra.mxu0 %v2333
    %2505 = vmatpush.bf16.msra.mxu0 %v2331
    %2506 = vmatpush.bf16.msra.mxu0 %v2329
    %2507 = vmatpush.bf16.msra.mxu0 %v2327
    %2508 = vmatpush.bf16.msra.mxu0 %v2325
    %2509 = vmatpush.bf16.msra.mxu0 %v2323
    %2510 = vmatmul.bf16.gmra.mxu0 %v2056
    %v2511 = vpop.f32.mrf.mxu0
    %v2512 = vadd.f32 %v2127, %v2511
    %v2513 = vpop.f32.mrf.mxu0
    %2514 = vdwg.mxu0
    %2515 = vmatpush.bf16.msra.mxu0 %v2353
    %2516 = vmatpush.bf16.msra.mxu0 %v2351
    %2517 = vmatpush.bf16.msra.mxu0 %v2349
    %2518 = vmatpush.bf16.msra.mxu0 %v2347
    %2519 = vmatpush.bf16.msra.mxu0 %v2345
    %2520 = vmatpush.bf16.msra.mxu0 %v2343
    %2521 = vmatpush.bf16.msra.mxu0 %v2341
    %2522 = vmatpush.bf16.msra.mxu0 %v2339
    %2523 = vmatmul.bf16.gmra.mxu0 %v2057
    %v2524 = vpop.f32.mrf.mxu0
    %v2525 = vadd.f32 %v2512, %v2524
    %v2526 = vpop.f32.mrf.mxu0
    %2527 = vdwg.mxu0
    %2528 = vmatpush.bf16.msra.mxu0 %v2369
    %2529 = vmatpush.bf16.msra.mxu0 %v2367
    %2530 = vmatpush.bf16.msra.mxu0 %v2365
    %2531 = vmatpush.bf16.msra.mxu0 %v2363
    %2532 = vmatpush.bf16.msra.mxu0 %v2361
    %2533 = vmatpush.bf16.msra.mxu0 %v2359
    %2534 = vmatpush.bf16.msra.mxu0 %v2357
    %2535 = vmatpush.bf16.msra.mxu0 %v2355
    %2536 = vmatmul.bf16.gmra.mxu0 %v2058
    %v2537 = vpop.f32.mrf.mxu0
    %v2538 = vadd.f32 %v2525, %v2537
    %v2539 = vpop.f32.mrf.mxu0
    %2540 = vdwg.mxu0
    %2541 = vmatpush.bf16.msra.mxu0 %v2385
    %2542 = vmatpush.bf16.msra.mxu0 %v2383
    %2543 = vmatpush.bf16.msra.mxu0 %v2381
    %2544 = vmatpush.bf16.msra.mxu0 %v2379
    %2545 = vmatpush.bf16.msra.mxu0 %v2377
    %2546 = vmatpush.bf16.msra.mxu0 %v2375
    %2547 = vmatpush.bf16.msra.mxu0 %v2373
    %2548 = vmatpush.bf16.msra.mxu0 %v2371
    %2549 = vmatmul.bf16.gmra.mxu0 %v2059
    %v2550 = vpop.f32.mrf.mxu0
    %v2551 = vadd.f32 %v2538, %v2550
    %v2552 = vpop.f32.mrf.mxu0
    %2553 = vdwg.mxu0
    %v2554 = vmax.f32 %v2499, 0.0
    %v2555 = vmax.f32 %v2551, 0.0
    %v2556 = vpack.c.bf16 %v2554, %v2554
    %v2557 = vpack.c.bf16 %v2555, %v2555
    %v2558 = vld [vmem:[%s5] sm:$0xf]
    %v2559 = vld [vmem:[%s5 + $0x4] sm:$0xf]
    %v2560 = vld [vmem:[%s5 + $0x8] sm:$0xf]
    %v2561 = vld [vmem:[%s5 + $0xc] sm:$0xf]
    %v2562 = vld [vmem:[%s5 + $0x10] sm:$0xf]
    %v2563 = vld [vmem:[%s5 + $0x14] sm:$0xf]
    %v2564 = vld [vmem:[%s5 + $0x18] sm:$0xf]
    %v2565 = vld [vmem:[%s5 + $0x1c] sm:$0xf]
    %v2566 = vld [vmem:[%s5 + $0x20] sm:$0xf]
    %v2567 = vld [vmem:[%s5 + $0x24] sm:$0xf]
    %v2568 = vld [vmem:[%s5 + $0x28] sm:$0xf]
    %v2569 = vld [vmem:[%s5 + $0x2c] sm:$0xf]
    %v2570 = vld [vmem:[%s5 + $0x30] sm:$0xf]
    %v2571 = vld [vmem:[%s5 + $0x34] sm:$0xf]
    %v2572 = vld [vmem:[%s5 + $0x38] sm:$0xf]
    %v2573 = vld [vmem:[%s5 + $0x3c] sm:$0xf]
    %v2574 = vld [vmem:[%s5 + $0x40] sm:$0xf]
    %v2575 = vld [vmem:[%s5 + $0x44] sm:$0xf]
    %v2576 = vld [vmem:[%s5 + $0x48] sm:$0xf]
    %v2577 = vld [vmem:[%s5 + $0x4c] sm:$0xf]
    %v2578 = vld [vmem:[%s5 + $0x50] sm:$0xf]
    %v2579 = vld [vmem:[%s5 + $0x54] sm:$0xf]
    %v2580 = vld [vmem:[%s5 + $0x58] sm:$0xf]
    %v2581 = vld [vmem:[%s5 + $0x5c] sm:$0xf]
    %v2582 = vld [vmem:[%s5 + $0x60] sm:$0xf]
    %v2583 = vld [vmem:[%s5 + $0x64] sm:$0xf]
    %v2584 = vld [vmem:[%s5 + $0x68] sm:$0xf]
    %v2585 = vld [vmem:[%s5 + $0x6c] sm:$0xf]
    %v2586 = vld [vmem:[%s5 + $0x70] sm:$0xf]
    %v2587 = vld [vmem:[%s5 + $0x74] sm:$0xf]
    %v2588 = vld [vmem:[%s5 + $0x78] sm:$0xf]
    %v2589 = vld [vmem:[%s5 + $0x7c] sm:$0xf]
    %v2590 = vld [vmem:[%s6] sm:$0x1]
    %v2592 = vperm.slane %v2590, 0
    %v2626 = vunpack.c.l.b16 %v2558
    %v2627 = vunpack.c.l.b16 %v2559
    %v2628 = vunpack.c.l.b16 %v2560
    %v2629 = vunpack.c.l.b16 %v2561
    %v2630 = vunpack.c.l.b16 %v2562
    %v2631 = vunpack.c.l.b16 %v2563
    %v2632 = vunpack.c.l.b16 %v2564
    %v2633 = vunpack.c.l.b16 %v2565
    %v2634 = vunpack.c.l.b16 %v2566
    %v2635 = vunpack.c.l.b16 %v2567
    %v2636 = vunpack.c.l.b16 %v2568
    %v2637 = vunpack.c.l.b16 %v2569
    %v2638 = vunpack.c.l.b16 %v2570
    %v2639 = vunpack.c.l.b16 %v2571
    %v2640 = vunpack.c.l.b16 %v2572
    %v2641 = vunpack.c.l.b16 %v2573
    %v2642 = vunpack.c.l.b16 %v2574
    %v2643 = vunpack.c.l.b16 %v2575
    %v2644 = vunpack.c.l.b16 %v2576
    %v2645 = vunpack.c.l.b16 %v2577
    %v2646 = vunpack.c.l.b16 %v2578
    %v2647 = vunpack.c.l.b16 %v2579
    %v2648 = vunpack.c.l.b16 %v2580
    %v2649 = vunpack.c.l.b16 %v2581
    %v2650 = vunpack.c.l.b16 %v2582
    %v2651 = vunpack.c.l.b16 %v2583
    %v2652 = vunpack.c.l.b16 %v2584
    %v2653 = vunpack.c.l.b16 %v2585
    %v2654 = vunpack.c.l.b16 %v2586
    %v2655 = vunpack.c.l.b16 %v2587
    %v2656 = vunpack.c.l.b16 %v2588
    %v2657 = vunpack.c.l.b16 %v2589
    %v2658 = vpack.c.b16 %v2627, %v2626
    %v2659 = vpack.c.b16 %v2629, %v2628
    %v2660 = vpack.c.b16 %v2631, %v2630
    %v2661 = vpack.c.b16 %v2633, %v2632
    %v2662 = vpack.c.b16 %v2635, %v2634
    %v2663 = vpack.c.b16 %v2637, %v2636
    %v2664 = vpack.c.b16 %v2639, %v2638
    %v2665 = vpack.c.b16 %v2641, %v2640
    %v2666 = vpack.c.b16 %v2643, %v2642
    %v2667 = vpack.c.b16 %v2645, %v2644
    %v2668 = vpack.c.b16 %v2647, %v2646
    %v2669 = vpack.c.b16 %v2649, %v2648
    %v2670 = vpack.c.b16 %v2651, %v2650
    %v2671 = vpack.c.b16 %v2653, %v2652
    %v2672 = vpack.c.b16 %v2655, %v2654
    %v2673 = vpack.c.b16 %v2657, %v2656
    %2690 = vmatpush.bf16.msra.mxu0 %v2665
    %2691 = vmatpush.bf16.msra.mxu0 %v2664
    %2692 = vmatpush.bf16.msra.mxu0 %v2663
    %2693 = vmatpush.bf16.msra.mxu0 %v2662
    %2694 = vmatpush.bf16.msra.mxu0 %v2661
    %2695 = vmatpush.bf16.msra.mxu0 %v2660
    %2696 = vmatpush.bf16.msra.mxu0 %v2659
    %2697 = vmatpush.bf16.msra.mxu0 %v2658
    %2698 = vmatmul.bf16.gmra.mxu0 %v2556
    %v2699 = vpop.f32.mrf.mxu0
    %v2700 = vadd.f32 %v2592, %v2699
    %v2701 = vpop.f32.mrf.mxu0
    %2702 = vdwg.mxu0
    %2703 = vmatpush.bf16.msra.mxu0 %v2673
    %2704 = vmatpush.bf16.msra.mxu0 %v2672
    %2705 = vmatpush.bf16.msra.mxu0 %v2671
    %2706 = vmatpush.bf16.msra.mxu0 %v2670
    %2707 = vmatpush.bf16.msra.mxu0 %v2669
    %2708 = vmatpush.bf16.msra.mxu0 %v2668
    %2709 = vmatpush.bf16.msra.mxu0 %v2667
    %2710 = vmatpush.bf16.msra.mxu0 %v2666
    %2711 = vmatmul.bf16.gmra.mxu0 %v2557
    %v2712 = vpop.f32.mrf.mxu0
    %v2713 = vadd.f32 %v2700, %v2712
    %v2714 = vpop.f32.mrf.mxu0
    %2715 = vdwg.mxu0
    %v2716 = vmax.f32 %v2713, 0.0
    %vm2717 = vcmask 58368
    %2718 = vst.msk [vmem:[#allocation7] sm:$0x3] %vm2717, %v2716
    // Predicated region
    $region38: #{pointnet_cls_forward.3} parent=1 // pred_check
      _
    $region39: #{pointnet_cls_forward.3} parent=1 // pred_check_branch
      %2720 = sbr.rel (0) target = $region41
    $region40: #{pointnet_cls_forward.3} parent=1 // pred_region
      %2722 = vsyncadd [#allocation4], 0
      %s2724 = sshll.u32 [#allocation7], 4
      %s2725 = int_to_ptr.vmem [resolvable:$true] %s2724
      %s2726 = sshll.u32 %s7, 4
      %s2727 = int_to_ptr.hbm [resolvable:$true] %s2726
      %2729 = dma.vmem_to_hbm [thread:$0]  %s2725, 32, %s2727, [#allocation4]
    $region41: #{pointnet_cls_forward.3} parent=1 // pred_fallthru
      _
    // Predicated region
    $region42: #{pointnet_cls_forward.3} parent=1 // pred_check
      _
    $region43: #{pointnet_cls_forward.3} parent=1 // pred_check_branch
      %2731 = sbr.rel (0) target = $region45
    $region44: #{pointnet_cls_forward.3} parent=1 // pred_region
      %2733 = dma.done [#allocation4], 32
    $region45: #{pointnet_cls_forward.3} parent=1 // pred_fallthru
      _
    %2734 = vsyncpa [#allocation3], 1
    %2735 = vsyncpa [#allocation6], 1
    %2736 = vsyncpa [#allocation4], 1

</llo_original>
